<compile_context>
chip_gen: v7x
topology: tpu7x:2x2x1
jax: 0.10.0
libtpu: 0.0.40
codegen_flags: <defaults>
</compile_context>

<pallas_src>
import jax
import jax.numpy as jnp
from jax.experimental import pallas as pl
from jax.experimental.pallas import tpu as pltpu


def _round_up(x, m):
    return ((x + m - 1) // m) * m


# ---------------------------------------------------------------------------
# Pallas kernel: out = relu(x @ w + b), accumulated over the K grid axis.
# ---------------------------------------------------------------------------
def _matmul_bias_relu_kernel(x_ref, w_ref, b_ref, o_ref, acc_ref):
    k = pl.program_id(2)

    @pl.when(k == 0)
    def _():
        acc_ref[...] = jnp.zeros_like(acc_ref)

    acc_ref[...] += jnp.dot(x_ref[...], w_ref[...],
                            preferred_element_type=jnp.float32)

    @pl.when(k == pl.num_programs(2) - 1)
    def _():
        o_ref[...] = jnp.maximum(acc_ref[...] + b_ref[...], 0.0).astype(o_ref.dtype)


def _choose_tiles(M, K, Cout):
    # M tile: 256-512 when there is enough work, else the (8-aligned) full M.
    if M >= 512:
        tm = 512
    elif M >= 256:
        tm = 256
    else:
        tm = _round_up(M, 8)
    # Cout tile: 256 lanes when possible (256-wide MXU on v6e/v7x), else full.
    if Cout < 128:
        tn = Cout
    elif Cout % 256 == 0:
        tn = 256
    else:
        tn = 128
    # K tile: full-K block for small K (avoids padding 9 -> 128 for conv1),
    # otherwise 256 / 128 preferring an exact divisor of K.
    if K <= 256:
        tk = _round_up(K, 16)       # bf16 sublane alignment, tiny zero pad
    elif K % 256 == 0:
        tk = 256
    elif K % 128 == 0:
        tk = 128
    else:
        tk = 256                    # last resort: pad K up to a 256 multiple
    return tm, tn, tk


def _matmul_bias_relu(patches, w2d, bias, *, out_dtype):
    """patches: (M, K), w2d: (K, Cout), bias: (Cout,) -> relu(patches@w2d+bias)."""
    M, K = patches.shape
    Cout = w2d.shape[1]
    tm, tn, tk = _choose_tiles(M, K, Cout)

    Mp = _round_up(M, tm)
    Kp = _round_up(K, tk)

    x_bf = patches.astype(jnp.bfloat16)
    w_bf = w2d.astype(jnp.bfloat16)
    if Mp != M or Kp != K:
        x_bf = jnp.pad(x_bf, ((0, Mp - M), (0, Kp - K)))
    if Kp != K:
        w_bf = jnp.pad(w_bf, ((0, Kp - K), (0, 0)))
    b2d = bias.reshape(1, Cout).astype(jnp.float32)

    grid = (Mp // tm, Cout // tn, Kp // tk)

    out_itemsize = jnp.dtype(out_dtype).itemsize
    flops = 2 * Mp * Kp * Cout
    bytes_accessed = (Mp * Kp * 2) * (Cout // tn) + (Kp * Cout * 2) * (Mp // tm) \
        + Mp * Cout * out_itemsize + Cout * 4

    out = pl.pallas_call(
        _matmul_bias_relu_kernel,
        out_shape=jax.ShapeDtypeStruct((Mp, Cout), out_dtype),
        grid_spec=pltpu.PrefetchScalarGridSpec(
            num_scalar_prefetch=0,
            grid=grid,
            in_specs=[
                pl.BlockSpec((tm, tk), lambda i, j, k: (i, k)),   # activations
                pl.BlockSpec((tk, tn), lambda i, j, k: (k, j)),   # weights
                pl.BlockSpec((1, tn), lambda i, j, k: (0, j)),    # bias
            ],
            out_specs=pl.BlockSpec((tm, tn), lambda i, j, k: (i, j)),
            scratch_shapes=[pltpu.VMEM((tm, tn), jnp.float32)],   # f32 accumulator
        ),
        compiler_params=pltpu.CompilerParams(
            dimension_semantics=("parallel", "parallel", "arbitrary")),
        cost_estimate=pl.CostEstimate(flops=flops, transcendentals=0,
                                      bytes_accessed=bytes_accessed),
    )(x_bf, w_bf, b2d)

    return out[:M] if Mp != M else out


# ---------------------------------------------------------------------------
# Conv 3x3 'same' (TF-style SAME padding, matches Conv2dSame / padding='same')
# ---------------------------------------------------------------------------
def _conv3x3_same_relu(x_nhwc, w_oihw, bias, stride, *, out_dtype=jnp.bfloat16):
    """x_nhwc: (N,H,W,Cin); w_oihw: (Cout,Cin,3,3) PyTorch layout."""
    N, H, W, Cin = x_nhwc.shape
    Cout = w_oihw.shape[0]
    k, s = 3, stride
    Ho = -(-H // s)
    Wo = -(-W // s)
    pad_h = max((Ho - 1) * s + k - H, 0)
    pad_w = max((Wo - 1) * s + k - W, 0)

    x_p = jnp.pad(x_nhwc.astype(jnp.bfloat16),
                  ((0, 0),
                   (pad_h // 2, pad_h - pad_h // 2),
                   (pad_w // 2, pad_w - pad_w // 2),
                   (0, 0)))

    # im2col glue: 9 shifted/strided taps, tap-major (ky, kx, ci) ordering.
    taps = []
    for ky in range(3):
        for kx in range(3):
            taps.append(x_p[:,
                            ky:ky + s * (Ho - 1) + 1:s,
                            kx:kx + s * (Wo - 1) + 1:s,
                            :])
    patches = jnp.concatenate(taps, axis=-1).reshape(N * Ho * Wo, 9 * Cin)

    # (Cout,Cin,3,3) -> (ky,kx,ci,cout) -> (9*Cin, Cout): matches tap ordering.
    w2d = jnp.transpose(w_oihw, (2, 3, 1, 0)).reshape(9 * Cin, Cout)

    out = _matmul_bias_relu(patches, w2d, bias, out_dtype=out_dtype)
    return out.reshape(N, Ho, Wo, Cout)


# (Cin, Cout, stride) for conv1..conv8 of the Koalarization encoder.
_ENCODER_CFG = [
    (1, 64, 2),
    (64, 128, 1),
    (128, 128, 2),
    (128, 256, 1),
    (256, 256, 2),
    (256, 512, 1),
    (512, 512, 1),
    (512, 256, 1),
]


def init_encoder_params(key):
    """Deterministic synthetic weights in PyTorch layout (Cout, Cin, 3, 3)."""
    params = []
    for i, (cin, cout, stride) in enumerate(_ENCODER_CFG):
        kw, kb = jax.random.split(jax.random.fold_in(key, i))
        fan_in = float(cin * 9)
        w = jax.random.normal(kw, (cout, cin, 3, 3), jnp.float32) / jnp.sqrt(fan_in)
        b = 0.01 * jax.random.normal(kb, (cout,), jnp.float32)
        params.append((w, b, stride))
    return params


def encoder_forward(x_nchw, params):
    """Matches Encoder.forward: 8 x (conv3x3 'same' + ReLU). NCHW in / NCHW out."""
    x = jnp.transpose(x_nchw, (0, 2, 3, 1))          # NCHW -> NHWC
    n_layers = len(params)
    for li, (w, b, s) in enumerate(params):
        out_dtype = jnp.float32 if li == n_layers - 1 else jnp.bfloat16
        x = _conv3x3_same_relu(x, w, b, s, out_dtype=out_dtype)
    return jnp.transpose(x, (0, 3, 1, 2))            # NHWC -> NCHW


if __name__ == "__main__":
    key = jax.random.PRNGKey(0)
    kx, kp = jax.random.split(key)
    # Small input consistent with the module's (N, 1, H, W) grayscale input.
    x = jax.random.normal(kx, (2, 1, 16, 16), jnp.float32)
    params = init_encoder_params(kp)

    out = jax.jit(lambda inp: encoder_forward(inp, params))(x)
    out = jax.block_until_ready(out)

    # 16 -> 8 -> 8 -> 4 -> 4 -> 2 -> 2 -> 2 -> 2 spatial; final channels 256.
    assert out.shape == (2, 256, 2, 2), out.shape
    assert out.dtype == jnp.float32, out.dtype
    assert bool(jnp.all(out >= 0.0))  # ReLU output
    print("KERNEL_OK")
</pallas_src>

<mosaic_0001>
module attributes {stable_mosaic.version = 11 : i64} {
  func.func @_matmul_bias_relu_kernel(%arg0: i32, %arg1: i32, %arg2: i32, %arg3: memref<128x16xbf16, #tpu.memory_space<vmem>>, %arg4: memref<16x64xbf16, #tpu.memory_space<vmem>>, %arg5: memref<1x64xf32, #tpu.memory_space<vmem>>, %arg6: memref<128x64xbf16, #tpu.memory_space<vmem>>, %arg7: memref<128x64xf32, #tpu.memory_space<vmem>>) attributes {dimension_semantics = [#tpu.dimension_semantics<parallel>, #tpu.dimension_semantics<parallel>, #tpu.dimension_semantics<arbitrary>], iteration_bounds = array<i64: 1, 1, 1>, scalar_prefetch = 0 : i64, scratch_operands = 1 : i64, tpu.core_type = #tpu.core_type<tc>, window_params = [{transform_indices = @transform_0, window_bounds = array<i64: 128, 16>}, {transform_indices = @transform_1, window_bounds = array<i64: 16, 64>}, {transform_indices = @transform_2, window_bounds = array<i64: 1, 64>}, {transform_indices = @transform_3, window_bounds = array<i64: 128, 64>}]} {
    %c0_i32 = arith.constant 0 : i32
    %0 = arith.cmpi eq, %arg2, %c0_i32 : i32
    %1 = arith.extui %0 : i1 to i32
    %c0_i32_0 = arith.constant 0 : i32
    %2 = arith.cmpi ne, %1, %c0_i32_0 : i32
    scf.if %2 {
      %cst_10 = arith.constant 0.000000e+00 : f32
      %12 = vector.broadcast %cst_10 : f32 to vector<128x64xf32>
      %c0_11 = arith.constant 0 : index
      %c0_12 = arith.constant 0 : index
      %13 = vector.load %arg7[%c0_11, %c0_12] : memref<128x64xf32, #tpu.memory_space<vmem>>, vector<128x64xf32>
      tpu.vector_store %arg7[%c0_11, %c0_12], %12 {strides = array<i32>} : memref<128x64xf32, #tpu.memory_space<vmem>>, vector<128x64xf32>,
    } else {
    }
    %c0 = arith.constant 0 : index
    %c0_1 = arith.constant 0 : index
    %3 = vector.load %arg7[%c0, %c0_1] : memref<128x64xf32, #tpu.memory_space<vmem>>, vector<128x64xf32>
    %c0_2 = arith.constant 0 : index
    %c0_3 = arith.constant 0 : index
    %4 = vector.load %arg3[%c0_2, %c0_3] : memref<128x16xbf16, #tpu.memory_space<vmem>>, vector<128x16xbf16>
    %c0_4 = arith.constant 0 : index
    %c0_5 = arith.constant 0 : index
    %5 = vector.load %arg4[%c0_4, %c0_5] : memref<16x64xbf16, #tpu.memory_space<vmem>>, vector<16x64xbf16>
    %cst = arith.constant dense<0.000000e+00> : vector<128x64xf32>
    %6 = tpu.matmul %4, %5, %cst {dimension_numbers = #tpu.dot_dimension_numbers<[1], [0], [0], [1], [0, 0, 1, 1], [], []>} : vector<128x16xbf16>, vector<16x64xbf16>, vector<128x64xf32> -> vector<128x64xf32>
    %7 = arith.addf %3, %6 : vector<128x64xf32>
    %c0_6 = arith.constant 0 : index
    %c0_7 = arith.constant 0 : index
    %8 = vector.load %arg7[%c0_6, %c0_7] : memref<128x64xf32, #tpu.memory_space<vmem>>, vector<128x64xf32>
    tpu.vector_store %arg7[%c0_6, %c0_7], %7 {strides = array<i32>} : memref<128x64xf32, #tpu.memory_space<vmem>>, vector<128x64xf32>,
    %c0_i32_8 = arith.constant 0 : i32
    %9 = arith.cmpi eq, %arg2, %c0_i32_8 : i32
    %10 = arith.extui %9 : i1 to i32
    %c0_i32_9 = arith.constant 0 : i32
    %11 = arith.cmpi ne, %10, %c0_i32_9 : i32
    scf.if %11 {
      %c0_10 = arith.constant 0 : index
      %c0_11 = arith.constant 0 : index
      %12 = vector.load %arg7[%c0_10, %c0_11] : memref<128x64xf32, #tpu.memory_space<vmem>>, vector<128x64xf32>
      %c0_12 = arith.constant 0 : index
      %c0_13 = arith.constant 0 : index
      %13 = vector.load %arg5[%c0_12, %c0_13] : memref<1x64xf32, #tpu.memory_space<vmem>>, vector<1x64xf32>
      %14 = vector.broadcast %13 : vector<1x64xf32> to vector<128x64xf32>
      %15 = arith.addf %12, %14 : vector<128x64xf32>
      %cst_14 = arith.constant 0.000000e+00 : f32
      %16 = vector.broadcast %cst_14 : f32 to vector<128x64xf32>
      %17 = arith.maximumf %15, %16 : vector<128x64xf32>
      %18 = arith.truncf %17 : vector<128x64xf32> to vector<128x64xbf16>
      %c0_15 = arith.constant 0 : index
      %c0_16 = arith.constant 0 : index
      %19 = vector.load %arg6[%c0_15, %c0_16] : memref<128x64xbf16, #tpu.memory_space<vmem>>, vector<128x64xbf16>
      tpu.vector_store %arg6[%c0_15, %c0_16], %18 {strides = array<i32>} : memref<128x64xbf16, #tpu.memory_space<vmem>>, vector<128x64xbf16>,
    } else {
    }
    return
  }
  func.func @transform_0(%arg0: i32, %arg1: i32, %arg2: i32) -> (i32, i32) {
    %c0_i32 = arith.constant 0 : i32
    return %arg0, %arg2 : i32, i32
  }
  func.func @transform_1(%arg0: i32, %arg1: i32, %arg2: i32) -> (i32, i32) {
    %c0_i32 = arith.constant 0 : i32
    return %arg2, %arg1 : i32, i32
  }
  func.func @transform_2(%arg0: i32, %arg1: i32, %arg2: i32) -> (i32, i32) {
    %c0_i32 = arith.constant 0 : i32
    %c0_i32_0 = arith.constant 0 : i32
    return %c0_i32, %arg1 : i32, i32
  }
  func.func @transform_3(%arg0: i32, %arg1: i32, %arg2: i32) -> (i32, i32) {
    %c0_i32 = arith.constant 0 : i32
    return %arg0, %arg1 : i32, i32
  }
}

module attributes {stable_mosaic.version = 11 : i64} {
  func.func @_matmul_bias_relu_kernel(%arg0: i32, %arg1: i32, %arg2: i32, %arg3: memref<128x256xbf16, #tpu.memory_space<vmem>>, %arg4: memref<256x128xbf16, #tpu.memory_space<vmem>>, %arg5: memref<1x128xf32, #tpu.memory_space<vmem>>, %arg6: memref<128x128xbf16, #tpu.memory_space<vmem>>, %arg7: memref<128x128xf32, #tpu.memory_space<vmem>>) attributes {dimension_semantics = [#tpu.dimension_semantics<parallel>, #tpu.dimension_semantics<parallel>, #tpu.dimension_semantics<arbitrary>], iteration_bounds = array<i64: 1, 1, 3>, scalar_prefetch = 0 : i64, scratch_operands = 1 : i64, tpu.core_type = #tpu.core_type<tc>, window_params = [{transform_indices = @transform_0, window_bounds = array<i64: 128, 256>}, {transform_indices = @transform_1, window_bounds = array<i64: 256, 128>}, {transform_indices = @transform_2, window_bounds = array<i64: 1, 128>}, {transform_indices = @transform_3, window_bounds = array<i64: 128, 128>}]} {
    %c0_i32 = arith.constant 0 : i32
    %0 = arith.cmpi eq, %arg2, %c0_i32 : i32
    %1 = arith.extui %0 : i1 to i32
    %c0_i32_0 = arith.constant 0 : i32
    %2 = arith.cmpi ne, %1, %c0_i32_0 : i32
    scf.if %2 {
      %cst_9 = arith.constant 0.000000e+00 : f32
      %12 = vector.broadcast %cst_9 : f32 to vector<128x128xf32>
      %c0_10 = arith.constant 0 : index
      %c0_11 = arith.constant 0 : index
      %13 = vector.load %arg7[%c0_10, %c0_11] : memref<128x128xf32, #tpu.memory_space<vmem>>, vector<128x128xf32>
      tpu.vector_store %arg7[%c0_10, %c0_11], %12 {strides = array<i32>} : memref<128x128xf32, #tpu.memory_space<vmem>>, vector<128x128xf32>,
    } else {
    }
    %c0 = arith.constant 0 : index
    %c0_1 = arith.constant 0 : index
    %3 = vector.load %arg7[%c0, %c0_1] : memref<128x128xf32, #tpu.memory_space<vmem>>, vector<128x128xf32>
    %c0_2 = arith.constant 0 : index
    %c0_3 = arith.constant 0 : index
    %4 = vector.load %arg3[%c0_2, %c0_3] : memref<128x256xbf16, #tpu.memory_space<vmem>>, vector<128x256xbf16>
    %c0_4 = arith.constant 0 : index
    %c0_5 = arith.constant 0 : index
    %5 = vector.load %arg4[%c0_4, %c0_5] : memref<256x128xbf16, #tpu.memory_space<vmem>>, vector<256x128xbf16>
    %cst = arith.constant dense<0.000000e+00> : vector<128x128xf32>
    %6 = tpu.matmul %4, %5, %cst {dimension_numbers = #tpu.dot_dimension_numbers<[1], [0], [0], [1], [0, 0, 1, 1], [], []>} : vector<128x256xbf16>, vector<256x128xbf16>, vector<128x128xf32> -> vector<128x128xf32>
    %7 = arith.addf %3, %6 : vector<128x128xf32>
    %c0_6 = arith.constant 0 : index
    %c0_7 = arith.constant 0 : index
    %8 = vector.load %arg7[%c0_6, %c0_7] : memref<128x128xf32, #tpu.memory_space<vmem>>, vector<128x128xf32>
    tpu.vector_store %arg7[%c0_6, %c0_7], %7 {strides = array<i32>} : memref<128x128xf32, #tpu.memory_space<vmem>>, vector<128x128xf32>,
    %c2_i32 = arith.constant 2 : i32
    %9 = arith.cmpi eq, %arg2, %c2_i32 : i32
    %10 = arith.extui %9 : i1 to i32
    %c0_i32_8 = arith.constant 0 : i32
    %11 = arith.cmpi ne, %10, %c0_i32_8 : i32
    scf.if %11 {
      %c0_9 = arith.constant 0 : index
      %c0_10 = arith.constant 0 : index
      %12 = vector.load %arg7[%c0_9, %c0_10] : memref<128x128xf32, #tpu.memory_space<vmem>>, vector<128x128xf32>
      %c0_11 = arith.constant 0 : index
      %c0_12 = arith.constant 0 : index
      %13 = vector.load %arg5[%c0_11, %c0_12] : memref<1x128xf32, #tpu.memory_space<vmem>>, vector<1x128xf32>
      %14 = vector.broadcast %13 : vector<1x128xf32> to vector<128x128xf32>
      %15 = arith.addf %12, %14 : vector<128x128xf32>
      %cst_13 = arith.constant 0.000000e+00 : f32
      %16 = vector.broadcast %cst_13 : f32 to vector<128x128xf32>
      %17 = arith.maximumf %15, %16 : vector<128x128xf32>
      %18 = arith.truncf %17 : vector<128x128xf32> to vector<128x128xbf16>
      %c0_14 = arith.constant 0 : index
      %c0_15 = arith.constant 0 : index
      %19 = vector.load %arg6[%c0_14, %c0_15] : memref<128x128xbf16, #tpu.memory_space<vmem>>, vector<128x128xbf16>
      tpu.vector_store %arg6[%c0_14, %c0_15], %18 {strides = array<i32>} : memref<128x128xbf16, #tpu.memory_space<vmem>>, vector<128x128xbf16>,
    } else {
    }
    return
  }
  func.func @transform_0(%arg0: i32, %arg1: i32, %arg2: i32) -> (i32, i32) {
    %c0_i32 = arith.constant 0 : i32
    return %arg0, %arg2 : i32, i32
  }
  func.func @transform_1(%arg0: i32, %arg1: i32, %arg2: i32) -> (i32, i32) {
    %c0_i32 = arith.constant 0 : i32
    return %arg2, %arg1 : i32, i32
  }
  func.func @transform_2(%arg0: i32, %arg1: i32, %arg2: i32) -> (i32, i32) {
    %c0_i32 = arith.constant 0 : i32
    %c0_i32_0 = arith.constant 0 : i32
    return %c0_i32, %arg1 : i32, i32
  }
  func.func @transform_3(%arg0: i32, %arg1: i32, %arg2: i32) -> (i32, i32) {
    %c0_i32 = arith.constant 0 : i32
    return %arg0, %arg1 : i32, i32
  }
}

module attributes {stable_mosaic.version = 11 : i64} {
  func.func @_matmul_bias_relu_kernel(%arg0: i32, %arg1: i32, %arg2: i32, %arg3: memref<32x128xbf16, #tpu.memory_space<vmem>>, %arg4: memref<128x128xbf16, #tpu.memory_space<vmem>>, %arg5: memref<1x128xf32, #tpu.memory_space<vmem>>, %arg6: memref<32x128xbf16, #tpu.memory_space<vmem>>, %arg7: memref<32x128xf32, #tpu.memory_space<vmem>>) attributes {dimension_semantics = [#tpu.dimension_semantics<parallel>, #tpu.dimension_semantics<parallel>, #tpu.dimension_semantics<arbitrary>], iteration_bounds = array<i64: 1, 1, 9>, scalar_prefetch = 0 : i64, scratch_operands = 1 : i64, tpu.core_type = #tpu.core_type<tc>, window_params = [{transform_indices = @transform_0, window_bounds = array<i64: 32, 128>}, {transform_indices = @transform_1, window_bounds = array<i64: 128, 128>}, {transform_indices = @transform_2, window_bounds = array<i64: 1, 128>}, {transform_indices = @transform_3, window_bounds = array<i64: 32, 128>}]} {
    %c0_i32 = arith.constant 0 : i32
    %0 = arith.cmpi eq, %arg2, %c0_i32 : i32
    %1 = arith.extui %0 : i1 to i32
    %c0_i32_0 = arith.constant 0 : i32
    %2 = arith.cmpi ne, %1, %c0_i32_0 : i32
    scf.if %2 {
      %cst_9 = arith.constant 0.000000e+00 : f32
      %12 = vector.broadcast %cst_9 : f32 to vector<32x128xf32>
      %c0_10 = arith.constant 0 : index
      %c0_11 = arith.constant 0 : index
      %13 = vector.load %arg7[%c0_10, %c0_11] : memref<32x128xf32, #tpu.memory_space<vmem>>, vector<32x128xf32>
      tpu.vector_store %arg7[%c0_10, %c0_11], %12 {strides = array<i32>} : memref<32x128xf32, #tpu.memory_space<vmem>>, vector<32x128xf32>,
    } else {
    }
    %c0 = arith.constant 0 : index
    %c0_1 = arith.constant 0 : index
    %3 = vector.load %arg7[%c0, %c0_1] : memref<32x128xf32, #tpu.memory_space<vmem>>, vector<32x128xf32>
    %c0_2 = arith.constant 0 : index
    %c0_3 = arith.constant 0 : index
    %4 = vector.load %arg3[%c0_2, %c0_3] : memref<32x128xbf16, #tpu.memory_space<vmem>>, vector<32x128xbf16>
    %c0_4 = arith.constant 0 : index
    %c0_5 = arith.constant 0 : index
    %5 = vector.load %arg4[%c0_4, %c0_5] : memref<128x128xbf16, #tpu.memory_space<vmem>>, vector<128x128xbf16>
    %cst = arith.constant dense<0.000000e+00> : vector<32x128xf32>
    %6 = tpu.matmul %4, %5, %cst {dimension_numbers = #tpu.dot_dimension_numbers<[1], [0], [0], [1], [0, 0, 1, 1], [], []>} : vector<32x128xbf16>, vector<128x128xbf16>, vector<32x128xf32> -> vector<32x128xf32>
    %7 = arith.addf %3, %6 : vector<32x128xf32>
    %c0_6 = arith.constant 0 : index
    %c0_7 = arith.constant 0 : index
    %8 = vector.load %arg7[%c0_6, %c0_7] : memref<32x128xf32, #tpu.memory_space<vmem>>, vector<32x128xf32>
    tpu.vector_store %arg7[%c0_6, %c0_7], %7 {strides = array<i32>} : memref<32x128xf32, #tpu.memory_space<vmem>>, vector<32x128xf32>,
    %c8_i32 = arith.constant 8 : i32
    %9 = arith.cmpi eq, %arg2, %c8_i32 : i32
    %10 = arith.extui %9 : i1 to i32
    %c0_i32_8 = arith.constant 0 : i32
    %11 = arith.cmpi ne, %10, %c0_i32_8 : i32
    scf.if %11 {
      %c0_9 = arith.constant 0 : index
      %c0_10 = arith.constant 0 : index
      %12 = vector.load %arg7[%c0_9, %c0_10] : memref<32x128xf32, #tpu.memory_space<vmem>>, vector<32x128xf32>
      %c0_11 = arith.constant 0 : index
      %c0_12 = arith.constant 0 : index
      %13 = vector.load %arg5[%c0_11, %c0_12] : memref<1x128xf32, #tpu.memory_space<vmem>>, vector<1x128xf32>
      %14 = vector.broadcast %13 : vector<1x128xf32> to vector<32x128xf32>
      %15 = arith.addf %12, %14 : vector<32x128xf32>
      %cst_13 = arith.constant 0.000000e+00 : f32
      %16 = vector.broadcast %cst_13 : f32 to vector<32x128xf32>
      %17 = arith.maximumf %15, %16 : vector<32x128xf32>
      %18 = arith.truncf %17 : vector<32x128xf32> to vector<32x128xbf16>
      %c0_14 = arith.constant 0 : index
      %c0_15 = arith.constant 0 : index
      %19 = vector.load %arg6[%c0_14, %c0_15] : memref<32x128xbf16, #tpu.memory_space<vmem>>, vector<32x128xbf16>
      tpu.vector_store %arg6[%c0_14, %c0_15], %18 {strides = array<i32>} : memref<32x128xbf16, #tpu.memory_space<vmem>>, vector<32x128xbf16>,
    } else {
    }
    return
  }
  func.func @transform_0(%arg0: i32, %arg1: i32, %arg2: i32) -> (i32, i32) {
    %c0_i32 = arith.constant 0 : i32
    return %arg0, %arg2 : i32, i32
  }
  func.func @transform_1(%arg0: i32, %arg1: i32, %arg2: i32) -> (i32, i32) {
    %c0_i32 = arith.constant 0 : i32
    return %arg2, %arg1 : i32, i32
  }
  func.func @transform_2(%arg0: i32, %arg1: i32, %arg2: i32) -> (i32, i32) {
    %c0_i32 = arith.constant 0 : i32
    %c0_i32_0 = arith.constant 0 : i32
    return %c0_i32, %arg1 : i32, i32
  }
  func.func @transform_3(%arg0: i32, %arg1: i32, %arg2: i32) -> (i32, i32) {
    %c0_i32 = arith.constant 0 : i32
    return %arg0, %arg1 : i32, i32
  }
}

module attributes {stable_mosaic.version = 11 : i64} {
  func.func @_matmul_bias_relu_kernel(%arg0: i32, %arg1: i32, %arg2: i32, %arg3: memref<32x128xbf16, #tpu.memory_space<vmem>>, %arg4: memref<128x256xbf16, #tpu.memory_space<vmem>>, %arg5: memref<1x256xf32, #tpu.memory_space<vmem>>, %arg6: memref<32x256xbf16, #tpu.memory_space<vmem>>, %arg7: memref<32x256xf32, #tpu.memory_space<vmem>>) attributes {dimension_semantics = [#tpu.dimension_semantics<parallel>, #tpu.dimension_semantics<parallel>, #tpu.dimension_semantics<arbitrary>], iteration_bounds = array<i64: 1, 1, 9>, scalar_prefetch = 0 : i64, scratch_operands = 1 : i64, tpu.core_type = #tpu.core_type<tc>, window_params = [{transform_indices = @transform_0, window_bounds = array<i64: 32, 128>}, {transform_indices = @transform_1, window_bounds = array<i64: 128, 256>}, {transform_indices = @transform_2, window_bounds = array<i64: 1, 256>}, {transform_indices = @transform_3, window_bounds = array<i64: 32, 256>}]} {
    %c0_i32 = arith.constant 0 : i32
    %0 = arith.cmpi eq, %arg2, %c0_i32 : i32
    %1 = arith.extui %0 : i1 to i32
    %c0_i32_0 = arith.constant 0 : i32
    %2 = arith.cmpi ne, %1, %c0_i32_0 : i32
    scf.if %2 {
      %cst_9 = arith.constant 0.000000e+00 : f32
      %12 = vector.broadcast %cst_9 : f32 to vector<32x256xf32>
      %c0_10 = arith.constant 0 : index
      %c0_11 = arith.constant 0 : index
      %13 = vector.load %arg7[%c0_10, %c0_11] : memref<32x256xf32, #tpu.memory_space<vmem>>, vector<32x256xf32>
      tpu.vector_store %arg7[%c0_10, %c0_11], %12 {strides = array<i32>} : memref<32x256xf32, #tpu.memory_space<vmem>>, vector<32x256xf32>,
    } else {
    }
    %c0 = arith.constant 0 : index
    %c0_1 = arith.constant 0 : index
    %3 = vector.load %arg7[%c0, %c0_1] : memref<32x256xf32, #tpu.memory_space<vmem>>, vector<32x256xf32>
    %c0_2 = arith.constant 0 : index
    %c0_3 = arith.constant 0 : index
    %4 = vector.load %arg3[%c0_2, %c0_3] : memref<32x128xbf16, #tpu.memory_space<vmem>>, vector<32x128xbf16>
    %c0_4 = arith.constant 0 : index
    %c0_5 = arith.constant 0 : index
    %5 = vector.load %arg4[%c0_4, %c0_5] : memref<128x256xbf16, #tpu.memory_space<vmem>>, vector<128x256xbf16>
    %cst = arith.constant dense<0.000000e+00> : vector<32x256xf32>
    %6 = tpu.matmul %4, %5, %cst {dimension_numbers = #tpu.dot_dimension_numbers<[1], [0], [0], [1], [0, 0, 1, 1], [], []>} : vector<32x128xbf16>, vector<128x256xbf16>, vector<32x256xf32> -> vector<32x256xf32>
    %7 = arith.addf %3, %6 : vector<32x256xf32>
    %c0_6 = arith.constant 0 : index
    %c0_7 = arith.constant 0 : index
    %8 = vector.load %arg7[%c0_6, %c0_7] : memref<32x256xf32, #tpu.memory_space<vmem>>, vector<32x256xf32>
    tpu.vector_store %arg7[%c0_6, %c0_7], %7 {strides = array<i32>} : memref<32x256xf32, #tpu.memory_space<vmem>>, vector<32x256xf32>,
    %c8_i32 = arith.constant 8 : i32
    %9 = arith.cmpi eq, %arg2, %c8_i32 : i32
    %10 = arith.extui %9 : i1 to i32
    %c0_i32_8 = arith.constant 0 : i32
    %11 = arith.cmpi ne, %10, %c0_i32_8 : i32
    scf.if %11 {
      %c0_9 = arith.constant 0 : index
      %c0_10 = arith.constant 0 : index
      %12 = vector.load %arg7[%c0_9, %c0_10] : memref<32x256xf32, #tpu.memory_space<vmem>>, vector<32x256xf32>
      %c0_11 = arith.constant 0 : index
      %c0_12 = arith.constant 0 : index
      %13 = vector.load %arg5[%c0_11, %c0_12] : memref<1x256xf32, #tpu.memory_space<vmem>>, vector<1x256xf32>
      %14 = vector.broadcast %13 : vector<1x256xf32> to vector<32x256xf32>
      %15 = arith.addf %12, %14 : vector<32x256xf32>
      %cst_13 = arith.constant 0.000000e+00 : f32
      %16 = vector.broadcast %cst_13 : f32 to vector<32x256xf32>
      %17 = arith.maximumf %15, %16 : vector<32x256xf32>
      %18 = arith.truncf %17 : vector<32x256xf32> to vector<32x256xbf16>
      %c0_14 = arith.constant 0 : index
      %c0_15 = arith.constant 0 : index
      %19 = vector.load %arg6[%c0_14, %c0_15] : memref<32x256xbf16, #tpu.memory_space<vmem>>, vector<32x256xbf16>
      tpu.vector_store %arg6[%c0_14, %c0_15], %18 {strides = array<i32>} : memref<32x256xbf16, #tpu.memory_space<vmem>>, vector<32x256xbf16>,
    } else {
    }
    return
  }
  func.func @transform_0(%arg0: i32, %arg1: i32, %arg2: i32) -> (i32, i32) {
    %c0_i32 = arith.constant 0 : i32
    return %arg0, %arg2 : i32, i32
  }
  func.func @transform_1(%arg0: i32, %arg1: i32, %arg2: i32) -> (i32, i32) {
    %c0_i32 = arith.constant 0 : i32
    return %arg2, %arg1 : i32, i32
  }
  func.func @transform_2(%arg0: i32, %arg1: i32, %arg2: i32) -> (i32, i32) {
    %c0_i32 = arith.constant 0 : i32
    %c0_i32_0 = arith.constant 0 : i32
    return %c0_i32, %arg1 : i32, i32
  }
  func.func @transform_3(%arg0: i32, %arg1: i32, %arg2: i32) -> (i32, i32) {
    %c0_i32 = arith.constant 0 : i32
    return %arg0, %arg1 : i32, i32
  }
}

module attributes {stable_mosaic.version = 11 : i64} {
  func.func @_matmul_bias_relu_kernel(%arg0: i32, %arg1: i32, %arg2: i32, %arg3: memref<8x256xbf16, #tpu.memory_space<vmem>>, %arg4: memref<256x256xbf16, #tpu.memory_space<vmem>>, %arg5: memref<1x256xf32, #tpu.memory_space<vmem>>, %arg6: memref<8x256xbf16, #tpu.memory_space<vmem>>, %arg7: memref<8x256xf32, #tpu.memory_space<vmem>>) attributes {dimension_semantics = [#tpu.dimension_semantics<parallel>, #tpu.dimension_semantics<parallel>, #tpu.dimension_semantics<arbitrary>], iteration_bounds = array<i64: 1, 1, 9>, scalar_prefetch = 0 : i64, scratch_operands = 1 : i64, tpu.core_type = #tpu.core_type<tc>, window_params = [{transform_indices = @transform_0, window_bounds = array<i64: 8, 256>}, {transform_indices = @transform_1, window_bounds = array<i64: 256, 256>}, {transform_indices = @transform_2, window_bounds = array<i64: 1, 256>}, {transform_indices = @transform_3, window_bounds = array<i64: 8, 256>}]} {
    %c0_i32 = arith.constant 0 : i32
    %0 = arith.cmpi eq, %arg2, %c0_i32 : i32
    %1 = arith.extui %0 : i1 to i32
    %c0_i32_0 = arith.constant 0 : i32
    %2 = arith.cmpi ne, %1, %c0_i32_0 : i32
    scf.if %2 {
      %cst_9 = arith.constant 0.000000e+00 : f32
      %12 = vector.broadcast %cst_9 : f32 to vector<8x256xf32>
      %c0_10 = arith.constant 0 : index
      %c0_11 = arith.constant 0 : index
      %13 = vector.load %arg7[%c0_10, %c0_11] : memref<8x256xf32, #tpu.memory_space<vmem>>, vector<8x256xf32>
      tpu.vector_store %arg7[%c0_10, %c0_11], %12 {strides = array<i32>} : memref<8x256xf32, #tpu.memory_space<vmem>>, vector<8x256xf32>,
    } else {
    }
    %c0 = arith.constant 0 : index
    %c0_1 = arith.constant 0 : index
    %3 = vector.load %arg7[%c0, %c0_1] : memref<8x256xf32, #tpu.memory_space<vmem>>, vector<8x256xf32>
    %c0_2 = arith.constant 0 : index
    %c0_3 = arith.constant 0 : index
    %4 = vector.load %arg3[%c0_2, %c0_3] : memref<8x256xbf16, #tpu.memory_space<vmem>>, vector<8x256xbf16>
    %c0_4 = arith.constant 0 : index
    %c0_5 = arith.constant 0 : index
    %5 = vector.load %arg4[%c0_4, %c0_5] : memref<256x256xbf16, #tpu.memory_space<vmem>>, vector<256x256xbf16>
    %cst = arith.constant dense<0.000000e+00> : vector<8x256xf32>
    %6 = tpu.matmul %4, %5, %cst {dimension_numbers = #tpu.dot_dimension_numbers<[1], [0], [0], [1], [0, 0, 1, 1], [], []>} : vector<8x256xbf16>, vector<256x256xbf16>, vector<8x256xf32> -> vector<8x256xf32>
    %7 = arith.addf %3, %6 : vector<8x256xf32>
    %c0_6 = arith.constant 0 : index
    %c0_7 = arith.constant 0 : index
    %8 = vector.load %arg7[%c0_6, %c0_7] : memref<8x256xf32, #tpu.memory_space<vmem>>, vector<8x256xf32>
    tpu.vector_store %arg7[%c0_6, %c0_7], %7 {strides = array<i32>} : memref<8x256xf32, #tpu.memory_space<vmem>>, vector<8x256xf32>,
    %c8_i32 = arith.constant 8 : i32
    %9 = arith.cmpi eq, %arg2, %c8_i32 : i32
    %10 = arith.extui %9 : i1 to i32
    %c0_i32_8 = arith.constant 0 : i32
    %11 = arith.cmpi ne, %10, %c0_i32_8 : i32
    scf.if %11 {
      %c0_9 = arith.constant 0 : index
      %c0_10 = arith.constant 0 : index
      %12 = vector.load %arg7[%c0_9, %c0_10] : memref<8x256xf32, #tpu.memory_space<vmem>>, vector<8x256xf32>
      %c0_11 = arith.constant 0 : index
      %c0_12 = arith.constant 0 : index
      %13 = vector.load %arg5[%c0_11, %c0_12] : memref<1x256xf32, #tpu.memory_space<vmem>>, vector<1x256xf32>
      %14 = vector.broadcast %13 : vector<1x256xf32> to vector<8x256xf32>
      %15 = arith.addf %12, %14 : vector<8x256xf32>
      %cst_13 = arith.constant 0.000000e+00 : f32
      %16 = vector.broadcast %cst_13 : f32 to vector<8x256xf32>
      %17 = arith.maximumf %15, %16 : vector<8x256xf32>
      %18 = arith.truncf %17 : vector<8x256xf32> to vector<8x256xbf16>
      %c0_14 = arith.constant 0 : index
      %c0_15 = arith.constant 0 : index
      %19 = vector.load %arg6[%c0_14, %c0_15] : memref<8x256xbf16, #tpu.memory_space<vmem>>, vector<8x256xbf16>
      tpu.vector_store %arg6[%c0_14, %c0_15], %18 {strides = array<i32>} : memref<8x256xbf16, #tpu.memory_space<vmem>>, vector<8x256xbf16>,
    } else {
    }
    return
  }
  func.func @transform_0(%arg0: i32, %arg1: i32, %arg2: i32) -> (i32, i32) {
    %c0_i32 = arith.constant 0 : i32
    return %arg0, %arg2 : i32, i32
  }
  func.func @transform_1(%arg0: i32, %arg1: i32, %arg2: i32) -> (i32, i32) {
    %c0_i32 = arith.constant 0 : i32
    return %arg2, %arg1 : i32, i32
  }
  func.func @transform_2(%arg0: i32, %arg1: i32, %arg2: i32) -> (i32, i32) {
    %c0_i32 = arith.constant 0 : i32
    %c0_i32_0 = arith.constant 0 : i32
    return %c0_i32, %arg1 : i32, i32
  }
  func.func @transform_3(%arg0: i32, %arg1: i32, %arg2: i32) -> (i32, i32) {
    %c0_i32 = arith.constant 0 : i32
    return %arg0, %arg1 : i32, i32
  }
}

module attributes {stable_mosaic.version = 11 : i64} {
  func.func @_matmul_bias_relu_kernel(%arg0: i32, %arg1: i32, %arg2: i32, %arg3: memref<8x256xbf16, #tpu.memory_space<vmem>>, %arg4: memref<256x256xbf16, #tpu.memory_space<vmem>>, %arg5: memref<1x256xf32, #tpu.memory_space<vmem>>, %arg6: memref<8x256xbf16, #tpu.memory_space<vmem>>, %arg7: memref<8x256xf32, #tpu.memory_space<vmem>>) attributes {dimension_semantics = [#tpu.dimension_semantics<parallel>, #tpu.dimension_semantics<parallel>, #tpu.dimension_semantics<arbitrary>], iteration_bounds = array<i64: 1, 2, 9>, scalar_prefetch = 0 : i64, scratch_operands = 1 : i64, tpu.core_type = #tpu.core_type<tc>, window_params = [{transform_indices = @transform_0, window_bounds = array<i64: 8, 256>}, {transform_indices = @transform_1, window_bounds = array<i64: 256, 256>}, {transform_indices = @transform_2, window_bounds = array<i64: 1, 256>}, {transform_indices = @transform_3, window_bounds = array<i64: 8, 256>}]} {
    %c0_i32 = arith.constant 0 : i32
    %0 = arith.cmpi eq, %arg2, %c0_i32 : i32
    %1 = arith.extui %0 : i1 to i32
    %c0_i32_0 = arith.constant 0 : i32
    %2 = arith.cmpi ne, %1, %c0_i32_0 : i32
    scf.if %2 {
      %cst_9 = arith.constant 0.000000e+00 : f32
      %12 = vector.broadcast %cst_9 : f32 to vector<8x256xf32>
      %c0_10 = arith.constant 0 : index
      %c0_11 = arith.constant 0 : index
      %13 = vector.load %arg7[%c0_10, %c0_11] : memref<8x256xf32, #tpu.memory_space<vmem>>, vector<8x256xf32>
      tpu.vector_store %arg7[%c0_10, %c0_11], %12 {strides = array<i32>} : memref<8x256xf32, #tpu.memory_space<vmem>>, vector<8x256xf32>,
    } else {
    }
    %c0 = arith.constant 0 : index
    %c0_1 = arith.constant 0 : index
    %3 = vector.load %arg7[%c0, %c0_1] : memref<8x256xf32, #tpu.memory_space<vmem>>, vector<8x256xf32>
    %c0_2 = arith.constant 0 : index
    %c0_3 = arith.constant 0 : index
    %4 = vector.load %arg3[%c0_2, %c0_3] : memref<8x256xbf16, #tpu.memory_space<vmem>>, vector<8x256xbf16>
    %c0_4 = arith.constant 0 : index
    %c0_5 = arith.constant 0 : index
    %5 = vector.load %arg4[%c0_4, %c0_5] : memref<256x256xbf16, #tpu.memory_space<vmem>>, vector<256x256xbf16>
    %cst = arith.constant dense<0.000000e+00> : vector<8x256xf32>
    %6 = tpu.matmul %4, %5, %cst {dimension_numbers = #tpu.dot_dimension_numbers<[1], [0], [0], [1], [0, 0, 1, 1], [], []>} : vector<8x256xbf16>, vector<256x256xbf16>, vector<8x256xf32> -> vector<8x256xf32>
    %7 = arith.addf %3, %6 : vector<8x256xf32>
    %c0_6 = arith.constant 0 : index
    %c0_7 = arith.constant 0 : index
    %8 = vector.load %arg7[%c0_6, %c0_7] : memref<8x256xf32, #tpu.memory_space<vmem>>, vector<8x256xf32>
    tpu.vector_store %arg7[%c0_6, %c0_7], %7 {strides = array<i32>} : memref<8x256xf32, #tpu.memory_space<vmem>>, vector<8x256xf32>,
    %c8_i32 = arith.constant 8 : i32
    %9 = arith.cmpi eq, %arg2, %c8_i32 : i32
    %10 = arith.extui %9 : i1 to i32
    %c0_i32_8 = arith.constant 0 : i32
    %11 = arith.cmpi ne, %10, %c0_i32_8 : i32
    scf.if %11 {
      %c0_9 = arith.constant 0 : index
      %c0_10 = arith.constant 0 : index
      %12 = vector.load %arg7[%c0_9, %c0_10] : memref<8x256xf32, #tpu.memory_space<vmem>>, vector<8x256xf32>
      %c0_11 = arith.constant 0 : index
      %c0_12 = arith.constant 0 : index
      %13 = vector.load %arg5[%c0_11, %c0_12] : memref<1x256xf32, #tpu.memory_space<vmem>>, vector<1x256xf32>
      %14 = vector.broadcast %13 : vector<1x256xf32> to vector<8x256xf32>
      %15 = arith.addf %12, %14 : vector<8x256xf32>
      %cst_13 = arith.constant 0.000000e+00 : f32
      %16 = vector.broadcast %cst_13 : f32 to vector<8x256xf32>
      %17 = arith.maximumf %15, %16 : vector<8x256xf32>
      %18 = arith.truncf %17 : vector<8x256xf32> to vector<8x256xbf16>
      %c0_14 = arith.constant 0 : index
      %c0_15 = arith.constant 0 : index
      %19 = vector.load %arg6[%c0_14, %c0_15] : memref<8x256xbf16, #tpu.memory_space<vmem>>, vector<8x256xbf16>
      tpu.vector_store %arg6[%c0_14, %c0_15], %18 {strides = array<i32>} : memref<8x256xbf16, #tpu.memory_space<vmem>>, vector<8x256xbf16>,
    } else {
    }
    return
  }
  func.func @transform_0(%arg0: i32, %arg1: i32, %arg2: i32) -> (i32, i32) {
    %c0_i32 = arith.constant 0 : i32
    return %arg0, %arg2 : i32, i32
  }
  func.func @transform_1(%arg0: i32, %arg1: i32, %arg2: i32) -> (i32, i32) {
    %c0_i32 = arith.constant 0 : i32
    return %arg2, %arg1 : i32, i32
  }
  func.func @transform_2(%arg0: i32, %arg1: i32, %arg2: i32) -> (i32, i32) {
    %c0_i32 = arith.constant 0 : i32
    %c0_i32_0 = arith.constant 0 : i32
    return %c0_i32, %arg1 : i32, i32
  }
  func.func @transform_3(%arg0: i32, %arg1: i32, %arg2: i32) -> (i32, i32) {
    %c0_i32 = arith.constant 0 : i32
    return %arg0, %arg1 : i32, i32
  }
}

module attributes {stable_mosaic.version = 11 : i64} {
  func.func @_matmul_bias_relu_kernel(%arg0: i32, %arg1: i32, %arg2: i32, %arg3: memref<8x256xbf16, #tpu.memory_space<vmem>>, %arg4: memref<256x256xbf16, #tpu.memory_space<vmem>>, %arg5: memref<1x256xf32, #tpu.memory_space<vmem>>, %arg6: memref<8x256xbf16, #tpu.memory_space<vmem>>, %arg7: memref<8x256xf32, #tpu.memory_space<vmem>>) attributes {dimension_semantics = [#tpu.dimension_semantics<parallel>, #tpu.dimension_semantics<parallel>, #tpu.dimension_semantics<arbitrary>], iteration_bounds = array<i64: 1, 2, 18>, scalar_prefetch = 0 : i64, scratch_operands = 1 : i64, tpu.core_type = #tpu.core_type<tc>, window_params = [{transform_indices = @transform_0, window_bounds = array<i64: 8, 256>}, {transform_indices = @transform_1, window_bounds = array<i64: 256, 256>}, {transform_indices = @transform_2, window_bounds = array<i64: 1, 256>}, {transform_indices = @transform_3, window_bounds = array<i64: 8, 256>}]} {
    %c0_i32 = arith.constant 0 : i32
    %0 = arith.cmpi eq, %arg2, %c0_i32 : i32
    %1 = arith.extui %0 : i1 to i32
    %c0_i32_0 = arith.constant 0 : i32
    %2 = arith.cmpi ne, %1, %c0_i32_0 : i32
    scf.if %2 {
      %cst_9 = arith.constant 0.000000e+00 : f32
      %12 = vector.broadcast %cst_9 : f32 to vector<8x256xf32>
      %c0_10 = arith.constant 0 : index
      %c0_11 = arith.constant 0 : index
      %13 = vector.load %arg7[%c0_10, %c0_11] : memref<8x256xf32, #tpu.memory_space<vmem>>, vector<8x256xf32>
      tpu.vector_store %arg7[%c0_10, %c0_11], %12 {strides = array<i32>} : memref<8x256xf32, #tpu.memory_space<vmem>>, vector<8x256xf32>,
    } else {
    }
    %c0 = arith.constant 0 : index
    %c0_1 = arith.constant 0 : index
    %3 = vector.load %arg7[%c0, %c0_1] : memref<8x256xf32, #tpu.memory_space<vmem>>, vector<8x256xf32>
    %c0_2 = arith.constant 0 : index
    %c0_3 = arith.constant 0 : index
    %4 = vector.load %arg3[%c0_2, %c0_3] : memref<8x256xbf16, #tpu.memory_space<vmem>>, vector<8x256xbf16>
    %c0_4 = arith.constant 0 : index
    %c0_5 = arith.constant 0 : index
    %5 = vector.load %arg4[%c0_4, %c0_5] : memref<256x256xbf16, #tpu.memory_space<vmem>>, vector<256x256xbf16>
    %cst = arith.constant dense<0.000000e+00> : vector<8x256xf32>
    %6 = tpu.matmul %4, %5, %cst {dimension_numbers = #tpu.dot_dimension_numbers<[1], [0], [0], [1], [0, 0, 1, 1], [], []>} : vector<8x256xbf16>, vector<256x256xbf16>, vector<8x256xf32> -> vector<8x256xf32>
    %7 = arith.addf %3, %6 : vector<8x256xf32>
    %c0_6 = arith.constant 0 : index
    %c0_7 = arith.constant 0 : index
    %8 = vector.load %arg7[%c0_6, %c0_7] : memref<8x256xf32, #tpu.memory_space<vmem>>, vector<8x256xf32>
    tpu.vector_store %arg7[%c0_6, %c0_7], %7 {strides = array<i32>} : memref<8x256xf32, #tpu.memory_space<vmem>>, vector<8x256xf32>,
    %c17_i32 = arith.constant 17 : i32
    %9 = arith.cmpi eq, %arg2, %c17_i32 : i32
    %10 = arith.extui %9 : i1 to i32
    %c0_i32_8 = arith.constant 0 : i32
    %11 = arith.cmpi ne, %10, %c0_i32_8 : i32
    scf.if %11 {
      %c0_9 = arith.constant 0 : index
      %c0_10 = arith.constant 0 : index
      %12 = vector.load %arg7[%c0_9, %c0_10] : memref<8x256xf32, #tpu.memory_space<vmem>>, vector<8x256xf32>
      %c0_11 = arith.constant 0 : index
      %c0_12 = arith.constant 0 : index
      %13 = vector.load %arg5[%c0_11, %c0_12] : memref<1x256xf32, #tpu.memory_space<vmem>>, vector<1x256xf32>
      %14 = vector.broadcast %13 : vector<1x256xf32> to vector<8x256xf32>
      %15 = arith.addf %12, %14 : vector<8x256xf32>
      %cst_13 = arith.constant 0.000000e+00 : f32
      %16 = vector.broadcast %cst_13 : f32 to vector<8x256xf32>
      %17 = arith.maximumf %15, %16 : vector<8x256xf32>
      %18 = arith.truncf %17 : vector<8x256xf32> to vector<8x256xbf16>
      %c0_14 = arith.constant 0 : index
      %c0_15 = arith.constant 0 : index
      %19 = vector.load %arg6[%c0_14, %c0_15] : memref<8x256xbf16, #tpu.memory_space<vmem>>, vector<8x256xbf16>
      tpu.vector_store %arg6[%c0_14, %c0_15], %18 {strides = array<i32>} : memref<8x256xbf16, #tpu.memory_space<vmem>>, vector<8x256xbf16>,
    } else {
    }
    return
  }
  func.func @transform_0(%arg0: i32, %arg1: i32, %arg2: i32) -> (i32, i32) {
    %c0_i32 = arith.constant 0 : i32
    return %arg0, %arg2 : i32, i32
  }
  func.func @transform_1(%arg0: i32, %arg1: i32, %arg2: i32) -> (i32, i32) {
    %c0_i32 = arith.constant 0 : i32
    return %arg2, %arg1 : i32, i32
  }
  func.func @transform_2(%arg0: i32, %arg1: i32, %arg2: i32) -> (i32, i32) {
    %c0_i32 = arith.constant 0 : i32
    %c0_i32_0 = arith.constant 0 : i32
    return %c0_i32, %arg1 : i32, i32
  }
  func.func @transform_3(%arg0: i32, %arg1: i32, %arg2: i32) -> (i32, i32) {
    %c0_i32 = arith.constant 0 : i32
    return %arg0, %arg1 : i32, i32
  }
}

module attributes {stable_mosaic.version = 11 : i64} {
  func.func @_matmul_bias_relu_kernel(%arg0: i32, %arg1: i32, %arg2: i32, %arg3: memref<8x256xbf16, #tpu.memory_space<vmem>>, %arg4: memref<256x256xbf16, #tpu.memory_space<vmem>>, %arg5: memref<1x256xf32, #tpu.memory_space<vmem>>, %arg6: memref<8x256xf32, #tpu.memory_space<vmem>>, %arg7: memref<8x256xf32, #tpu.memory_space<vmem>>) attributes {dimension_semantics = [#tpu.dimension_semantics<parallel>, #tpu.dimension_semantics<parallel>, #tpu.dimension_semantics<arbitrary>], iteration_bounds = array<i64: 1, 1, 18>, scalar_prefetch = 0 : i64, scratch_operands = 1 : i64, tpu.core_type = #tpu.core_type<tc>, window_params = [{transform_indices = @transform_0, window_bounds = array<i64: 8, 256>}, {transform_indices = @transform_1, window_bounds = array<i64: 256, 256>}, {transform_indices = @transform_2, window_bounds = array<i64: 1, 256>}, {transform_indices = @transform_3, window_bounds = array<i64: 8, 256>}]} {
    %c0_i32 = arith.constant 0 : i32
    %0 = arith.cmpi eq, %arg2, %c0_i32 : i32
    %1 = arith.extui %0 : i1 to i32
    %c0_i32_0 = arith.constant 0 : i32
    %2 = arith.cmpi ne, %1, %c0_i32_0 : i32
    scf.if %2 {
      %cst_9 = arith.constant 0.000000e+00 : f32
      %12 = vector.broadcast %cst_9 : f32 to vector<8x256xf32>
      %c0_10 = arith.constant 0 : index
      %c0_11 = arith.constant 0 : index
      %13 = vector.load %arg7[%c0_10, %c0_11] : memref<8x256xf32, #tpu.memory_space<vmem>>, vector<8x256xf32>
      tpu.vector_store %arg7[%c0_10, %c0_11], %12 {strides = array<i32>} : memref<8x256xf32, #tpu.memory_space<vmem>>, vector<8x256xf32>,
    } else {
    }
    %c0 = arith.constant 0 : index
    %c0_1 = arith.constant 0 : index
    %3 = vector.load %arg7[%c0, %c0_1] : memref<8x256xf32, #tpu.memory_space<vmem>>, vector<8x256xf32>
    %c0_2 = arith.constant 0 : index
    %c0_3 = arith.constant 0 : index
    %4 = vector.load %arg3[%c0_2, %c0_3] : memref<8x256xbf16, #tpu.memory_space<vmem>>, vector<8x256xbf16>
    %c0_4 = arith.constant 0 : index
    %c0_5 = arith.constant 0 : index
    %5 = vector.load %arg4[%c0_4, %c0_5] : memref<256x256xbf16, #tpu.memory_space<vmem>>, vector<256x256xbf16>
    %cst = arith.constant dense<0.000000e+00> : vector<8x256xf32>
    %6 = tpu.matmul %4, %5, %cst {dimension_numbers = #tpu.dot_dimension_numbers<[1], [0], [0], [1], [0, 0, 1, 1], [], []>} : vector<8x256xbf16>, vector<256x256xbf16>, vector<8x256xf32> -> vector<8x256xf32>
    %7 = arith.addf %3, %6 : vector<8x256xf32>
    %c0_6 = arith.constant 0 : index
    %c0_7 = arith.constant 0 : index
    %8 = vector.load %arg7[%c0_6, %c0_7] : memref<8x256xf32, #tpu.memory_space<vmem>>, vector<8x256xf32>
    tpu.vector_store %arg7[%c0_6, %c0_7], %7 {strides = array<i32>} : memref<8x256xf32, #tpu.memory_space<vmem>>, vector<8x256xf32>,
    %c17_i32 = arith.constant 17 : i32
    %9 = arith.cmpi eq, %arg2, %c17_i32 : i32
    %10 = arith.extui %9 : i1 to i32
    %c0_i32_8 = arith.constant 0 : i32
    %11 = arith.cmpi ne, %10, %c0_i32_8 : i32
    scf.if %11 {
      %c0_9 = arith.constant 0 : index
      %c0_10 = arith.constant 0 : index
      %12 = vector.load %arg7[%c0_9, %c0_10] : memref<8x256xf32, #tpu.memory_space<vmem>>, vector<8x256xf32>
      %c0_11 = arith.constant 0 : index
      %c0_12 = arith.constant 0 : index
      %13 = vector.load %arg5[%c0_11, %c0_12] : memref<1x256xf32, #tpu.memory_space<vmem>>, vector<1x256xf32>
      %14 = vector.broadcast %13 : vector<1x256xf32> to vector<8x256xf32>
      %15 = arith.addf %12, %14 : vector<8x256xf32>
      %cst_13 = arith.constant 0.000000e+00 : f32
      %16 = vector.broadcast %cst_13 : f32 to vector<8x256xf32>
      %17 = arith.maximumf %15, %16 : vector<8x256xf32>
      %c0_14 = arith.constant 0 : index
      %c0_15 = arith.constant 0 : index
      %18 = vector.load %arg6[%c0_14, %c0_15] : memref<8x256xf32, #tpu.memory_space<vmem>>, vector<8x256xf32>
      tpu.vector_store %arg6[%c0_14, %c0_15], %17 {strides = array<i32>} : memref<8x256xf32, #tpu.memory_space<vmem>>, vector<8x256xf32>,
    } else {
    }
    return
  }
  func.func @transform_0(%arg0: i32, %arg1: i32, %arg2: i32) -> (i32, i32) {
    %c0_i32 = arith.constant 0 : i32
    return %arg0, %arg2 : i32, i32
  }
  func.func @transform_1(%arg0: i32, %arg1: i32, %arg2: i32) -> (i32, i32) {
    %c0_i32 = arith.constant 0 : i32
    return %arg2, %arg1 : i32, i32
  }
  func.func @transform_2(%arg0: i32, %arg1: i32, %arg2: i32) -> (i32, i32) {
    %c0_i32 = arith.constant 0 : i32
    %c0_i32_0 = arith.constant 0 : i32
    return %c0_i32, %arg1 : i32, i32
  }
  func.func @transform_3(%arg0: i32, %arg1: i32, %arg2: i32) -> (i32, i32) {
    %c0_i32 = arith.constant 0 : i32
    return %arg0, %arg1 : i32, i32
  }
}

</mosaic_0001>

<llo_original>
// kernel: _lambda_.8
$region0: #{_lambda_.8}
  #allocation0 [shape = 'u32[]', space=smem, size = 0x4, offset = 0x4, fixed_abs, tag = 'smem constant byte address 0x4 - core index']
  #allocation1 [shape = 'u32[144,128]{1,0:T(1,128)}', space=vmem, size = 0x12000, scoped, tag = 'internal scratch']
  #allocation2 [shape = 'f32[128,64]{1,0:T(8,128)}', space=vmem, size = 0x10000, scoped, tag = 'scratch operand']
  %s0 = inlined_call_operand.vmem [shape: bf16[128,16], index: 0, kind: input, shape index: {}]
  %s1 = inlined_call_operand.hbm [shape: bf16[16,64], index: 1, kind: input, shape index: {}]
  %s2 = inlined_call_operand.hbm [shape: f32[1,64], index: 2, kind: input, shape index: {}]
  %s3 = inlined_call_operand.vmem [shape: bf16[128,64], index: 3, kind: output, shape index: {}]
  %s4 = sld [smem:[#allocation0]]
  $region38: #{_lambda_.8} parent=0
    _
  %s6 = ssub.s32 1, %s4
  %s7 = scalar_select 0, %s6, %s4
  $region1: #{_lambda_.8} parent=0
    #allocation3 [shape = 'u8[4096]{0}', space=vmem, size = 0x1000, scoped, tag = 'input window, operand 1, single buffered']
    #allocation4 [shape = 's32[1]{0}', space=sflag, size = 0x4, scoped, tag = 'scoped memory for _lambda_.8']
    #allocation5 [shape = 'u8[512]{0}', space=vmem, size = 0x400, scoped, tag = 'input window, operand 2, single buffered']
    #allocation6 [shape = 's32[1]{0}', space=sflag, size = 0x4, scoped, tag = 'scoped memory for _lambda_.8']
    %8 = vsyncpa [#allocation4], 0
    %9 = vsyncpa [#allocation6], 0
    // Predicated region
    $region2: #{_lambda_.8} parent=1 // pred_check
      _
    $region3: #{_lambda_.8} parent=1 // pred_check_branch
      %11 = sbr.rel (0) target = $region5
    $region4: #{_lambda_.8} parent=1 // pred_region
      _
    $region5: #{_lambda_.8} parent=1 // pred_fallthru
      _
    // Predicated region
    $region6: #{_lambda_.8} parent=1 // pred_check
      _
    $region7: #{_lambda_.8} parent=1 // pred_check_branch
      %13 = sbr.rel (0) target = $region9
    $region8: #{_lambda_.8} parent=1 // pred_region
      %s15 = ssub.s32 128, 128
      %16 = vsyncadd [#allocation4], %s15
      %s17 = sshll.u32 [#allocation3], 4
      %s18 = int_to_ptr.vmem [resolvable:$true] %s17
      %23 = dma.hbm_to_vmem [thread:$0]  %s1, 128, %s18, [#allocation4], 64, 64, 4
    $region9: #{_lambda_.8} parent=1 // pred_fallthru
      _
    // Predicated region
    $region10: #{_lambda_.8} parent=1 // pred_check
      _
    $region11: #{_lambda_.8} parent=1 // pred_check_branch
      %25 = sbr.rel (0) target = $region13
    $region12: #{_lambda_.8} parent=1 // pred_region
      %s27 = ssub.s32 16, 16
      %28 = vsyncadd [#allocation6], %s27
      %s30 = sshll.u32 [#allocation5], 4
      %s31 = int_to_ptr.vmem [resolvable:$true] %s30
      %33 = dma.hbm_to_vmem [thread:$0]  %s2, 16, %s31, [#allocation6]
    $region13: #{_lambda_.8} parent=1 // pred_fallthru
      _
    // Predicated region
    $region14: #{_lambda_.8} parent=1 // pred_check
      _
    $region15: #{_lambda_.8} parent=1 // pred_check_branch
      %35 = sbr.rel (0) target = $region17
    $region16: #{_lambda_.8} parent=1 // pred_region
      %36 = dma.done [#allocation4], 128
    $region17: #{_lambda_.8} parent=1 // pred_fallthru
      _
    // Predicated region
    $region18: #{_lambda_.8} parent=1 // pred_check
      _
    $region19: #{_lambda_.8} parent=1 // pred_check_branch
      %38 = sbr.rel (0) target = $region21
    $region20: #{_lambda_.8} parent=1 // pred_region
      %39 = dma.done [#allocation6], 16
    $region21: #{_lambda_.8} parent=1 // pred_fallthru
      _
    %p41 = scmp.eq.s32.totalorder 0, 0
    // Predicated region
    $region22: #{_lambda_.8} parent=1 // pred_check
      %p42 = pneg %p41
    $region23: #{_lambda_.8} parent=1 // pred_check_branch
      %44 = sbr.rel (%p42) target = $region25
    $region24: #{_lambda_.8} parent=1 // pred_region
      %vm45 = vcmask 523264
      %46 = vst.msk [vmem:[#allocation2] sm:$0xff] %vm45, 0.0
      %47 = vst.msk [vmem:[#allocation2 + $0x8] sm:$0xff] %vm45, 0.0
      %48 = vst.msk [vmem:[#allocation2 + $0x10] sm:$0xff] %vm45, 0.0
      %49 = vst.msk [vmem:[#allocation2 + $0x18] sm:$0xff] %vm45, 0.0
      %50 = vst.msk [vmem:[#allocation2 + $0x20] sm:$0xff] %vm45, 0.0
      %51 = vst.msk [vmem:[#allocation2 + $0x28] sm:$0xff] %vm45, 0.0
      %52 = vst.msk [vmem:[#allocation2 + $0x30] sm:$0xff] %vm45, 0.0
      %53 = vst.msk [vmem:[#allocation2 + $0x38] sm:$0xff] %vm45, 0.0
      %54 = vst.msk [vmem:[#allocation2 + $0x40] sm:$0xff] %vm45, 0.0
      %55 = vst.msk [vmem:[#allocation2 + $0x48] sm:$0xff] %vm45, 0.0
      %56 = vst.msk [vmem:[#allocation2 + $0x50] sm:$0xff] %vm45, 0.0
      %57 = vst.msk [vmem:[#allocation2 + $0x58] sm:$0xff] %vm45, 0.0
      %58 = vst.msk [vmem:[#allocation2 + $0x60] sm:$0xff] %vm45, 0.0
      %59 = vst.msk [vmem:[#allocation2 + $0x68] sm:$0xff] %vm45, 0.0
      %60 = vst.msk [vmem:[#allocation2 + $0x70] sm:$0xff] %vm45, 0.0
      %61 = vst.msk [vmem:[#allocation2 + $0x78] sm:$0xff] %vm45, 0.0
    $region25: #{_lambda_.8} parent=1 // pred_fallthru
      _
    %v62 = vld [vmem:[#allocation2] sm:$0xff]
    %v63 = vld [vmem:[#allocation2 + $0x8] sm:$0xff]
    %v64 = vld [vmem:[#allocation2 + $0x10] sm:$0xff]
    %v65 = vld [vmem:[#allocation2 + $0x18] sm:$0xff]
    %v66 = vld [vmem:[#allocation2 + $0x20] sm:$0xff]
    %v67 = vld [vmem:[#allocation2 + $0x28] sm:$0xff]
    %v68 = vld [vmem:[#allocation2 + $0x30] sm:$0xff]
    %v69 = vld [vmem:[#allocation2 + $0x38] sm:$0xff]
    %v70 = vld [vmem:[#allocation2 + $0x40] sm:$0xff]
    %v71 = vld [vmem:[#allocation2 + $0x48] sm:$0xff]
    %v72 = vld [vmem:[#allocation2 + $0x50] sm:$0xff]
    %v73 = vld [vmem:[#allocation2 + $0x58] sm:$0xff]
    %v74 = vld [vmem:[#allocation2 + $0x60] sm:$0xff]
    %v75 = vld [vmem:[#allocation2 + $0x68] sm:$0xff]
    %v76 = vld [vmem:[#allocation2 + $0x70] sm:$0xff]
    %v77 = vld [vmem:[#allocation2 + $0x78] sm:$0xff]
    %v78 = vld [vmem:[%s0] sm:$0xf]
    %v79 = vld [vmem:[%s0 + $0x4] sm:$0xf]
    %v80 = vld [vmem:[%s0 + $0x8] sm:$0xf]
    %v81 = vld [vmem:[%s0 + $0xc] sm:$0xf]
    %v82 = vld [vmem:[%s0 + $0x10] sm:$0xf]
    %v83 = vld [vmem:[%s0 + $0x14] sm:$0xf]
    %v84 = vld [vmem:[%s0 + $0x18] sm:$0xf]
    %v85 = vld [vmem:[%s0 + $0x1c] sm:$0xf]
    %v86 = vld [vmem:[%s0 + $0x20] sm:$0xf]
    %v87 = vld [vmem:[%s0 + $0x24] sm:$0xf]
    %v88 = vld [vmem:[%s0 + $0x28] sm:$0xf]
    %v89 = vld [vmem:[%s0 + $0x2c] sm:$0xf]
    %v90 = vld [vmem:[%s0 + $0x30] sm:$0xf]
    %v91 = vld [vmem:[%s0 + $0x34] sm:$0xf]
    %v92 = vld [vmem:[%s0 + $0x38] sm:$0xf]
    %v93 = vld [vmem:[%s0 + $0x3c] sm:$0xf]
    %v94 = vld [vmem:[#allocation3] sm:$0xf]
    %v95 = vld [vmem:[#allocation3 + $0x4] sm:$0xf]
    %v112 = vunpack.c.l.b16 %v78
    %v113 = vunpack.c.l.b16 %v79
    %v114 = vunpack.c.l.b16 %v80
    %v115 = vunpack.c.l.b16 %v81
    %v116 = vunpack.c.l.b16 %v82
    %v117 = vunpack.c.l.b16 %v83
    %v118 = vunpack.c.l.b16 %v84
    %v119 = vunpack.c.l.b16 %v85
    %v120 = vunpack.c.l.b16 %v86
    %v121 = vunpack.c.l.b16 %v87
    %v122 = vunpack.c.l.b16 %v88
    %v123 = vunpack.c.l.b16 %v89
    %v124 = vunpack.c.l.b16 %v90
    %v125 = vunpack.c.l.b16 %v91
    %v126 = vunpack.c.l.b16 %v92
    %v127 = vunpack.c.l.b16 %v93
    %v128 = vpack.c.b16 %v113, %v112
    %v129 = vpack.c.b16 %v115, %v114
    %v130 = vpack.c.b16 %v117, %v116
    %v131 = vpack.c.b16 %v119, %v118
    %v132 = vpack.c.b16 %v121, %v120
    %v133 = vpack.c.b16 %v123, %v122
    %v134 = vpack.c.b16 %v125, %v124
    %v135 = vpack.c.b16 %v127, %v126
    %v138 = vunpack.c.l.b16 %v94
    %v139 = vunpack.c.l.b16 %v95
    %v140 = vpack.c.b16 %v139, %v138
    %vm142 = vcmask 130048
    %v144 = vsel %vm142, %v128, 0
    %v147 = vsel %vm142, %v129, 0
    %v150 = vsel %vm142, %v130, 0
    %v153 = vsel %vm142, %v131, 0
    %v156 = vsel %vm142, %v132, 0
    %v159 = vsel %vm142, %v133, 0
    %v162 = vsel %vm142, %v134, 0
    %v165 = vsel %vm142, %v135, 0
    %167 = vmatprep.subr.bf16.mxu0 0
    %168 = vmatpush1.bf16.msra.mxu0 %v140
    %169 = vmatprep.subr.bf16.mxu0 0
    %170 = vmatpush1.bf16.msra.mxu0 0
    %171 = vmatprep.subr.bf16.mxu0 0
    %172 = vmatpush1.bf16.msra.mxu0 0
    %173 = vmatprep.subr.bf16.mxu0 0
    %174 = vmatpush1.bf16.msra.mxu0 0
    %175 = vmatprep.subr.bf16.mxu0 0
    %176 = vmatpush1.bf16.msra.mxu0 0
    %177 = vmatprep.subr.bf16.mxu0 0
    %178 = vmatpush1.bf16.msra.mxu0 0
    %179 = vmatprep.subr.bf16.mxu0 0
    %180 = vmatpush1.bf16.msra.mxu0 0
    %181 = vmatprep.subr.bf16.mxu0 0
    %182 = vmatpush1.bf16.msra.mxu0 0
    %183 = vmatprep.subr.bf16.mxu0 0
    %184 = vmatpush1.bf16.msra.mxu0 0
    %185 = vmatprep.subr.bf16.mxu0 0
    %186 = vmatpush1.bf16.msra.mxu0 0
    %187 = vmatprep.subr.bf16.mxu0 0
    %188 = vmatpush1.bf16.msra.mxu0 0
    %189 = vmatprep.subr.bf16.mxu0 0
    %190 = vmatpush1.bf16.msra.mxu0 0
    %191 = vmatprep.subr.bf16.mxu0 0
    %192 = vmatpush1.bf16.msra.mxu0 0
    %193 = vmatprep.subr.bf16.mxu0 0
    %194 = vmatpush1.bf16.msra.mxu0 0
    %195 = vmatprep.subr.bf16.mxu0 0
    %196 = vmatpush1.bf16.msra.mxu0 0
    %197 = vmatprep.subr.bf16.mxu0 0
    %198 = vmatpush1.bf16.msra.mxu0 0
    %199 = vmatprep.mubr.bf16.mxu0 0
    %200 = vmatmul.mubr.bf16.gmra.mrb[0].mxu0 %v144
    %v201 = vpop.f32.mrb[0].mxu0
    %v202 = vadd.f32 0.0, %v201
    %v203 = vpop.f32.mrb[0].mxu0
    %v204 = vpop.f32.mrb[0].mxu0
    %v205 = vadd.f32 0.0, %v204
    %v206 = vpop.f32.mrb[0].mxu0
    %207 = vmatprep.mubr.bf16.mxu0 0
    %208 = vmatmul.mubr.bf16.gmra.mrb[0].mxu0 %v147
    %v209 = vpop.f32.mrb[0].mxu0
    %v210 = vadd.f32 0.0, %v209
    %v211 = vpop.f32.mrb[0].mxu0
    %v212 = vpop.f32.mrb[0].mxu0
    %v213 = vadd.f32 0.0, %v212
    %v214 = vpop.f32.mrb[0].mxu0
    %215 = vmatprep.mubr.bf16.mxu0 0
    %216 = vmatmul.mubr.bf16.gmra.mrb[0].mxu0 %v150
    %v217 = vpop.f32.mrb[0].mxu0
    %v218 = vadd.f32 0.0, %v217
    %v219 = vpop.f32.mrb[0].mxu0
    %v220 = vpop.f32.mrb[0].mxu0
    %v221 = vadd.f32 0.0, %v220
    %v222 = vpop.f32.mrb[0].mxu0
    %223 = vmatprep.mubr.bf16.mxu0 0
    %224 = vmatmul.mubr.bf16.gmra.mrb[0].mxu0 %v153
    %v225 = vpop.f32.mrb[0].mxu0
    %v226 = vadd.f32 0.0, %v225
    %v227 = vpop.f32.mrb[0].mxu0
    %v228 = vpop.f32.mrb[0].mxu0
    %v229 = vadd.f32 0.0, %v228
    %v230 = vpop.f32.mrb[0].mxu0
    %231 = vmatprep.mubr.bf16.mxu0 0
    %232 = vmatmul.mubr.bf16.gmra.mrb[0].mxu0 %v156
    %v233 = vpop.f32.mrb[0].mxu0
    %v234 = vadd.f32 0.0, %v233
    %v235 = vpop.f32.mrb[0].mxu0
    %v236 = vpop.f32.mrb[0].mxu0
    %v237 = vadd.f32 0.0, %v236
    %v238 = vpop.f32.mrb[0].mxu0
    %239 = vmatprep.mubr.bf16.mxu0 0
    %240 = vmatmul.mubr.bf16.gmra.mrb[0].mxu0 %v159
    %v241 = vpop.f32.mrb[0].mxu0
    %v242 = vadd.f32 0.0, %v241
    %v243 = vpop.f32.mrb[0].mxu0
    %v244 = vpop.f32.mrb[0].mxu0
    %v245 = vadd.f32 0.0, %v244
    %v246 = vpop.f32.mrb[0].mxu0
    %247 = vmatprep.mubr.bf16.mxu0 0
    %248 = vmatmul.mubr.bf16.gmra.mrb[0].mxu0 %v162
    %v249 = vpop.f32.mrb[0].mxu0
    %v250 = vadd.f32 0.0, %v249
    %v251 = vpop.f32.mrb[0].mxu0
    %v252 = vpop.f32.mrb[0].mxu0
    %v253 = vadd.f32 0.0, %v252
    %v254 = vpop.f32.mrb[0].mxu0
    %255 = vmatprep.mubr.bf16.mxu0 0
    %256 = vmatmul.mubr.bf16.gmra.mrb[0].mxu0 %v165
    %v257 = vpop.f32.mrb[0].mxu0
    %v258 = vadd.f32 0.0, %v257
    %v259 = vpop.f32.mrb[0].mxu0
    %v260 = vpop.f32.mrb[0].mxu0
    %v261 = vadd.f32 0.0, %v260
    %v262 = vpop.f32.mrb[0].mxu0
    %263 = vdwg.mxu0
    %v264 = vadd.f32 %v62, %v202
    %v265 = vadd.f32 %v63, %v205
    %v266 = vadd.f32 %v64, %v210
    %v267 = vadd.f32 %v65, %v213
    %v268 = vadd.f32 %v66, %v218
    %v269 = vadd.f32 %v67, %v221
    %v270 = vadd.f32 %v68, %v226
    %v271 = vadd.f32 %v69, %v229
    %v272 = vadd.f32 %v70, %v234
    %v273 = vadd.f32 %v71, %v237
    %v274 = vadd.f32 %v72, %v242
    %v275 = vadd.f32 %v73, %v245
    %v276 = vadd.f32 %v74, %v250
    %v277 = vadd.f32 %v75, %v253
    %v278 = vadd.f32 %v76, %v258
    %v279 = vadd.f32 %v77, %v261
    %vm280 = vcmask 523264
    %281 = vst.msk [vmem:[#allocation2] sm:$0xff] %vm280, %v264
    %282 = vst.msk [vmem:[#allocation2 + $0x8] sm:$0xff] %vm280, %v265
    %283 = vst.msk [vmem:[#allocation2 + $0x10] sm:$0xff] %vm280, %v266
    %284 = vst.msk [vmem:[#allocation2 + $0x18] sm:$0xff] %vm280, %v267
    %285 = vst.msk [vmem:[#allocation2 + $0x20] sm:$0xff] %vm280, %v268
    %286 = vst.msk [vmem:[#allocation2 + $0x28] sm:$0xff] %vm280, %v269
    %287 = vst.msk [vmem:[#allocation2 + $0x30] sm:$0xff] %vm280, %v270
    %288 = vst.msk [vmem:[#allocation2 + $0x38] sm:$0xff] %vm280, %v271
    %289 = vst.msk [vmem:[#allocation2 + $0x40] sm:$0xff] %vm280, %v272
    %290 = vst.msk [vmem:[#allocation2 + $0x48] sm:$0xff] %vm280, %v273
    %291 = vst.msk [vmem:[#allocation2 + $0x50] sm:$0xff] %vm280, %v274
    %292 = vst.msk [vmem:[#allocation2 + $0x58] sm:$0xff] %vm280, %v275
    %293 = vst.msk [vmem:[#allocation2 + $0x60] sm:$0xff] %vm280, %v276
    %294 = vst.msk [vmem:[#allocation2 + $0x68] sm:$0xff] %vm280, %v277
    %295 = vst.msk [vmem:[#allocation2 + $0x70] sm:$0xff] %vm280, %v278
    %296 = vst.msk [vmem:[#allocation2 + $0x78] sm:$0xff] %vm280, %v279
    // Predicated region
    $region26: #{_lambda_.8} parent=1 // pred_check
      %p297 = pneg %p41
    $region27: #{_lambda_.8} parent=1 // pred_check_branch
      %299 = sbr.rel (%p297) target = $region29
    $region28: #{_lambda_.8} parent=1 // pred_region
      %v300 = vld [vmem:[#allocation2] sm:$0xff]
      %v301 = vld [vmem:[#allocation2 + $0x8] sm:$0xff]
      %v302 = vld [vmem:[#allocation2 + $0x10] sm:$0xff]
      %v303 = vld [vmem:[#allocation2 + $0x18] sm:$0xff]
      %v304 = vld [vmem:[#allocation2 + $0x20] sm:$0xff]
      %v305 = vld [vmem:[#allocation2 + $0x28] sm:$0xff]
      %v306 = vld [vmem:[#allocation2 + $0x30] sm:$0xff]
      %v307 = vld [vmem:[#allocation2 + $0x38] sm:$0xff]
      %v308 = vld [vmem:[#allocation2 + $0x40] sm:$0xff]
      %v309 = vld [vmem:[#allocation2 + $0x48] sm:$0xff]
      %v310 = vld [vmem:[#allocation2 + $0x50] sm:$0xff]
      %v311 = vld [vmem:[#allocation2 + $0x58] sm:$0xff]
      %v312 = vld [vmem:[#allocation2 + $0x60] sm:$0xff]
      %v313 = vld [vmem:[#allocation2 + $0x68] sm:$0xff]
      %v314 = vld [vmem:[#allocation2 + $0x70] sm:$0xff]
      %v315 = vld [vmem:[#allocation2 + $0x78] sm:$0xff]
      %v316 = vld [vmem:[#allocation5] sm:$0x1]
      %v318 = vlaneseq
      %v319 = vshrl.u32 %v318, 7
      %v320 = vsub.s32 0, %v319
      %v321 = vrot.slane %v316, %v320
      %v323 = vadd.f32 %v300, %v321
      %v324 = vadd.f32 %v301, %v321
      %v325 = vadd.f32 %v302, %v321
      %v326 = vadd.f32 %v303, %v321
      %v327 = vadd.f32 %v304, %v321
      %v328 = vadd.f32 %v305, %v321
      %v329 = vadd.f32 %v306, %v321
      %v330 = vadd.f32 %v307, %v321
      %v331 = vadd.f32 %v308, %v321
      %v332 = vadd.f32 %v309, %v321
      %v333 = vadd.f32 %v310, %v321
      %v334 = vadd.f32 %v311, %v321
      %v335 = vadd.f32 %v312, %v321
      %v336 = vadd.f32 %v313, %v321
      %v337 = vadd.f32 %v314, %v321
      %v338 = vadd.f32 %v315, %v321
      %v339 = vmax.f32 %v323, 0.0
      %v340 = vmax.f32 %v324, 0.0
      %v341 = vmax.f32 %v325, 0.0
      %v342 = vmax.f32 %v326, 0.0
      %v343 = vmax.f32 %v327, 0.0
      %v344 = vmax.f32 %v328, 0.0
      %v345 = vmax.f32 %v329, 0.0
      %v346 = vmax.f32 %v330, 0.0
      %v347 = vmax.f32 %v331, 0.0
      %v348 = vmax.f32 %v332, 0.0
      %v349 = vmax.f32 %v333, 0.0
      %v350 = vmax.f32 %v334, 0.0
      %v351 = vmax.f32 %v335, 0.0
      %v352 = vmax.f32 %v336, 0.0
      %v353 = vmax.f32 %v337, 0.0
      %v354 = vmax.f32 %v338, 0.0
      %v355 = vpack.c.bf16 %v340, %v339
      %v356 = vpack.c.bf16 %v342, %v341
      %v357 = vpack.c.bf16 %v344, %v343
      %v358 = vpack.c.bf16 %v346, %v345
      %v359 = vpack.c.bf16 %v348, %v347
      %v360 = vpack.c.bf16 %v350, %v349
      %v361 = vpack.c.bf16 %v352, %v351
      %v362 = vpack.c.bf16 %v354, %v353
      %v371 = vunpack.c.l.b16 %v355
      %v372 = vunpack.c.h.b16 %v355
      %v373 = vunpack.c.l.b16 %v356
      %v374 = vunpack.c.h.b16 %v356
      %v375 = vunpack.c.l.b16 %v357
      %v376 = vunpack.c.h.b16 %v357
      %v377 = vunpack.c.l.b16 %v358
      %v378 = vunpack.c.h.b16 %v358
      %v379 = vunpack.c.l.b16 %v359
      %v380 = vunpack.c.h.b16 %v359
      %v381 = vunpack.c.l.b16 %v360
      %v382 = vunpack.c.h.b16 %v360
      %v383 = vunpack.c.l.b16 %v361
      %v384 = vunpack.c.h.b16 %v361
      %v385 = vunpack.c.l.b16 %v362
      %v386 = vunpack.c.h.b16 %v362
      %v387 = vpack.c.b16 %v371, %v371
      %v388 = vpack.c.b16 %v372, %v372
      %v389 = vpack.c.b16 %v373, %v373
      %v390 = vpack.c.b16 %v374, %v374
      %v391 = vpack.c.b16 %v375, %v375
      %v392 = vpack.c.b16 %v376, %v376
      %v393 = vpack.c.b16 %v377, %v377
      %v394 = vpack.c.b16 %v378, %v378
      %v395 = vpack.c.b16 %v379, %v379
      %v396 = vpack.c.b16 %v380, %v380
      %v397 = vpack.c.b16 %v381, %v381
      %v398 = vpack.c.b16 %v382, %v382
      %v399 = vpack.c.b16 %v383, %v383
      %v400 = vpack.c.b16 %v384, %v384
      %v401 = vpack.c.b16 %v385, %v385
      %v402 = vpack.c.b16 %v386, %v386
      %vm419 = vcmask 519168
      %420 = vst.msk [vmem:[%s3] sm:$0xf] %vm419, %v387
      %421 = vst.msk [vmem:[%s3 + $0x4] sm:$0xf] %vm419, %v388
      %422 = vst.msk [vmem:[%s3 + $0x8] sm:$0xf] %vm419, %v389
      %423 = vst.msk [vmem:[%s3 + $0xc] sm:$0xf] %vm419, %v390
      %424 = vst.msk [vmem:[%s3 + $0x10] sm:$0xf] %vm419, %v391
      %425 = vst.msk [vmem:[%s3 + $0x14] sm:$0xf] %vm419, %v392
      %426 = vst.msk [vmem:[%s3 + $0x18] sm:$0xf] %vm419, %v393
      %427 = vst.msk [vmem:[%s3 + $0x1c] sm:$0xf] %vm419, %v394
      %428 = vst.msk [vmem:[%s3 + $0x20] sm:$0xf] %vm419, %v395
      %429 = vst.msk [vmem:[%s3 + $0x24] sm:$0xf] %vm419, %v396
      %430 = vst.msk [vmem:[%s3 + $0x28] sm:$0xf] %vm419, %v397
      %431 = vst.msk [vmem:[%s3 + $0x2c] sm:$0xf] %vm419, %v398
      %432 = vst.msk [vmem:[%s3 + $0x30] sm:$0xf] %vm419, %v399
      %433 = vst.msk [vmem:[%s3 + $0x34] sm:$0xf] %vm419, %v400
      %434 = vst.msk [vmem:[%s3 + $0x38] sm:$0xf] %vm419, %v401
      %435 = vst.msk [vmem:[%s3 + $0x3c] sm:$0xf] %vm419, %v402
    $region29: #{_lambda_.8} parent=1 // pred_fallthru
      _
    // Predicated region
    $region30: #{_lambda_.8} parent=1 // pred_check
      _
    $region31: #{_lambda_.8} parent=1 // pred_check_branch
      %437 = sbr.rel (0) target = $region33
    $region32: #{_lambda_.8} parent=1 // pred_region
      _
    $region33: #{_lambda_.8} parent=1 // pred_fallthru
      _
    // Predicated region
    $region34: #{_lambda_.8} parent=1 // pred_check
      _
    $region35: #{_lambda_.8} parent=1 // pred_check_branch
      %439 = sbr.rel (0) target = $region37
    $region36: #{_lambda_.8} parent=1 // pred_region
      _
    $region37: #{_lambda_.8} parent=1 // pred_fallthru
      _
    %440 = vsyncpa [#allocation4], 1
    %441 = vsyncpa [#allocation6], 1

// kernel: _lambda_.9
$region0: #{_lambda_.9}
  #allocation0 [shape = 'u32[]', space=smem, size = 0x4, offset = 0x4, fixed_abs, tag = 'smem constant byte address 0x4 - core index']
  #allocation1 [shape = 'u32[144,128]{1,0:T(1,128)}', space=vmem, size = 0x12000, scoped, tag = 'internal scratch']
  #allocation2 [shape = 'f32[128,128]{1,0:T(8,128)}', space=vmem, size = 0x10000, scoped, tag = 'scratch operand']
  %s0 = inlined_call_operand.vmem [shape: bf16[128,768], index: 0, kind: input, shape index: {}]
  %s1 = inlined_call_operand.hbm [shape: bf16[768,128], index: 1, kind: input, shape index: {}]
  %s2 = inlined_call_operand.hbm [shape: f32[1,128], index: 2, kind: input, shape index: {}]
  %s3 = inlined_call_operand.vmem [shape: bf16[128,128], index: 3, kind: output, shape index: {}]
  %s4 = sld [smem:[#allocation0]]
  $region99: #{_lambda_.9} parent=0
    _
  %s6 = ssub.s32 1, %s4
  %s7 = scalar_select 0, %s6, %s4
  $region1: #{_lambda_.9} parent=0
    #allocation3 [shape = 'u8[131072]{0}', space=vmem, size = 0x20000, scoped, tag = 'input window, operand 0']
    #allocation4 [shape = 'u8[131072]{0}', space=vmem, size = 0x20000, scoped, tag = 'input window, operand 1']
    #allocation5 [shape = 's32[2]{0}', space=sflag, size = 0x8, scoped, tag = 'scoped memory for _lambda_.9']
    #allocation6 [shape = 'u8[512]{0}', space=vmem, size = 0x400, scoped, tag = 'input window, operand 2, single buffered']
    #allocation7 [shape = 's32[1]{0}', space=sflag, size = 0x4, scoped, tag = 'scoped memory for _lambda_.9']
    %8 = vsyncpa [#allocation5], 0
    %s9 = scalar_lea.sflag [#allocation5], 1
    %10 = vsyncpa %s9, 0
    %11 = vsyncpa [#allocation7], 0
    loop: start=0, step=1, limit=5
    $region2: #{_lambda_.9} parent=1 // loop_pre_header
      _
    $region3: #{_lambda_.9} parent=1 // loop_header
      %s13 = sphi 0, %s17
      %p14 = scmp.ge.s32.totalorder %s13, 5
      %s20 = sphi 0, %s39
      %s21 = sphi 0, %s35
      %s22 = sphi 0, %s31
      %s23 = sphi 0, %s20
      %s24 = sphi 0, %s21
      %s25 = sphi 0, %s22
      %s26 = sphi 0, %s23
      %s27 = sphi 0, %s24
      %s28 = sphi 0, %s25
      %s44 = sphi 0, %s46
      %s47 = sphi 0, %s44
      %s48 = sphi 0, %s47
      %s64 = sphi 0, %s48
      %s72 = sphi 0, %s74
      %s75 = sphi 0, %s72
      %s76 = sphi 0, %s75
      %s92 = sphi 0, %s76
      %s98 = sphi 0, %s100
      %s101 = sphi 0, %s98
      %s102 = sphi 0, %s101
      %s118 = sphi 0, %s102
      %s126 = sphi 0, %s128
      %s129 = sphi 0, %s126
      %s130 = sphi 0, %s129
      %s146 = sphi 0, %s130
    $region4: #{_lambda_.9} parent=1 // loop_header_branch
      %16 = sbr.rel (%p14) target = $region8
    $region5: #{_lambda_.9} parent=1 // loop_body
      %s18 = ssub.s32 %s13, 1
      %s19 = ssub.s32 %s13, 2
      %s29 = sadd.s32 1, %s22
      %p30 = scmp.ge.s32.totalorder %s29, 3
      %s31 = scalar_select %p30, 0, %s29
      %s32 = sadd.s32 1, %s21
      %s33 = scalar_select %p30, %s32, %s21
      %p34 = scmp.ge.s32.totalorder %s33, 1
      %s35 = scalar_select %p34, 0, %s33
      %s36 = sadd.s32 1, %s20
      %s37 = scalar_select %p34, %s36, %s20
      %p38 = scmp.ge.s32.totalorder %s37, 1
      %s39 = scalar_select %p38, 0, %s37
      %s40 = ssub.s32 %s20, %s39
      %s41 = ssub.s32 %s22, %s31
      %s42 = sor.u32 %s40, %s41
      %p43 = scmp.eq.s32.totalorder %s42, 0
      %s45 = sadd.s32 %s44, 1
      %s46 = scalar_select %p43, %s44, %s45
      %p49 = pneg %p43
      %p50 = scmp.eq.s32.totalorder %s13, 2
      %p51 = por %p49, %p50
      %p52 = scmp.ne.s32.totalorder %s44, %s47
      %p53 = scmp.eq.s32.totalorder %s13, 0
      %p54 = por %p52, %p53
      %p55 = scmp.ne.s32.totalorder %s44, %s47
      %p56 = scmp.eq.s32.totalorder %s18, 2
      %p57 = por %p55, %p56
      %p58 = scmp.ne.s32.totalorder %s47, %s48
      %p59 = scmp.eq.s32.totalorder %s18, 0
      %p60 = por %p58, %p59
      %p61 = scmp.ne.s32.totalorder %s47, %s48
      %p62 = scmp.eq.s32.totalorder %s19, 2
      %p63 = por %p61, %p62
      %p65 = scmp.ne.s32.totalorder %s48, %s64
      %p66 = scmp.eq.s32.totalorder %s19, 0
      %p67 = por %p65, %p66
      %s68 = ssub.s32 %s22, %s31
      %s69 = ssub.s32 %s21, %s35
      %s70 = sor.u32 %s68, %s69
      %p71 = scmp.eq.s32.totalorder %s70, 0
      %s73 = sadd.s32 %s72, 1
      %s74 = scalar_select %p71, %s72, %s73
      %p77 = pneg %p71
      %p78 = scmp.eq.s32.totalorder %s13, 2
      %p79 = por %p77, %p78
      %p80 = scmp.ne.s32.totalorder %s72, %s75
      %p81 = scmp.eq.s32.totalorder %s13, 0
      %p82 = por %p80, %p81
      %p83 = scmp.ne.s32.totalorder %s72, %s75
      %p84 = scmp.eq.s32.totalorder %s18, 2
      %p85 = por %p83, %p84
      %p86 = scmp.ne.s32.totalorder %s75, %s76
      %p87 = scmp.eq.s32.totalorder %s18, 0
      %p88 = por %p86, %p87
      %p89 = scmp.ne.s32.totalorder %s75, %s76
      %p90 = scmp.eq.s32.totalorder %s19, 2
      %p91 = por %p89, %p90
      %p93 = scmp.ne.s32.totalorder %s76, %s92
      %p94 = scmp.eq.s32.totalorder %s19, 0
      %p95 = por %p93, %p94
      %s96 = ssub.s32 %s21, %s35
      %p97 = scmp.eq.s32.totalorder %s96, 0
      %s99 = sadd.s32 %s98, 1
      %s100 = scalar_select %p97, %s98, %s99
      %p103 = pneg %p97
      %p104 = scmp.eq.s32.totalorder %s13, 2
      %p105 = por %p103, %p104
      %p106 = scmp.ne.s32.totalorder %s98, %s101
      %p107 = scmp.eq.s32.totalorder %s13, 0
      %p108 = por %p106, %p107
      %p109 = scmp.ne.s32.totalorder %s98, %s101
      %p110 = scmp.eq.s32.totalorder %s18, 2
      %p111 = por %p109, %p110
      %p112 = scmp.ne.s32.totalorder %s101, %s102
      %p113 = scmp.eq.s32.totalorder %s18, 0
      %p114 = por %p112, %p113
      %p115 = scmp.ne.s32.totalorder %s101, %s102
      %p116 = scmp.eq.s32.totalorder %s19, 2
      %p117 = por %p115, %p116
      %p119 = scmp.ne.s32.totalorder %s102, %s118
      %p120 = scmp.eq.s32.totalorder %s19, 0
      %p121 = por %p119, %p120
      %s122 = ssub.s32 %s20, %s39
      %s123 = ssub.s32 %s21, %s35
      %s124 = sor.u32 %s122, %s123
      %p125 = scmp.eq.s32.totalorder %s124, 0
      %s127 = sadd.s32 %s126, 1
      %s128 = scalar_select %p125, %s126, %s127
      %p131 = pneg %p125
      %p132 = scmp.eq.s32.totalorder %s13, 2
      %p133 = por %p131, %p132
      %p134 = scmp.ne.s32.totalorder %s126, %s129
      %p135 = scmp.eq.s32.totalorder %s13, 0
      %p136 = por %p134, %p135
      %p137 = scmp.ne.s32.totalorder %s126, %s129
      %p138 = scmp.eq.s32.totalorder %s18, 2
      %p139 = por %p137, %p138
      %p140 = scmp.ne.s32.totalorder %s129, %s130
      %p141 = scmp.eq.s32.totalorder %s18, 0
      %p142 = por %p140, %p141
      %p143 = scmp.ne.s32.totalorder %s129, %s130
      %p144 = scmp.eq.s32.totalorder %s19, 2
      %p145 = por %p143, %p144
      %p147 = scmp.ne.s32.totalorder %s130, %s146
      %p148 = scmp.eq.s32.totalorder %s19, 0
      %p149 = por %p147, %p148
      %p150 = scmp.le.s32.totalorder 1, %s13
      %p151 = scmp.lt.s32.totalorder %s13, 4
      %p152 = pnand %p150, %p151
      %p153 = pneg %p152
      // Predicated region
      $region9: #{_lambda_.9} parent=5 // pred_check
        _
      $region10: #{_lambda_.9} parent=5 // pred_check_branch
        %155 = sbr.rel (%p152) target = $region12
      $region11: #{_lambda_.9} parent=5 // pred_region
        %s156 = ssub.s32 %s13, 1
        // Predicated region
        $region13: #{_lambda_.9} parent=11 // pred_check
          %p157 = pneg %p114
        $region14: #{_lambda_.9} parent=11 // pred_check_branch
          %159 = sbr.rel (%p157) target = $region16
        $region15: #{_lambda_.9} parent=11 // pred_region
          %s161 = ssub.s32 16, 16
          %162 = vsyncadd [#allocation7], %s161
          %s163 = smul.addr %s24, 16
          %s164 = scalar_lea.hbm %s2, %s163
          %s166 = sshll.u32 [#allocation6], 4
          %s167 = int_to_ptr.vmem [resolvable:$true] %s166
          %169 = dma.hbm_to_vmem [thread:$0]  %s164, 16, %s167, [#allocation7]
        $region16: #{_lambda_.9} parent=11 // pred_fallthru
          _
      $region12: #{_lambda_.9} parent=5 // pred_fallthru
        _
      %p170 = scmp.lt.s32.totalorder %s13, 3
      // Predicated region
      $region17: #{_lambda_.9} parent=5 // pred_check
        %p171 = pneg %p170
      $region18: #{_lambda_.9} parent=5 // pred_check_branch
        %173 = sbr.rel (%p171) target = $region20
      $region19: #{_lambda_.9} parent=5 // pred_region
        // Predicated region
        $region21: #{_lambda_.9} parent=19 // pred_check
          %p174 = pneg %p54
        $region22: #{_lambda_.9} parent=19 // pred_check_branch
          %176 = sbr.rel (%p174) target = $region24
        $region23: #{_lambda_.9} parent=19 // pred_region
          %s177 = sand.u32 %s44, 1
          %s178 = sand.u32 %s44, 1
          %s179 = smul.addr %s178, 128
          %s180 = scalar_lea.vmem [#allocation3], %s179
          %s181 = smul.u32 16, %s20
          %s182 = smul.u32 2, %s22
          %s183 = smul.addr %s181, 6
          %s184 = sadd.s32 %s182, %s183
          %s185 = smul.addr %s184, 4
          %s186 = scalar_lea.vmem %s0, %s185
          // Predicated region
          $region25: #{_lambda_.9} parent=23 // pred_check
            _
          $region26: #{_lambda_.9} parent=23 // pred_check_branch
            %188 = sbr.rel (0) target = $region28
          $region27: #{_lambda_.9} parent=23 // pred_region
            // Predicated region
            $region29: #{_lambda_.9} parent=27 // pred_check
              _
            $region30: #{_lambda_.9} parent=27 // pred_check_branch
              %190 = sbr.rel (0) target = $region32
            $region31: #{_lambda_.9} parent=27 // pred_region
              // Predicated region
              $region44: #{_lambda_.9} parent=31 // pred_check
                _
              $region45: #{_lambda_.9} parent=31 // pred_check_branch
                %235 = sbr.rel (0) target = $region47
              $region46: #{_lambda_.9} parent=31 // pred_region
                loop: start=0, step=1, limit=1
                $region48: #{_lambda_.9} parent=46 // loop_pre_header
                  _
                $region49: #{_lambda_.9} parent=46 // loop_header
                  %s237 = sphi 0, %s241
                  %p238 = scmp.ge.s32.totalorder %s237, 1
                  %s242 = sphi %s186, %s186
                  %s243 = sphi %s180, %s180
                $region50: #{_lambda_.9} parent=46 // loop_header_branch
                  %240 = sbr.rel (%p238) target = $region54
                $region51: #{_lambda_.9} parent=46 // loop_body
                  %v244 = vld [vmem:[%s242] sm:$0xff]
                  %245 = vst [vmem:[%s243] sm:$0xff] %v244
                  %v246 = vld [vmem:[%s242 + $0x18] sm:$0xff]
                  %247 = vst [vmem:[%s243 + $0x8] sm:$0xff] %v246
                  %v248 = vld [vmem:[%s242 + $0x30] sm:$0xff]
                  %249 = vst [vmem:[%s243 + $0x10] sm:$0xff] %v248
                  %v250 = vld [vmem:[%s242 + $0x48] sm:$0xff]
                  %251 = vst [vmem:[%s243 + $0x18] sm:$0xff] %v250
                  %v252 = vld [vmem:[%s242 + $0x60] sm:$0xff]
                  %253 = vst [vmem:[%s243 + $0x20] sm:$0xff] %v252
                  %v254 = vld [vmem:[%s242 + $0x78] sm:$0xff]
                  %255 = vst [vmem:[%s243 + $0x28] sm:$0xff] %v254
                  %v256 = vld [vmem:[%s242 + $0x90] sm:$0xff]
                  %257 = vst [vmem:[%s243 + $0x30] sm:$0xff] %v256
                  %v258 = vld [vmem:[%s242 + $0xa8] sm:$0xff]
                  %259 = vst [vmem:[%s243 + $0x38] sm:$0xff] %v258
                  %v260 = vld [vmem:[%s242 + $0xc0] sm:$0xff]
                  %261 = vst [vmem:[%s243 + $0x40] sm:$0xff] %v260
                  %v262 = vld [vmem:[%s242 + $0xd8] sm:$0xff]
                  %263 = vst [vmem:[%s243 + $0x48] sm:$0xff] %v262
                  %v264 = vld [vmem:[%s242 + $0xf0] sm:$0xff]
                  %265 = vst [vmem:[%s243 + $0x50] sm:$0xff] %v264
                  %v266 = vld [vmem:[%s242 + $0x108] sm:$0xff]
                  %267 = vst [vmem:[%s243 + $0x58] sm:$0xff] %v266
                  %v268 = vld [vmem:[%s242 + $0x120] sm:$0xff]
                  %269 = vst [vmem:[%s243 + $0x60] sm:$0xff] %v268
                  %v270 = vld [vmem:[%s242 + $0x138] sm:$0xff]
                  %271 = vst [vmem:[%s243 + $0x68] sm:$0xff] %v270
                  %v272 = vld [vmem:[%s242 + $0x150] sm:$0xff]
                  %273 = vst [vmem:[%s243 + $0x70] sm:$0xff] %v272
                  %v274 = vld [vmem:[%s242 + $0x168] sm:$0xff]
                  %275 = vst [vmem:[%s243 + $0x78] sm:$0xff] %v274
                $region52: #{_lambda_.9} parent=46 // loop_footer
                  %s241 = sadd.s32 1, %s237
                $region53: #{_lambda_.9} parent=46 // loop_footer_branch
                  %236 = sbr.rel target = $region49
                $region54: #{_lambda_.9} parent=46 // loop_exit
                  _
              $region47: #{_lambda_.9} parent=31 // pred_fallthru
                _
              // Predicated region
              $region55: #{_lambda_.9} parent=31 // pred_check
                _
              $region56: #{_lambda_.9} parent=31 // pred_check_branch
                %277 = sbr.rel target = $region58
              $region57: #{_lambda_.9} parent=31 // pred_region
                _
              $region58: #{_lambda_.9} parent=31 // pred_fallthru
                _
            $region32: #{_lambda_.9} parent=27 // pred_fallthru
              _
            // Predicated region
            $region33: #{_lambda_.9} parent=27 // pred_check
              _
            $region34: #{_lambda_.9} parent=27 // pred_check_branch
              %192 = sbr.rel target = $region36
            $region35: #{_lambda_.9} parent=27 // pred_region
              loop: start=0, step=1, limit=1
              $region37: #{_lambda_.9} parent=35 // loop_pre_header
                _
              $region38: #{_lambda_.9} parent=35 // loop_header
                %s195 = sphi 0, %s199
                %p196 = scmp.ge.s32.totalorder %s195, 1
                %s200 = sphi %s186, %s186
                %s201 = sphi %s180, %s180
              $region39: #{_lambda_.9} parent=35 // loop_header_branch
                %198 = sbr.rel (%p196) target = $region43
              $region40: #{_lambda_.9} parent=35 // loop_body
                %v202 = vld [vmem:[%s200] sm:$0xff]
                %203 = vst [vmem:[%s201] sm:$0xff] %v202
                %v204 = vld [vmem:[%s200 + $0x18] sm:$0xff]
                %205 = vst [vmem:[%s201 + $0x8] sm:$0xff] %v204
                %v206 = vld [vmem:[%s200 + $0x30] sm:$0xff]
                %207 = vst [vmem:[%s201 + $0x10] sm:$0xff] %v206
                %v208 = vld [vmem:[%s200 + $0x48] sm:$0xff]
                %209 = vst [vmem:[%s201 + $0x18] sm:$0xff] %v208
                %v210 = vld [vmem:[%s200 + $0x60] sm:$0xff]
                %211 = vst [vmem:[%s201 + $0x20] sm:$0xff] %v210
                %v212 = vld [vmem:[%s200 + $0x78] sm:$0xff]
                %213 = vst [vmem:[%s201 + $0x28] sm:$0xff] %v212
                %v214 = vld [vmem:[%s200 + $0x90] sm:$0xff]
                %215 = vst [vmem:[%s201 + $0x30] sm:$0xff] %v214
                %v216 = vld [vmem:[%s200 + $0xa8] sm:$0xff]
                %217 = vst [vmem:[%s201 + $0x38] sm:$0xff] %v216
                %v218 = vld [vmem:[%s200 + $0xc0] sm:$0xff]
                %219 = vst [vmem:[%s201 + $0x40] sm:$0xff] %v218
                %v220 = vld [vmem:[%s200 + $0xd8] sm:$0xff]
                %221 = vst [vmem:[%s201 + $0x48] sm:$0xff] %v220
                %v222 = vld [vmem:[%s200 + $0xf0] sm:$0xff]
                %223 = vst [vmem:[%s201 + $0x50] sm:$0xff] %v222
                %v224 = vld [vmem:[%s200 + $0x108] sm:$0xff]
                %225 = vst [vmem:[%s201 + $0x58] sm:$0xff] %v224
                %v226 = vld [vmem:[%s200 + $0x120] sm:$0xff]
                %227 = vst [vmem:[%s201 + $0x60] sm:$0xff] %v226
                %v228 = vld [vmem:[%s200 + $0x138] sm:$0xff]
                %229 = vst [vmem:[%s201 + $0x68] sm:$0xff] %v228
                %v230 = vld [vmem:[%s200 + $0x150] sm:$0xff]
                %231 = vst [vmem:[%s201 + $0x70] sm:$0xff] %v230
                %v232 = vld [vmem:[%s200 + $0x168] sm:$0xff]
                %233 = vst [vmem:[%s201 + $0x78] sm:$0xff] %v232
              $region41: #{_lambda_.9} parent=35 // loop_footer
                %s199 = sadd.s32 1, %s195
              $region42: #{_lambda_.9} parent=35 // loop_footer_branch
                %194 = sbr.rel target = $region38
              $region43: #{_lambda_.9} parent=35 // loop_exit
                _
            $region36: #{_lambda_.9} parent=27 // pred_fallthru
              _
          $region28: #{_lambda_.9} parent=23 // pred_fallthru
            _
          %278 = vnop
        $region24: #{_lambda_.9} parent=19 // pred_fallthru
          _
        // Predicated region
        $region59: #{_lambda_.9} parent=19 // pred_check
          %p279 = pneg %p82
        $region60: #{_lambda_.9} parent=19 // pred_check_branch
          %281 = sbr.rel (%p279) target = $region62
        $region61: #{_lambda_.9} parent=19 // pred_region
          %s282 = sand.u32 %s72, 1
          %s283 = scalar_lea.sflag [#allocation5], %s282
          %s284 = sand.u32 %s72, 1
          %s285 = smul.addr %s284, 128
          %s286 = scalar_lea.vmem [#allocation4], %s285
          %s287 = smul.u32 32, %s22
          %s289 = ssub.s32 2048, 2048
          %290 = vsyncadd %s283, %s289
          %s291 = sadd.s32 %s21, %s287
          %s292 = smul.addr %s291, 64
          %s293 = scalar_lea.hbm %s1, %s292
          %s294 = sshll.u32 %s286, 4
          %s295 = int_to_ptr.vmem [resolvable:$true] %s294
          %300 = dma.hbm_to_vmem [thread:$0]  %s293, 2048, %s295, %s283, 64, 64, 4
        $region62: #{_lambda_.9} parent=19 // pred_fallthru
          _
      $region20: #{_lambda_.9} parent=5 // pred_fallthru
        _
      %p301 = scmp.le.s32.totalorder 1, %s13
      %p302 = scmp.lt.s32.totalorder %s13, 4
      %p303 = pnand %p301, %p302
      %p304 = pneg %p303
      // Predicated region
      $region63: #{_lambda_.9} parent=5 // pred_check
        _
      $region64: #{_lambda_.9} parent=5 // pred_check_branch
        %306 = sbr.rel (%p303) target = $region66
      $region65: #{_lambda_.9} parent=5 // pred_region
        %s307 = ssub.s32 %s13, 1
        %s308 = sand.u32 %s47, 1
        %s309 = sand.u32 %s47, 1
        %s310 = smul.addr %s309, 128
        %s311 = scalar_lea.vmem [#allocation3], %s310
        // Predicated region
        $region67: #{_lambda_.9} parent=65 // pred_check
          %p312 = pneg %p60
        $region68: #{_lambda_.9} parent=65 // pred_check_branch
          %314 = sbr.rel (%p312) target = $region70
        $region69: #{_lambda_.9} parent=65 // pred_region
          _
        $region70: #{_lambda_.9} parent=65 // pred_fallthru
          _
        %s315 = sand.u32 %s75, 1
        %s316 = scalar_lea.sflag [#allocation5], %s315
        %s317 = sand.u32 %s75, 1
        %s318 = smul.addr %s317, 128
        %s319 = scalar_lea.vmem [#allocation4], %s318
        // Predicated region
        $region71: #{_lambda_.9} parent=65 // pred_check
          %p320 = pneg %p88
        $region72: #{_lambda_.9} parent=65 // pred_check_branch
          %322 = sbr.rel (%p320) target = $region74
        $region73: #{_lambda_.9} parent=65 // pred_region
          %323 = dma.done %s316, 2048
        $region74: #{_lambda_.9} parent=65 // pred_fallthru
          _
        // Predicated region
        $region75: #{_lambda_.9} parent=65 // pred_check
          %p324 = pneg %p114
        $region76: #{_lambda_.9} parent=65 // pred_check_branch
          %326 = sbr.rel (%p324) target = $region78
        $region77: #{_lambda_.9} parent=65 // pred_region
          %327 = dma.done [#allocation7], 16
        $region78: #{_lambda_.9} parent=65 // pred_fallthru
          _
        %s328 = sand.u32 %s47, 1
        %s329 = sand.u32 %s47, 1
        %s330 = smul.addr %s329, 128
        %s331 = scalar_lea.vmem [#allocation3], %s330
        %p332 = pneg %p60
        %p333 = pneg %p57
        %s334 = sand.u32 %s75, 1
        %s335 = scalar_lea.sflag [#allocation5], %s334
        %s336 = sand.u32 %s75, 1
        %s337 = smul.addr %s336, 128
        %s338 = scalar_lea.vmem [#allocation4], %s337
        %p339 = pneg %p88
        %p340 = pneg %p85
        %p341 = pneg %p114
        %p342 = pneg %p111
        %p343 = pneg %p142
        %p344 = pneg %p139
        %s345 = smul.u32 16, %s23
        %p346 = scmp.lt.s32.totalorder %s345, 15
        %s347 = scalar_select %p346, %s345, 15
        %p348 = scmp.lt.s32.totalorder %s24, 0
        %s349 = scalar_select %p348, %s24, 0
        %s350 = sadd.s32 %s349, %s347
        %s351 = smul.addr %s350, 4
        %s352 = scalar_lea.vmem %s3, %s351
        %s353 = smul.u32 16, %s23
        %s354 = smul.u32 2, %s25
        %s355 = smul.u32 32, %s25
        %s356 = smul.u32 16, %s23
        %p357 = scmp.lt.s32.totalorder %s356, 15
        %s358 = scalar_select %p357, %s356, 15
        %p359 = scmp.lt.s32.totalorder %s24, 0
        %s360 = scalar_select %p359, %s24, 0
        %s361 = sadd.s32 %s360, %s358
        %s362 = smul.addr %s361, 4
        %s363 = scalar_lea.vmem %s3, %s362
        %s364 = smul.u32 16, %s23
        %p366 = scmp.eq.s32.totalorder %s25, 0
        // Predicated region
        $region79: #{_lambda_.9} parent=65 // pred_check
          %p367 = pneg %p366
        $region80: #{_lambda_.9} parent=65 // pred_check_branch
          %369 = sbr.rel (%p367) target = $region82
        $region81: #{_lambda_.9} parent=65 // pred_region
          %370 = vst [vmem:[#allocation2] sm:$0xff] 0.0
          %371 = vst [vmem:[#allocation2 + $0x8] sm:$0xff] 0.0
          %372 = vst [vmem:[#allocation2 + $0x10] sm:$0xff] 0.0
          %373 = vst [vmem:[#allocation2 + $0x18] sm:$0xff] 0.0
          %374 = vst [vmem:[#allocation2 + $0x20] sm:$0xff] 0.0
          %375 = vst [vmem:[#allocation2 + $0x28] sm:$0xff] 0.0
          %376 = vst [vmem:[#allocation2 + $0x30] sm:$0xff] 0.0
          %377 = vst [vmem:[#allocation2 + $0x38] sm:$0xff] 0.0
          %378 = vst [vmem:[#allocation2 + $0x40] sm:$0xff] 0.0
          %379 = vst [vmem:[#allocation2 + $0x48] sm:$0xff] 0.0
          %380 = vst [vmem:[#allocation2 + $0x50] sm:$0xff] 0.0
          %381 = vst [vmem:[#allocation2 + $0x58] sm:$0xff] 0.0
          %382 = vst [vmem:[#allocation2 + $0x60] sm:$0xff] 0.0
          %383 = vst [vmem:[#allocation2 + $0x68] sm:$0xff] 0.0
          %384 = vst [vmem:[#allocation2 + $0x70] sm:$0xff] 0.0
          %385 = vst [vmem:[#allocation2 + $0x78] sm:$0xff] 0.0
        $region82: #{_lambda_.9} parent=65 // pred_fallthru
          _
        %v386 = vld [vmem:[#allocation2] sm:$0xff]
        %v387 = vld [vmem:[#allocation2 + $0x8] sm:$0xff]
        %v388 = vld [vmem:[#allocation2 + $0x10] sm:$0xff]
        %v389 = vld [vmem:[#allocation2 + $0x18] sm:$0xff]
        %v390 = vld [vmem:[#allocation2 + $0x20] sm:$0xff]
        %v391 = vld [vmem:[#allocation2 + $0x28] sm:$0xff]
        %v392 = vld [vmem:[#allocation2 + $0x30] sm:$0xff]
        %v393 = vld [vmem:[#allocation2 + $0x38] sm:$0xff]
        %v394 = vld [vmem:[#allocation2 + $0x40] sm:$0xff]
        %v395 = vld [vmem:[#allocation2 + $0x48] sm:$0xff]
        %v396 = vld [vmem:[#allocation2 + $0x50] sm:$0xff]
        %v397 = vld [vmem:[#allocation2 + $0x58] sm:$0xff]
        %v398 = vld [vmem:[#allocation2 + $0x60] sm:$0xff]
        %v399 = vld [vmem:[#allocation2 + $0x68] sm:$0xff]
        %v400 = vld [vmem:[#allocation2 + $0x70] sm:$0xff]
        %v401 = vld [vmem:[#allocation2 + $0x78] sm:$0xff]
        %v402 = vld [vmem:[%s311] sm:$0xff]
        %v403 = vld [vmem:[%s311 + $0x8] sm:$0xff]
        %v404 = vld [vmem:[%s311 + $0x10] sm:$0xff]
        %v405 = vld [vmem:[%s311 + $0x18] sm:$0xff]
        %v406 = vld [vmem:[%s311 + $0x20] sm:$0xff]
        %v407 = vld [vmem:[%s311 + $0x28] sm:$0xff]
        %v408 = vld [vmem:[%s311 + $0x30] sm:$0xff]
        %v409 = vld [vmem:[%s311 + $0x38] sm:$0xff]
        %v410 = vld [vmem:[%s311 + $0x40] sm:$0xff]
        %v411 = vld [vmem:[%s311 + $0x48] sm:$0xff]
        %v412 = vld [vmem:[%s311 + $0x50] sm:$0xff]
        %v413 = vld [vmem:[%s311 + $0x58] sm:$0xff]
        %v414 = vld [vmem:[%s311 + $0x60] sm:$0xff]
        %v415 = vld [vmem:[%s311 + $0x68] sm:$0xff]
        %v416 = vld [vmem:[%s311 + $0x70] sm:$0xff]
        %v417 = vld [vmem:[%s311 + $0x78] sm:$0xff]
        %v418 = vld [vmem:[%s319] sm:$0xf]
        %v419 = vld [vmem:[%s319 + $0x4] sm:$0xf]
        %v420 = vld [vmem:[%s319 + $0x8] sm:$0xf]
        %v421 = vld [vmem:[%s319 + $0xc] sm:$0xf]
        %v422 = vld [vmem:[%s319 + $0x10] sm:$0xf]
        %v423 = vld [vmem:[%s319 + $0x14] sm:$0xf]
        %v424 = vld [vmem:[%s319 + $0x18] sm:$0xf]
        %v425 = vld [vmem:[%s319 + $0x1c] sm:$0xf]
        %v426 = vld [vmem:[%s319 + $0x20] sm:$0xf]
        %v427 = vld [vmem:[%s319 + $0x24] sm:$0xf]
        %v428 = vld [vmem:[%s319 + $0x28] sm:$0xf]
        %v429 = vld [vmem:[%s319 + $0x2c] sm:$0xf]
        %v430 = vld [vmem:[%s319 + $0x30] sm:$0xf]
        %v431 = vld [vmem:[%s319 + $0x34] sm:$0xf]
        %v432 = vld [vmem:[%s319 + $0x38] sm:$0xf]
        %v433 = vld [vmem:[%s319 + $0x3c] sm:$0xf]
        %v434 = vld [vmem:[%s319 + $0x40] sm:$0xf]
        %v435 = vld [vmem:[%s319 + $0x44] sm:$0xf]
        %v436 = vld [vmem:[%s319 + $0x48] sm:$0xf]
        %v437 = vld [vmem:[%s319 + $0x4c] sm:$0xf]
        %v438 = vld [vmem:[%s319 + $0x50] sm:$0xf]
        %v439 = vld [vmem:[%s319 + $0x54] sm:$0xf]
        %v440 = vld [vmem:[%s319 + $0x58] sm:$0xf]
        %v441 = vld [vmem:[%s319 + $0x5c] sm:$0xf]
        %v442 = vld [vmem:[%s319 + $0x60] sm:$0xf]
        %v443 = vld [vmem:[%s319 + $0x64] sm:$0xf]
        %v444 = vld [vmem:[%s319 + $0x68] sm:$0xf]
        %v445 = vld [vmem:[%s319 + $0x6c] sm:$0xf]
        %v446 = vld [vmem:[%s319 + $0x70] sm:$0xf]
        %v447 = vld [vmem:[%s319 + $0x74] sm:$0xf]
        %v448 = vld [vmem:[%s319 + $0x78] sm:$0xf]
        %v449 = vld [vmem:[%s319 + $0x7c] sm:$0xf]
        %v466 = vunpack.c.l.b16 %v402
        %v467 = vunpack.c.h.b16 %v402
        %v468 = vunpack.c.l.b16 %v403
        %v469 = vunpack.c.h.b16 %v403
        %v470 = vunpack.c.l.b16 %v404
        %v471 = vunpack.c.h.b16 %v404
        %v472 = vunpack.c.l.b16 %v405
        %v473 = vunpack.c.h.b16 %v405
        %v474 = vunpack.c.l.b16 %v406
        %v475 = vunpack.c.h.b16 %v406
        %v476 = vunpack.c.l.b16 %v407
        %v477 = vunpack.c.h.b16 %v407
        %v478 = vunpack.c.l.b16 %v408
        %v479 = vunpack.c.h.b16 %v408
        %v480 = vunpack.c.l.b16 %v409
        %v481 = vunpack.c.h.b16 %v409
        %v482 = vunpack.c.l.b16 %v410
        %v483 = vunpack.c.h.b16 %v410
        %v484 = vunpack.c.l.b16 %v411
        %v485 = vunpack.c.h.b16 %v411
        %v486 = vunpack.c.l.b16 %v412
        %v487 = vunpack.c.h.b16 %v412
        %v488 = vunpack.c.l.b16 %v413
        %v489 = vunpack.c.h.b16 %v413
        %v490 = vunpack.c.l.b16 %v414
        %v491 = vunpack.c.h.b16 %v414
        %v492 = vunpack.c.l.b16 %v415
        %v493 = vunpack.c.h.b16 %v415
        %v494 = vunpack.c.l.b16 %v416
        %v495 = vunpack.c.h.b16 %v416
        %v496 = vunpack.c.l.b16 %v417
        %v497 = vunpack.c.h.b16 %v417
        %v498 = vpack.c.b16 %v468, %v466
        %v499 = vpack.c.b16 %v469, %v467
        %v500 = vpack.c.b16 %v472, %v470
        %v501 = vpack.c.b16 %v473, %v471
        %v502 = vpack.c.b16 %v476, %v474
        %v503 = vpack.c.b16 %v477, %v475
        %v504 = vpack.c.b16 %v480, %v478
        %v505 = vpack.c.b16 %v481, %v479
        %v506 = vpack.c.b16 %v484, %v482
        %v507 = vpack.c.b16 %v485, %v483
        %v508 = vpack.c.b16 %v488, %v486
        %v509 = vpack.c.b16 %v489, %v487
        %v510 = vpack.c.b16 %v492, %v490
        %v511 = vpack.c.b16 %v493, %v491
        %v512 = vpack.c.b16 %v496, %v494
        %v513 = vpack.c.b16 %v497, %v495
        %v562 = vunpack.c.l.b16 %v418
        %v563 = vunpack.c.l.b16 %v419
        %v564 = vunpack.c.l.b16 %v420
        %v565 = vunpack.c.l.b16 %v421
        %v566 = vunpack.c.l.b16 %v422
        %v567 = vunpack.c.l.b16 %v423
        %v568 = vunpack.c.l.b16 %v424
        %v569 = vunpack.c.l.b16 %v425
        %v570 = vunpack.c.l.b16 %v426
        %v571 = vunpack.c.l.b16 %v427
        %v572 = vunpack.c.l.b16 %v428
        %v573 = vunpack.c.l.b16 %v429
        %v574 = vunpack.c.l.b16 %v430
        %v575 = vunpack.c.l.b16 %v431
        %v576 = vunpack.c.l.b16 %v432
        %v577 = vunpack.c.l.b16 %v433
        %v578 = vunpack.c.l.b16 %v434
        %v579 = vunpack.c.l.b16 %v435
        %v580 = vunpack.c.l.b16 %v436
        %v581 = vunpack.c.l.b16 %v437
        %v582 = vunpack.c.l.b16 %v438
        %v583 = vunpack.c.l.b16 %v439
        %v584 = vunpack.c.l.b16 %v440
        %v585 = vunpack.c.l.b16 %v441
        %v586 = vunpack.c.l.b16 %v442
        %v587 = vunpack.c.l.b16 %v443
        %v588 = vunpack.c.l.b16 %v444
        %v589 = vunpack.c.l.b16 %v445
        %v590 = vunpack.c.l.b16 %v446
        %v591 = vunpack.c.l.b16 %v447
        %v592 = vunpack.c.l.b16 %v448
        %v593 = vunpack.c.l.b16 %v449
        %v594 = vpack.c.b16 %v563, %v562
        %v595 = vpack.c.b16 %v565, %v564
        %v596 = vpack.c.b16 %v567, %v566
        %v597 = vpack.c.b16 %v569, %v568
        %v598 = vpack.c.b16 %v571, %v570
        %v599 = vpack.c.b16 %v573, %v572
        %v600 = vpack.c.b16 %v575, %v574
        %v601 = vpack.c.b16 %v577, %v576
        %v602 = vpack.c.b16 %v579, %v578
        %v603 = vpack.c.b16 %v581, %v580
        %v604 = vpack.c.b16 %v583, %v582
        %v605 = vpack.c.b16 %v585, %v584
        %v606 = vpack.c.b16 %v587, %v586
        %v607 = vpack.c.b16 %v589, %v588
        %v608 = vpack.c.b16 %v591, %v590
        %v609 = vpack.c.b16 %v593, %v592
        %626 = vmatprep.subr.bf16.mxu0 0
        %627 = vmatpush1.bf16.msra.mxu0 %v594
        %628 = vmatprep.subr.bf16.mxu0 0
        %629 = vmatpush1.bf16.msra.mxu0 %v595
        %630 = vmatprep.subr.bf16.mxu0 0
        %631 = vmatpush1.bf16.msra.mxu0 %v596
        %632 = vmatprep.subr.bf16.mxu0 0
        %633 = vmatpush1.bf16.msra.mxu0 %v597
        %634 = vmatprep.subr.bf16.mxu0 0
        %635 = vmatpush1.bf16.msra.mxu0 %v598
        %636 = vmatprep.subr.bf16.mxu0 0
        %637 = vmatpush1.bf16.msra.mxu0 %v599
        %638 = vmatprep.subr.bf16.mxu0 0
        %639 = vmatpush1.bf16.msra.mxu0 %v600
        %640 = vmatprep.subr.bf16.mxu0 0
        %641 = vmatpush1.bf16.msra.mxu0 %v601
        %642 = vmatprep.subr.bf16.mxu0 0
        %643 = vmatpush1.bf16.msra.mxu0 %v602
        %644 = vmatprep.subr.bf16.mxu0 0
        %645 = vmatpush1.bf16.msra.mxu0 %v603
        %646 = vmatprep.subr.bf16.mxu0 0
        %647 = vmatpush1.bf16.msra.mxu0 %v604
        %648 = vmatprep.subr.bf16.mxu0 0
        %649 = vmatpush1.bf16.msra.mxu0 %v605
        %650 = vmatprep.subr.bf16.mxu0 0
        %651 = vmatpush1.bf16.msra.mxu0 %v606
        %652 = vmatprep.subr.bf16.mxu0 0
        %653 = vmatpush1.bf16.msra.mxu0 %v607
        %654 = vmatprep.subr.bf16.mxu0 0
        %655 = vmatpush1.bf16.msra.mxu0 %v608
        %656 = vmatprep.subr.bf16.mxu0 0
        %657 = vmatpush1.bf16.msra.mxu0 %v609
        %658 = vmatprep.mubr.bf16.mxu0 %v499
        %659 = vmatmul.mubr.bf16.gmra.mrb[0].mxu0 %v498
        %v660 = vpop.f32.mrb[0].mxu0
        %v661 = vadd.f32 0.0, %v660
        %v662 = vpop.f32.mrb[0].mxu0
        %v663 = vpop.f32.mrb[0].mxu0
        %v664 = vadd.f32 0.0, %v663
        %v665 = vpop.f32.mrb[0].mxu0
        %666 = vmatprep.mubr.bf16.mxu0 %v501
        %667 = vmatmul.mubr.bf16.gmra.mrb[0].mxu0 %v500
        %v668 = vpop.f32.mrb[0].mxu0
        %v669 = vadd.f32 0.0, %v668
        %v670 = vpop.f32.mrb[0].mxu0
        %v671 = vpop.f32.mrb[0].mxu0
        %v672 = vadd.f32 0.0, %v671
        %v673 = vpop.f32.mrb[0].mxu0
        %674 = vmatprep.mubr.bf16.mxu0 %v503
        %675 = vmatmul.mubr.bf16.gmra.mrb[0].mxu0 %v502
        %v676 = vpop.f32.mrb[0].mxu0
        %v677 = vadd.f32 0.0, %v676
        %v678 = vpop.f32.mrb[0].mxu0
        %v679 = vpop.f32.mrb[0].mxu0
        %v680 = vadd.f32 0.0, %v679
        %v681 = vpop.f32.mrb[0].mxu0
        %682 = vmatprep.mubr.bf16.mxu0 %v505
        %683 = vmatmul.mubr.bf16.gmra.mrb[0].mxu0 %v504
        %v684 = vpop.f32.mrb[0].mxu0
        %v685 = vadd.f32 0.0, %v684
        %v686 = vpop.f32.mrb[0].mxu0
        %v687 = vpop.f32.mrb[0].mxu0
        %v688 = vadd.f32 0.0, %v687
        %v689 = vpop.f32.mrb[0].mxu0
        %690 = vmatprep.mubr.bf16.mxu0 %v507
        %691 = vmatmul.mubr.bf16.gmra.mrb[0].mxu0 %v506
        %v692 = vpop.f32.mrb[0].mxu0
        %v693 = vadd.f32 0.0, %v692
        %v694 = vpop.f32.mrb[0].mxu0
        %v695 = vpop.f32.mrb[0].mxu0
        %v696 = vadd.f32 0.0, %v695
        %v697 = vpop.f32.mrb[0].mxu0
        %698 = vmatprep.mubr.bf16.mxu0 %v509
        %699 = vmatmul.mubr.bf16.gmra.mrb[0].mxu0 %v508
        %v700 = vpop.f32.mrb[0].mxu0
        %v701 = vadd.f32 0.0, %v700
        %v702 = vpop.f32.mrb[0].mxu0
        %v703 = vpop.f32.mrb[0].mxu0
        %v704 = vadd.f32 0.0, %v703
        %v705 = vpop.f32.mrb[0].mxu0
        %706 = vmatprep.mubr.bf16.mxu0 %v511
        %707 = vmatmul.mubr.bf16.gmra.mrb[0].mxu0 %v510
        %v708 = vpop.f32.mrb[0].mxu0
        %v709 = vadd.f32 0.0, %v708
        %v710 = vpop.f32.mrb[0].mxu0
        %v711 = vpop.f32.mrb[0].mxu0
        %v712 = vadd.f32 0.0, %v711
        %v713 = vpop.f32.mrb[0].mxu0
        %714 = vmatprep.mubr.bf16.mxu0 %v513
        %715 = vmatmul.mubr.bf16.gmra.mrb[0].mxu0 %v512
        %v716 = vpop.f32.mrb[0].mxu0
        %v717 = vadd.f32 0.0, %v716
        %v718 = vpop.f32.mrb[0].mxu0
        %v719 = vpop.f32.mrb[0].mxu0
        %v720 = vadd.f32 0.0, %v719
        %v721 = vpop.f32.mrb[0].mxu0
        %722 = vdwg.mxu0
        %v723 = vadd.f32 %v386, %v661
        %v724 = vadd.f32 %v387, %v664
        %v725 = vadd.f32 %v388, %v669
        %v726 = vadd.f32 %v389, %v672
        %v727 = vadd.f32 %v390, %v677
        %v728 = vadd.f32 %v391, %v680
        %v729 = vadd.f32 %v392, %v685
        %v730 = vadd.f32 %v393, %v688
        %v731 = vadd.f32 %v394, %v693
        %v732 = vadd.f32 %v395, %v696
        %v733 = vadd.f32 %v396, %v701
        %v734 = vadd.f32 %v397, %v704
        %v735 = vadd.f32 %v398, %v709
        %v736 = vadd.f32 %v399, %v712
        %v737 = vadd.f32 %v400, %v717
        %v738 = vadd.f32 %v401, %v720
        %739 = vst [vmem:[#allocation2] sm:$0xff] %v723
        %740 = vst [vmem:[#allocation2 + $0x8] sm:$0xff] %v724
        %741 = vst [vmem:[#allocation2 + $0x10] sm:$0xff] %v725
        %742 = vst [vmem:[#allocation2 + $0x18] sm:$0xff] %v726
        %743 = vst [vmem:[#allocation2 + $0x20] sm:$0xff] %v727
        %744 = vst [vmem:[#allocation2 + $0x28] sm:$0xff] %v728
        %745 = vst [vmem:[#allocation2 + $0x30] sm:$0xff] %v729
        %746 = vst [vmem:[#allocation2 + $0x38] sm:$0xff] %v730
        %747 = vst [vmem:[#allocation2 + $0x40] sm:$0xff] %v731
        %748 = vst [vmem:[#allocation2 + $0x48] sm:$0xff] %v732
        %749 = vst [vmem:[#allocation2 + $0x50] sm:$0xff] %v733
        %750 = vst [vmem:[#allocation2 + $0x58] sm:$0xff] %v734
        %751 = vst [vmem:[#allocation2 + $0x60] sm:$0xff] %v735
        %752 = vst [vmem:[#allocation2 + $0x68] sm:$0xff] %v736
        %753 = vst [vmem:[#allocation2 + $0x70] sm:$0xff] %v737
        %754 = vst [vmem:[#allocation2 + $0x78] sm:$0xff] %v738
        %p755 = scmp.eq.s32.totalorder %s25, 2
        // Predicated region
        $region83: #{_lambda_.9} parent=65 // pred_check
          %p756 = pneg %p755
        $region84: #{_lambda_.9} parent=65 // pred_check_branch
          %758 = sbr.rel (%p756) target = $region86
        $region85: #{_lambda_.9} parent=65 // pred_region
          %v759 = vld [vmem:[#allocation2] sm:$0xff]
          %v760 = vld [vmem:[#allocation2 + $0x8] sm:$0xff]
          %v761 = vld [vmem:[#allocation2 + $0x10] sm:$0xff]
          %v762 = vld [vmem:[#allocation2 + $0x18] sm:$0xff]
          %v763 = vld [vmem:[#allocation2 + $0x20] sm:$0xff]
          %v764 = vld [vmem:[#allocation2 + $0x28] sm:$0xff]
          %v765 = vld [vmem:[#allocation2 + $0x30] sm:$0xff]
          %v766 = vld [vmem:[#allocation2 + $0x38] sm:$0xff]
          %v767 = vld [vmem:[#allocation2 + $0x40] sm:$0xff]
          %v768 = vld [vmem:[#allocation2 + $0x48] sm:$0xff]
          %v769 = vld [vmem:[#allocation2 + $0x50] sm:$0xff]
          %v770 = vld [vmem:[#allocation2 + $0x58] sm:$0xff]
          %v771 = vld [vmem:[#allocation2 + $0x60] sm:$0xff]
          %v772 = vld [vmem:[#allocation2 + $0x68] sm:$0xff]
          %v773 = vld [vmem:[#allocation2 + $0x70] sm:$0xff]
          %v774 = vld [vmem:[#allocation2 + $0x78] sm:$0xff]
          %v775 = vld [vmem:[#allocation6] sm:$0x1]
          %v777 = vlaneseq
          %v778 = vshrl.u32 %v777, 7
          %v779 = vsub.s32 0, %v778
          %v780 = vrot.slane %v775, %v779
          %v782 = vadd.f32 %v759, %v780
          %v783 = vadd.f32 %v760, %v780
          %v784 = vadd.f32 %v761, %v780
          %v785 = vadd.f32 %v762, %v780
          %v786 = vadd.f32 %v763, %v780
          %v787 = vadd.f32 %v764, %v780
          %v788 = vadd.f32 %v765, %v780
          %v789 = vadd.f32 %v766, %v780
          %v790 = vadd.f32 %v767, %v780
          %v791 = vadd.f32 %v768, %v780
          %v792 = vadd.f32 %v769, %v780
          %v793 = vadd.f32 %v770, %v780
          %v794 = vadd.f32 %v771, %v780
          %v795 = vadd.f32 %v772, %v780
          %v796 = vadd.f32 %v773, %v780
          %v797 = vadd.f32 %v774, %v780
          %v798 = vmax.f32 %v782, 0.0
          %v799 = vmax.f32 %v783, 0.0
          %v800 = vmax.f32 %v784, 0.0
          %v801 = vmax.f32 %v785, 0.0
          %v802 = vmax.f32 %v786, 0.0
          %v803 = vmax.f32 %v787, 0.0
          %v804 = vmax.f32 %v788, 0.0
          %v805 = vmax.f32 %v789, 0.0
          %v806 = vmax.f32 %v790, 0.0
          %v807 = vmax.f32 %v791, 0.0
          %v808 = vmax.f32 %v792, 0.0
          %v809 = vmax.f32 %v793, 0.0
          %v810 = vmax.f32 %v794, 0.0
          %v811 = vmax.f32 %v795, 0.0
          %v812 = vmax.f32 %v796, 0.0
          %v813 = vmax.f32 %v797, 0.0
          %v814 = vpack.c.bf16 %v799, %v798
          %v815 = vpack.c.bf16 %v801, %v800
          %v816 = vpack.c.bf16 %v803, %v802
          %v817 = vpack.c.bf16 %v805, %v804
          %v818 = vpack.c.bf16 %v807, %v806
          %v819 = vpack.c.bf16 %v809, %v808
          %v820 = vpack.c.bf16 %v811, %v810
          %v821 = vpack.c.bf16 %v813, %v812
          %v830 = vunpack.c.l.b16 %v814
          %v831 = vunpack.c.h.b16 %v814
          %v832 = vunpack.c.l.b16 %v815
          %v833 = vunpack.c.h.b16 %v815
          %v834 = vunpack.c.l.b16 %v816
          %v835 = vunpack.c.h.b16 %v816
          %v836 = vunpack.c.l.b16 %v817
          %v837 = vunpack.c.h.b16 %v817
          %v838 = vunpack.c.l.b16 %v818
          %v839 = vunpack.c.h.b16 %v818
          %v840 = vunpack.c.l.b16 %v819
          %v841 = vunpack.c.h.b16 %v819
          %v842 = vunpack.c.l.b16 %v820
          %v843 = vunpack.c.h.b16 %v820
          %v844 = vunpack.c.l.b16 %v821
          %v845 = vunpack.c.h.b16 %v821
          %v846 = vpack.c.b16 %v830, %v830
          %v847 = vpack.c.b16 %v831, %v831
          %v848 = vpack.c.b16 %v832, %v832
          %v849 = vpack.c.b16 %v833, %v833
          %v850 = vpack.c.b16 %v834, %v834
          %v851 = vpack.c.b16 %v835, %v835
          %v852 = vpack.c.b16 %v836, %v836
          %v853 = vpack.c.b16 %v837, %v837
          %v854 = vpack.c.b16 %v838, %v838
          %v855 = vpack.c.b16 %v839, %v839
          %v856 = vpack.c.b16 %v840, %v840
          %v857 = vpack.c.b16 %v841, %v841
          %v858 = vpack.c.b16 %v842, %v842
          %v859 = vpack.c.b16 %v843, %v843
          %v860 = vpack.c.b16 %v844, %v844
          %v861 = vpack.c.b16 %v845, %v845
          %878 = vst [vmem:[%s363] sm:$0xf] %v846
          %879 = vst [vmem:[%s363 + $0x4] sm:$0xf] %v847
          %880 = vst [vmem:[%s363 + $0x8] sm:$0xf] %v848
          %881 = vst [vmem:[%s363 + $0xc] sm:$0xf] %v849
          %882 = vst [vmem:[%s363 + $0x10] sm:$0xf] %v850
          %883 = vst [vmem:[%s363 + $0x14] sm:$0xf] %v851
          %884 = vst [vmem:[%s363 + $0x18] sm:$0xf] %v852
          %885 = vst [vmem:[%s363 + $0x1c] sm:$0xf] %v853
          %886 = vst [vmem:[%s363 + $0x20] sm:$0xf] %v854
          %887 = vst [vmem:[%s363 + $0x24] sm:$0xf] %v855
          %888 = vst [vmem:[%s363 + $0x28] sm:$0xf] %v856
          %889 = vst [vmem:[%s363 + $0x2c] sm:$0xf] %v857
          %890 = vst [vmem:[%s363 + $0x30] sm:$0xf] %v858
          %891 = vst [vmem:[%s363 + $0x34] sm:$0xf] %v859
          %892 = vst [vmem:[%s363 + $0x38] sm:$0xf] %v860
          %893 = vst [vmem:[%s363 + $0x3c] sm:$0xf] %v861
        $region86: #{_lambda_.9} parent=65 // pred_fallthru
          _
        %s894 = smul.u32 16, %s23
        %p895 = scmp.lt.s32.totalorder %s894, 15
        %s896 = scalar_select %p895, %s894, 15
        %p897 = scmp.lt.s32.totalorder %s24, 0
        %s898 = scalar_select %p897, %s24, 0
        %s899 = sadd.s32 %s898, %s896
        %s900 = smul.addr %s899, 4
        %s901 = scalar_lea.vmem %s3, %s900
        // Predicated region
        $region87: #{_lambda_.9} parent=65 // pred_check
          %p902 = pneg %p139
        $region88: #{_lambda_.9} parent=65 // pred_check_branch
          %904 = sbr.rel (%p902) target = $region90
        $region89: #{_lambda_.9} parent=65 // pred_region
          %s905 = smul.u32 16, %s23
        $region90: #{_lambda_.9} parent=65 // pred_fallthru
          _
        // Predicated region
        $region91: #{_lambda_.9} parent=65 // pred_check
          %p906 = pneg %p139
        $region92: #{_lambda_.9} parent=65 // pred_check_branch
          %908 = sbr.rel (%p906) target = $region94
        $region93: #{_lambda_.9} parent=65 // pred_region
          %s909 = smul.u32 16, %s23
          %p910 = scmp.lt.s32.totalorder %s909, 15
          %s911 = scalar_select %p910, %s909, 15
          %p912 = scmp.lt.s32.totalorder %s24, 0
          %s913 = scalar_select %p912, %s24, 0
          %s914 = sadd.s32 %s913, %s911
          %s915 = smul.addr %s914, 4
          %s916 = scalar_lea.vmem %s3, %s915
        $region94: #{_lambda_.9} parent=65 // pred_fallthru
          _
      $region66: #{_lambda_.9} parent=5 // pred_fallthru
        _
      %p917 = scmp.le.s32.totalorder 2, %s13
      // Predicated region
      $region95: #{_lambda_.9} parent=5 // pred_check
        %p918 = pneg %p917
      $region96: #{_lambda_.9} parent=5 // pred_check_branch
        %920 = sbr.rel (%p918) target = $region98
      $region97: #{_lambda_.9} parent=5 // pred_region
        %s921 = ssub.s32 %s13, 2
      $region98: #{_lambda_.9} parent=5 // pred_fallthru
        _
    $region6: #{_lambda_.9} parent=1 // loop_footer
      %s17 = sadd.s32 1, %s13
    $region7: #{_lambda_.9} parent=1 // loop_footer_branch
      %12 = sbr.rel target = $region3
    $region8: #{_lambda_.9} parent=1 // loop_exit
      _
    %922 = vsyncpa [#allocation5], 1
    %s923 = scalar_lea.sflag [#allocation5], 1
    %924 = vsyncpa %s923, 1
    %925 = vsyncpa [#allocation7], 1

// kernel: _lambda_.10
$region0: #{_lambda_.10}
  #allocation0 [shape = 'u32[]', space=smem, size = 0x4, offset = 0x4, fixed_abs, tag = 'smem constant byte address 0x4 - core index']
  #allocation1 [shape = 'u32[144,128]{1,0:T(1,128)}', space=vmem, size = 0x12000, scoped, tag = 'internal scratch']
  #allocation2 [shape = 'f32[32,128]{1,0:T(8,128)}', space=vmem, size = 0x4000, scoped, tag = 'scratch operand']
  %s0 = inlined_call_operand.vmem [shape: bf16[32,1152], index: 0, kind: input, shape index: {}]
  %s1 = inlined_call_operand.vmem [shape: bf16[1152,128], index: 1, kind: input, shape index: {}]
  %s2 = inlined_call_operand.vmem [shape: f32[1,128], index: 2, kind: input, shape index: {}]
  %s3 = inlined_call_operand.vmem [shape: bf16[32,128], index: 3, kind: output, shape index: {}]
  %s4 = sld [smem:[#allocation0]]
  $region94: #{_lambda_.10} parent=0
    _
  %s6 = ssub.s32 1, %s4
  %s7 = scalar_select 0, %s6, %s4
  $region1: #{_lambda_.10} parent=0
    #allocation3 [shape = 'u8[16384]{0}', space=vmem, size = 0x4000, scoped, tag = 'input window, operand 0']
    loop: start=0, step=1, limit=11
    $region2: #{_lambda_.10} parent=1 // loop_pre_header
      _
    $region3: #{_lambda_.10} parent=1 // loop_header
      %s9 = sphi 0, %s13
      %p10 = scmp.ge.s32.totalorder %s9, 11
      %s16 = sphi 0, %s35
      %s17 = sphi 0, %s31
      %s18 = sphi 0, %s27
      %s19 = sphi 0, %s16
      %s20 = sphi 0, %s17
      %s21 = sphi 0, %s18
      %s22 = sphi 0, %s19
      %s23 = sphi 0, %s20
      %s24 = sphi 0, %s21
      %s40 = sphi 0, %s42
      %s43 = sphi 0, %s40
      %s44 = sphi 0, %s43
      %s60 = sphi 0, %s44
      %s68 = sphi 0, %s70
      %s71 = sphi 0, %s68
      %s72 = sphi 0, %s71
      %s88 = sphi 0, %s72
      %s94 = sphi 0, %s96
      %s97 = sphi 0, %s94
      %s98 = sphi 0, %s97
      %s114 = sphi 0, %s98
      %s122 = sphi 0, %s124
      %s125 = sphi 0, %s122
      %s126 = sphi 0, %s125
      %s142 = sphi 0, %s126
    $region4: #{_lambda_.10} parent=1 // loop_header_branch
      %12 = sbr.rel (%p10) target = $region8
    $region5: #{_lambda_.10} parent=1 // loop_body
      %s14 = ssub.s32 %s9, 1
      %s15 = ssub.s32 %s9, 2
      %s25 = sadd.s32 1, %s18
      %p26 = scmp.ge.s32.totalorder %s25, 9
      %s27 = scalar_select %p26, 0, %s25
      %s28 = sadd.s32 1, %s17
      %s29 = scalar_select %p26, %s28, %s17
      %p30 = scmp.ge.s32.totalorder %s29, 1
      %s31 = scalar_select %p30, 0, %s29
      %s32 = sadd.s32 1, %s16
      %s33 = scalar_select %p30, %s32, %s16
      %p34 = scmp.ge.s32.totalorder %s33, 1
      %s35 = scalar_select %p34, 0, %s33
      %s36 = ssub.s32 %s16, %s35
      %s37 = ssub.s32 %s18, %s27
      %s38 = sor.u32 %s36, %s37
      %p39 = scmp.eq.s32.totalorder %s38, 0
      %s41 = sadd.s32 %s40, 1
      %s42 = scalar_select %p39, %s40, %s41
      %p45 = pneg %p39
      %p46 = scmp.eq.s32.totalorder %s9, 8
      %p47 = por %p45, %p46
      %p48 = scmp.ne.s32.totalorder %s40, %s43
      %p49 = scmp.eq.s32.totalorder %s9, 0
      %p50 = por %p48, %p49
      %p51 = scmp.ne.s32.totalorder %s40, %s43
      %p52 = scmp.eq.s32.totalorder %s14, 8
      %p53 = por %p51, %p52
      %p54 = scmp.ne.s32.totalorder %s43, %s44
      %p55 = scmp.eq.s32.totalorder %s14, 0
      %p56 = por %p54, %p55
      %p57 = scmp.ne.s32.totalorder %s43, %s44
      %p58 = scmp.eq.s32.totalorder %s15, 8
      %p59 = por %p57, %p58
      %p61 = scmp.ne.s32.totalorder %s44, %s60
      %p62 = scmp.eq.s32.totalorder %s15, 0
      %p63 = por %p61, %p62
      %s64 = ssub.s32 %s18, %s27
      %s65 = ssub.s32 %s17, %s31
      %s66 = sor.u32 %s64, %s65
      %p67 = scmp.eq.s32.totalorder %s66, 0
      %s69 = sadd.s32 %s68, 1
      %s70 = scalar_select %p67, %s68, %s69
      %p73 = pneg %p67
      %p74 = scmp.eq.s32.totalorder %s9, 8
      %p75 = por %p73, %p74
      %p76 = scmp.ne.s32.totalorder %s68, %s71
      %p77 = scmp.eq.s32.totalorder %s9, 0
      %p78 = por %p76, %p77
      %p79 = scmp.ne.s32.totalorder %s68, %s71
      %p80 = scmp.eq.s32.totalorder %s14, 8
      %p81 = por %p79, %p80
      %p82 = scmp.ne.s32.totalorder %s71, %s72
      %p83 = scmp.eq.s32.totalorder %s14, 0
      %p84 = por %p82, %p83
      %p85 = scmp.ne.s32.totalorder %s71, %s72
      %p86 = scmp.eq.s32.totalorder %s15, 8
      %p87 = por %p85, %p86
      %p89 = scmp.ne.s32.totalorder %s72, %s88
      %p90 = scmp.eq.s32.totalorder %s15, 0
      %p91 = por %p89, %p90
      %s92 = ssub.s32 %s17, %s31
      %p93 = scmp.eq.s32.totalorder %s92, 0
      %s95 = sadd.s32 %s94, 1
      %s96 = scalar_select %p93, %s94, %s95
      %p99 = pneg %p93
      %p100 = scmp.eq.s32.totalorder %s9, 8
      %p101 = por %p99, %p100
      %p102 = scmp.ne.s32.totalorder %s94, %s97
      %p103 = scmp.eq.s32.totalorder %s9, 0
      %p104 = por %p102, %p103
      %p105 = scmp.ne.s32.totalorder %s94, %s97
      %p106 = scmp.eq.s32.totalorder %s14, 8
      %p107 = por %p105, %p106
      %p108 = scmp.ne.s32.totalorder %s97, %s98
      %p109 = scmp.eq.s32.totalorder %s14, 0
      %p110 = por %p108, %p109
      %p111 = scmp.ne.s32.totalorder %s97, %s98
      %p112 = scmp.eq.s32.totalorder %s15, 8
      %p113 = por %p111, %p112
      %p115 = scmp.ne.s32.totalorder %s98, %s114
      %p116 = scmp.eq.s32.totalorder %s15, 0
      %p117 = por %p115, %p116
      %s118 = ssub.s32 %s16, %s35
      %s119 = ssub.s32 %s17, %s31
      %s120 = sor.u32 %s118, %s119
      %p121 = scmp.eq.s32.totalorder %s120, 0
      %s123 = sadd.s32 %s122, 1
      %s124 = scalar_select %p121, %s122, %s123
      %p127 = pneg %p121
      %p128 = scmp.eq.s32.totalorder %s9, 8
      %p129 = por %p127, %p128
      %p130 = scmp.ne.s32.totalorder %s122, %s125
      %p131 = scmp.eq.s32.totalorder %s9, 0
      %p132 = por %p130, %p131
      %p133 = scmp.ne.s32.totalorder %s122, %s125
      %p134 = scmp.eq.s32.totalorder %s14, 8
      %p135 = por %p133, %p134
      %p136 = scmp.ne.s32.totalorder %s125, %s126
      %p137 = scmp.eq.s32.totalorder %s14, 0
      %p138 = por %p136, %p137
      %p139 = scmp.ne.s32.totalorder %s125, %s126
      %p140 = scmp.eq.s32.totalorder %s15, 8
      %p141 = por %p139, %p140
      %p143 = scmp.ne.s32.totalorder %s126, %s142
      %p144 = scmp.eq.s32.totalorder %s15, 0
      %p145 = por %p143, %p144
      %p146 = scmp.le.s32.totalorder 1, %s9
      %p147 = scmp.lt.s32.totalorder %s9, 10
      %p148 = pnand %p146, %p147
      %p149 = pneg %p148
      // Predicated region
      $region9: #{_lambda_.10} parent=5 // pred_check
        _
      $region10: #{_lambda_.10} parent=5 // pred_check_branch
        %151 = sbr.rel (%p148) target = $region12
      $region11: #{_lambda_.10} parent=5 // pred_region
        %s152 = ssub.s32 %s9, 1
        // Predicated region
        $region13: #{_lambda_.10} parent=11 // pred_check
          %p153 = pneg %p110
        $region14: #{_lambda_.10} parent=11 // pred_check_branch
          %155 = sbr.rel (%p153) target = $region16
        $region15: #{_lambda_.10} parent=11 // pred_region
          %p156 = scmp.lt.s32.totalorder %s20, 0
          %s157 = scalar_select %p156, %s20, 0
          %s158 = scalar_lea.vmem %s2, %s157
        $region16: #{_lambda_.10} parent=11 // pred_fallthru
          _
      $region12: #{_lambda_.10} parent=5 // pred_fallthru
        _
      %p159 = scmp.lt.s32.totalorder %s9, 9
      // Predicated region
      $region17: #{_lambda_.10} parent=5 // pred_check
        %p160 = pneg %p159
      $region18: #{_lambda_.10} parent=5 // pred_check_branch
        %162 = sbr.rel (%p160) target = $region20
      $region19: #{_lambda_.10} parent=5 // pred_region
        // Predicated region
        $region21: #{_lambda_.10} parent=19 // pred_check
          %p163 = pneg %p50
        $region22: #{_lambda_.10} parent=19 // pred_check_branch
          %165 = sbr.rel (%p163) target = $region24
        $region23: #{_lambda_.10} parent=19 // pred_region
          %s166 = sand.u32 %s40, 1
          %s167 = sand.u32 %s40, 1
          %s168 = smul.addr %s167, 16
          %s169 = scalar_lea.vmem [#allocation3], %s168
          %s170 = smul.u32 4, %s16
          %s171 = smul.addr %s170, 9
          %s172 = sadd.s32 %s18, %s171
          %s173 = smul.addr %s172, 4
          %s174 = scalar_lea.vmem %s0, %s173
          // Predicated region
          $region25: #{_lambda_.10} parent=23 // pred_check
            _
          $region26: #{_lambda_.10} parent=23 // pred_check_branch
            %176 = sbr.rel (0) target = $region28
          $region27: #{_lambda_.10} parent=23 // pred_region
            // Predicated region
            $region29: #{_lambda_.10} parent=27 // pred_check
              _
            $region30: #{_lambda_.10} parent=27 // pred_check_branch
              %178 = sbr.rel target = $region32
            $region31: #{_lambda_.10} parent=27 // pred_region
              // Predicated region
              $region44: #{_lambda_.10} parent=31 // pred_check
                _
              $region45: #{_lambda_.10} parent=31 // pred_check_branch
                %199 = sbr.rel (0) target = $region47
              $region46: #{_lambda_.10} parent=31 // pred_region
                loop: start=0, step=1, limit=1
                $region48: #{_lambda_.10} parent=46 // loop_pre_header
                  _
                $region49: #{_lambda_.10} parent=46 // loop_header
                  %s201 = sphi 0, %s205
                  %p202 = scmp.ge.s32.totalorder %s201, 1
                  %s206 = sphi %s174, %s174
                  %s207 = sphi %s169, %s169
                $region50: #{_lambda_.10} parent=46 // loop_header_branch
                  %204 = sbr.rel (%p202) target = $region54
                $region51: #{_lambda_.10} parent=46 // loop_body
                  _
                $region52: #{_lambda_.10} parent=46 // loop_footer
                  %s205 = sadd.s32 1, %s201
                $region53: #{_lambda_.10} parent=46 // loop_footer_branch
                  %200 = sbr.rel target = $region49
                $region54: #{_lambda_.10} parent=46 // loop_exit
                  _
                loop: start=0, step=1, limit=1
                $region55: #{_lambda_.10} parent=46 // loop_pre_header
                  _
                $region56: #{_lambda_.10} parent=46 // loop_header
                  %s210 = sphi 0, %s214
                  %p211 = scmp.ge.s32.totalorder %s210, 1
                  %s215 = sphi %s174, %s174
                  %s216 = sphi %s169, %s169
                $region57: #{_lambda_.10} parent=46 // loop_header_branch
                  %213 = sbr.rel (%p211) target = $region61
                $region58: #{_lambda_.10} parent=46 // loop_body
                  %v217 = vld [vmem:[%s215] sm:$0xf]
                  %218 = vst [vmem:[%s216] sm:$0xf] %v217
                  %v219 = vld [vmem:[%s215 + $0x24] sm:$0xf]
                  %220 = vst [vmem:[%s216 + $0x4] sm:$0xf] %v219
                  %v221 = vld [vmem:[%s215 + $0x48] sm:$0xf]
                  %222 = vst [vmem:[%s216 + $0x8] sm:$0xf] %v221
                  %v223 = vld [vmem:[%s215 + $0x6c] sm:$0xf]
                  %224 = vst [vmem:[%s216 + $0xc] sm:$0xf] %v223
                $region59: #{_lambda_.10} parent=46 // loop_footer
                  %s214 = sadd.s32 1, %s210
                $region60: #{_lambda_.10} parent=46 // loop_footer_branch
                  %209 = sbr.rel target = $region56
                $region61: #{_lambda_.10} parent=46 // loop_exit
                  _
              $region47: #{_lambda_.10} parent=31 // pred_fallthru
                _
            $region32: #{_lambda_.10} parent=27 // pred_fallthru
              _
            // Predicated region
            $region33: #{_lambda_.10} parent=27 // pred_check
              _
            $region34: #{_lambda_.10} parent=27 // pred_check_branch
              %180 = sbr.rel (0) target = $region36
            $region35: #{_lambda_.10} parent=27 // pred_region
              loop: start=0, step=1, limit=1
              $region37: #{_lambda_.10} parent=35 // loop_pre_header
                _
              $region38: #{_lambda_.10} parent=35 // loop_header
                %s183 = sphi 0, %s187
                %p184 = scmp.ge.s32.totalorder %s183, 1
                %s188 = sphi %s174, %s174
                %s189 = sphi %s169, %s169
              $region39: #{_lambda_.10} parent=35 // loop_header_branch
                %186 = sbr.rel (%p184) target = $region43
              $region40: #{_lambda_.10} parent=35 // loop_body
                %v190 = vld [vmem:[%s188] sm:$0xf]
                %191 = vst [vmem:[%s189] sm:$0xf] %v190
                %v192 = vld [vmem:[%s188 + $0x24] sm:$0xf]
                %193 = vst [vmem:[%s189 + $0x4] sm:$0xf] %v192
                %v194 = vld [vmem:[%s188 + $0x48] sm:$0xf]
                %195 = vst [vmem:[%s189 + $0x8] sm:$0xf] %v194
                %v196 = vld [vmem:[%s188 + $0x6c] sm:$0xf]
                %197 = vst [vmem:[%s189 + $0xc] sm:$0xf] %v196
              $region41: #{_lambda_.10} parent=35 // loop_footer
                %s187 = sadd.s32 1, %s183
              $region42: #{_lambda_.10} parent=35 // loop_footer_branch
                %182 = sbr.rel target = $region38
              $region43: #{_lambda_.10} parent=35 // loop_exit
                _
            $region36: #{_lambda_.10} parent=27 // pred_fallthru
              _
          $region28: #{_lambda_.10} parent=23 // pred_fallthru
            _
          %225 = vnop
        $region24: #{_lambda_.10} parent=19 // pred_fallthru
          _
        // Predicated region
        $region62: #{_lambda_.10} parent=19 // pred_check
          %p226 = pneg %p78
        $region63: #{_lambda_.10} parent=19 // pred_check_branch
          %228 = sbr.rel (%p226) target = $region65
        $region64: #{_lambda_.10} parent=19 // pred_region
          %s229 = smul.u32 16, %s18
          %p230 = scmp.lt.s32.totalorder %s229, 143
          %s231 = scalar_select %p230, %s229, 143
          %p232 = scmp.lt.s32.totalorder %s17, 0
          %s233 = scalar_select %p232, %s17, 0
          %s234 = sadd.s32 %s233, %s231
          %s235 = smul.addr %s234, 4
          %s236 = scalar_lea.vmem %s1, %s235
          %s237 = smul.u32 16, %s18
        $region65: #{_lambda_.10} parent=19 // pred_fallthru
          _
      $region20: #{_lambda_.10} parent=5 // pred_fallthru
        _
      %p238 = scmp.le.s32.totalorder 1, %s9
      %p239 = scmp.lt.s32.totalorder %s9, 10
      %p240 = pnand %p238, %p239
      %p241 = pneg %p240
      // Predicated region
      $region66: #{_lambda_.10} parent=5 // pred_check
        _
      $region67: #{_lambda_.10} parent=5 // pred_check_branch
        %243 = sbr.rel (%p240) target = $region69
      $region68: #{_lambda_.10} parent=5 // pred_region
        %s244 = ssub.s32 %s9, 1
        %s245 = sand.u32 %s43, 1
        %s246 = sand.u32 %s43, 1
        %s247 = smul.addr %s246, 16
        %s248 = scalar_lea.vmem [#allocation3], %s247
        // Predicated region
        $region70: #{_lambda_.10} parent=68 // pred_check
          %p249 = pneg %p56
        $region71: #{_lambda_.10} parent=68 // pred_check_branch
          %251 = sbr.rel (%p249) target = $region73
        $region72: #{_lambda_.10} parent=68 // pred_region
          _
        $region73: #{_lambda_.10} parent=68 // pred_fallthru
          _
        %s252 = sand.u32 %s43, 1
        %s253 = sand.u32 %s43, 1
        %s254 = smul.addr %s253, 16
        %s255 = scalar_lea.vmem [#allocation3], %s254
        %p256 = pneg %p56
        %p257 = pneg %p53
        %s258 = smul.u32 16, %s21
        %p259 = scmp.lt.s32.totalorder %s258, 143
        %s260 = scalar_select %p259, %s258, 143
        %p261 = scmp.lt.s32.totalorder %s20, 0
        %s262 = scalar_select %p261, %s20, 0
        %s263 = sadd.s32 %s262, %s260
        %s264 = smul.addr %s263, 4
        %s265 = scalar_lea.vmem %s1, %s264
        %p266 = pneg %p84
        %p267 = pneg %p81
        %p268 = scmp.lt.s32.totalorder %s20, 0
        %s269 = scalar_select %p268, %s20, 0
        %s270 = scalar_lea.vmem %s2, %s269
        %p271 = pneg %p110
        %p272 = pneg %p107
        %p273 = pneg %p138
        %p274 = pneg %p135
        %s275 = smul.u32 4, %s19
        %p276 = scmp.lt.s32.totalorder %s275, 3
        %s277 = scalar_select %p276, %s275, 3
        %p278 = scmp.lt.s32.totalorder %s20, 0
        %s279 = scalar_select %p278, %s20, 0
        %s280 = sadd.s32 %s279, %s277
        %s281 = smul.addr %s280, 4
        %s282 = scalar_lea.vmem %s3, %s281
        %s283 = smul.u32 4, %s19
        %s284 = smul.u32 16, %s21
        %p285 = scmp.lt.s32.totalorder %s284, 143
        %s286 = scalar_select %p285, %s284, 143
        %p287 = scmp.lt.s32.totalorder %s20, 0
        %s288 = scalar_select %p287, %s20, 0
        %s289 = sadd.s32 %s288, %s286
        %s290 = smul.addr %s289, 4
        %s291 = scalar_lea.vmem %s1, %s290
        %s292 = smul.u32 16, %s21
        %p293 = scmp.lt.s32.totalorder %s20, 0
        %s294 = scalar_select %p293, %s20, 0
        %s295 = scalar_lea.vmem %s2, %s294
        %s296 = smul.u32 4, %s19
        %p297 = scmp.lt.s32.totalorder %s296, 3
        %s298 = scalar_select %p297, %s296, 3
        %p299 = scmp.lt.s32.totalorder %s20, 0
        %s300 = scalar_select %p299, %s20, 0
        %s301 = sadd.s32 %s300, %s298
        %s302 = smul.addr %s301, 4
        %s303 = scalar_lea.vmem %s3, %s302
        %s304 = smul.u32 4, %s19
        %p306 = scmp.eq.s32.totalorder %s21, 0
        // Predicated region
        $region74: #{_lambda_.10} parent=68 // pred_check
          %p307 = pneg %p306
        $region75: #{_lambda_.10} parent=68 // pred_check_branch
          %309 = sbr.rel (%p307) target = $region77
        $region76: #{_lambda_.10} parent=68 // pred_region
          %310 = vst [vmem:[#allocation2] sm:$0xff] 0.0
          %311 = vst [vmem:[#allocation2 + $0x8] sm:$0xff] 0.0
          %312 = vst [vmem:[#allocation2 + $0x10] sm:$0xff] 0.0
          %313 = vst [vmem:[#allocation2 + $0x18] sm:$0xff] 0.0
        $region77: #{_lambda_.10} parent=68 // pred_fallthru
          _
        %v314 = vld [vmem:[#allocation2] sm:$0xff]
        %v315 = vld [vmem:[#allocation2 + $0x8] sm:$0xff]
        %v316 = vld [vmem:[#allocation2 + $0x10] sm:$0xff]
        %v317 = vld [vmem:[#allocation2 + $0x18] sm:$0xff]
        %v318 = vld [vmem:[%s248] sm:$0xf]
        %v319 = vld [vmem:[%s248 + $0x4] sm:$0xf]
        %v320 = vld [vmem:[%s248 + $0x8] sm:$0xf]
        %v321 = vld [vmem:[%s248 + $0xc] sm:$0xf]
        %v322 = vld [vmem:[%s291] sm:$0xf]
        %v323 = vld [vmem:[%s291 + $0x4] sm:$0xf]
        %v324 = vld [vmem:[%s291 + $0x8] sm:$0xf]
        %v325 = vld [vmem:[%s291 + $0xc] sm:$0xf]
        %v326 = vld [vmem:[%s291 + $0x10] sm:$0xf]
        %v327 = vld [vmem:[%s291 + $0x14] sm:$0xf]
        %v328 = vld [vmem:[%s291 + $0x18] sm:$0xf]
        %v329 = vld [vmem:[%s291 + $0x1c] sm:$0xf]
        %v330 = vld [vmem:[%s291 + $0x20] sm:$0xf]
        %v331 = vld [vmem:[%s291 + $0x24] sm:$0xf]
        %v332 = vld [vmem:[%s291 + $0x28] sm:$0xf]
        %v333 = vld [vmem:[%s291 + $0x2c] sm:$0xf]
        %v334 = vld [vmem:[%s291 + $0x30] sm:$0xf]
        %v335 = vld [vmem:[%s291 + $0x34] sm:$0xf]
        %v336 = vld [vmem:[%s291 + $0x38] sm:$0xf]
        %v337 = vld [vmem:[%s291 + $0x3c] sm:$0xf]
        %v342 = vunpack.c.l.b16 %v318
        %v343 = vunpack.c.l.b16 %v319
        %v344 = vunpack.c.l.b16 %v320
        %v345 = vunpack.c.l.b16 %v321
        %v346 = vpack.c.b16 %v343, %v342
        %v347 = vpack.c.b16 %v345, %v344
        %v366 = vunpack.c.l.b16 %v322
        %v367 = vunpack.c.l.b16 %v323
        %v368 = vunpack.c.l.b16 %v324
        %v369 = vunpack.c.l.b16 %v325
        %v370 = vunpack.c.l.b16 %v326
        %v371 = vunpack.c.l.b16 %v327
        %v372 = vunpack.c.l.b16 %v328
        %v373 = vunpack.c.l.b16 %v329
        %v374 = vunpack.c.l.b16 %v330
        %v375 = vunpack.c.l.b16 %v331
        %v376 = vunpack.c.l.b16 %v332
        %v377 = vunpack.c.l.b16 %v333
        %v378 = vunpack.c.l.b16 %v334
        %v379 = vunpack.c.l.b16 %v335
        %v380 = vunpack.c.l.b16 %v336
        %v381 = vunpack.c.l.b16 %v337
        %v382 = vpack.c.b16 %v367, %v366
        %v383 = vpack.c.b16 %v369, %v368
        %v384 = vpack.c.b16 %v371, %v370
        %v385 = vpack.c.b16 %v373, %v372
        %v386 = vpack.c.b16 %v375, %v374
        %v387 = vpack.c.b16 %v377, %v376
        %v388 = vpack.c.b16 %v379, %v378
        %v389 = vpack.c.b16 %v381, %v380
        %398 = vmatprep.subr.bf16.mxu0 0
        %399 = vmatpush1.bf16.msra.mxu0 %v382
        %400 = vmatprep.subr.bf16.mxu0 0
        %401 = vmatpush1.bf16.msra.mxu0 %v383
        %402 = vmatprep.subr.bf16.mxu0 0
        %403 = vmatpush1.bf16.msra.mxu0 %v384
        %404 = vmatprep.subr.bf16.mxu0 0
        %405 = vmatpush1.bf16.msra.mxu0 %v385
        %406 = vmatprep.subr.bf16.mxu0 0
        %407 = vmatpush1.bf16.msra.mxu0 %v386
        %408 = vmatprep.subr.bf16.mxu0 0
        %409 = vmatpush1.bf16.msra.mxu0 %v387
        %410 = vmatprep.subr.bf16.mxu0 0
        %411 = vmatpush1.bf16.msra.mxu0 %v388
        %412 = vmatprep.subr.bf16.mxu0 0
        %413 = vmatpush1.bf16.msra.mxu0 %v389
        %414 = vmatprep.subr.bf16.mxu0 0
        %415 = vmatpush1.bf16.msra.mxu0 0
        %416 = vmatprep.subr.bf16.mxu0 0
        %417 = vmatpush1.bf16.msra.mxu0 0
        %418 = vmatprep.subr.bf16.mxu0 0
        %419 = vmatpush1.bf16.msra.mxu0 0
        %420 = vmatprep.subr.bf16.mxu0 0
        %421 = vmatpush1.bf16.msra.mxu0 0
        %422 = vmatprep.subr.bf16.mxu0 0
        %423 = vmatpush1.bf16.msra.mxu0 0
        %424 = vmatprep.subr.bf16.mxu0 0
        %425 = vmatpush1.bf16.msra.mxu0 0
        %426 = vmatprep.subr.bf16.mxu0 0
        %427 = vmatpush1.bf16.msra.mxu0 0
        %428 = vmatprep.subr.bf16.mxu0 0
        %429 = vmatpush1.bf16.msra.mxu0 0
        %430 = vmatprep.mubr.bf16.mxu0 0
        %431 = vmatmul.mubr.bf16.gmra.mrb[0].mxu0 %v346
        %v432 = vpop.f32.mrb[0].mxu0
        %v433 = vadd.f32 0.0, %v432
        %v434 = vpop.f32.mrb[0].mxu0
        %v435 = vpop.f32.mrb[0].mxu0
        %v436 = vadd.f32 0.0, %v435
        %v437 = vpop.f32.mrb[0].mxu0
        %438 = vmatprep.mubr.bf16.mxu0 0
        %439 = vmatmul.mubr.bf16.gmra.mrb[0].mxu0 %v347
        %v440 = vpop.f32.mrb[0].mxu0
        %v441 = vadd.f32 0.0, %v440
        %v442 = vpop.f32.mrb[0].mxu0
        %v443 = vpop.f32.mrb[0].mxu0
        %v444 = vadd.f32 0.0, %v443
        %v445 = vpop.f32.mrb[0].mxu0
        %446 = vdwg.mxu0
        %v447 = vadd.f32 %v314, %v433
        %v448 = vadd.f32 %v315, %v436
        %v449 = vadd.f32 %v316, %v441
        %v450 = vadd.f32 %v317, %v444
        %451 = vst [vmem:[#allocation2] sm:$0xff] %v447
        %452 = vst [vmem:[#allocation2 + $0x8] sm:$0xff] %v448
        %453 = vst [vmem:[#allocation2 + $0x10] sm:$0xff] %v449
        %454 = vst [vmem:[#allocation2 + $0x18] sm:$0xff] %v450
        %p455 = scmp.eq.s32.totalorder %s21, 8
        // Predicated region
        $region78: #{_lambda_.10} parent=68 // pred_check
          %p456 = pneg %p455
        $region79: #{_lambda_.10} parent=68 // pred_check_branch
          %458 = sbr.rel (%p456) target = $region81
        $region80: #{_lambda_.10} parent=68 // pred_region
          %v459 = vld [vmem:[#allocation2] sm:$0xff]
          %v460 = vld [vmem:[#allocation2 + $0x8] sm:$0xff]
          %v461 = vld [vmem:[#allocation2 + $0x10] sm:$0xff]
          %v462 = vld [vmem:[#allocation2 + $0x18] sm:$0xff]
          %v463 = vld [vmem:[%s295] sm:$0x1]
          %v465 = vlaneseq
          %v466 = vshrl.u32 %v465, 7
          %v467 = vsub.s32 0, %v466
          %v468 = vrot.slane %v463, %v467
          %v470 = vadd.f32 %v459, %v468
          %v471 = vadd.f32 %v460, %v468
          %v472 = vadd.f32 %v461, %v468
          %v473 = vadd.f32 %v462, %v468
          %v474 = vmax.f32 %v470, 0.0
          %v475 = vmax.f32 %v471, 0.0
          %v476 = vmax.f32 %v472, 0.0
          %v477 = vmax.f32 %v473, 0.0
          %v478 = vpack.c.bf16 %v475, %v474
          %v479 = vpack.c.bf16 %v477, %v476
          %v482 = vunpack.c.l.b16 %v478
          %v483 = vunpack.c.h.b16 %v478
          %v484 = vunpack.c.l.b16 %v479
          %v485 = vunpack.c.h.b16 %v479
          %v486 = vpack.c.b16 %v482, %v482
          %v487 = vpack.c.b16 %v483, %v483
          %v488 = vpack.c.b16 %v484, %v484
          %v489 = vpack.c.b16 %v485, %v485
          %494 = vst [vmem:[%s303] sm:$0xf] %v486
          %495 = vst [vmem:[%s303 + $0x4] sm:$0xf] %v487
          %496 = vst [vmem:[%s303 + $0x8] sm:$0xf] %v488
          %497 = vst [vmem:[%s303 + $0xc] sm:$0xf] %v489
        $region81: #{_lambda_.10} parent=68 // pred_fallthru
          _
        %s498 = smul.u32 4, %s19
        %p499 = scmp.lt.s32.totalorder %s498, 3
        %s500 = scalar_select %p499, %s498, 3
        %p501 = scmp.lt.s32.totalorder %s20, 0
        %s502 = scalar_select %p501, %s20, 0
        %s503 = sadd.s32 %s502, %s500
        %s504 = smul.addr %s503, 4
        %s505 = scalar_lea.vmem %s3, %s504
        // Predicated region
        $region82: #{_lambda_.10} parent=68 // pred_check
          %p506 = pneg %p135
        $region83: #{_lambda_.10} parent=68 // pred_check_branch
          %508 = sbr.rel (%p506) target = $region85
        $region84: #{_lambda_.10} parent=68 // pred_region
          %s509 = smul.u32 4, %s19
        $region85: #{_lambda_.10} parent=68 // pred_fallthru
          _
        // Predicated region
        $region86: #{_lambda_.10} parent=68 // pred_check
          %p510 = pneg %p135
        $region87: #{_lambda_.10} parent=68 // pred_check_branch
          %512 = sbr.rel (%p510) target = $region89
        $region88: #{_lambda_.10} parent=68 // pred_region
          %s513 = smul.u32 4, %s19
          %p514 = scmp.lt.s32.totalorder %s513, 3
          %s515 = scalar_select %p514, %s513, 3
          %p516 = scmp.lt.s32.totalorder %s20, 0
          %s517 = scalar_select %p516, %s20, 0
          %s518 = sadd.s32 %s517, %s515
          %s519 = smul.addr %s518, 4
          %s520 = scalar_lea.vmem %s3, %s519
        $region89: #{_lambda_.10} parent=68 // pred_fallthru
          _
      $region69: #{_lambda_.10} parent=5 // pred_fallthru
        _
      %p521 = scmp.le.s32.totalorder 2, %s9
      // Predicated region
      $region90: #{_lambda_.10} parent=5 // pred_check
        %p522 = pneg %p521
      $region91: #{_lambda_.10} parent=5 // pred_check_branch
        %524 = sbr.rel (%p522) target = $region93
      $region92: #{_lambda_.10} parent=5 // pred_region
        %s525 = ssub.s32 %s9, 2
      $region93: #{_lambda_.10} parent=5 // pred_fallthru
        _
    $region6: #{_lambda_.10} parent=1 // loop_footer
      %s13 = sadd.s32 1, %s9
    $region7: #{_lambda_.10} parent=1 // loop_footer_branch
      %8 = sbr.rel target = $region3
    $region8: #{_lambda_.10} parent=1 // loop_exit
      _

// kernel: _lambda_.11
$region0: #{_lambda_.11}
  #allocation0 [shape = 'u32[]', space=smem, size = 0x4, offset = 0x4, fixed_abs, tag = 'smem constant byte address 0x4 - core index']
  #allocation1 [shape = 'u32[144,128]{1,0:T(1,128)}', space=vmem, size = 0x12000, scoped, tag = 'internal scratch']
  #allocation2 [shape = 'f32[32,256]{1,0:T(8,128)}', space=vmem, size = 0x8000, scoped, tag = 'scratch operand']
  %s0 = inlined_call_operand.vmem [shape: bf16[32,1152], index: 0, kind: input, shape index: {}]
  %s1 = inlined_call_operand.vmem [shape: bf16[1152,256], index: 1, kind: input, shape index: {}]
  %s2 = inlined_call_operand.vmem [shape: f32[1,256], index: 2, kind: input, shape index: {}]
  %s3 = inlined_call_operand.vmem [shape: bf16[32,256], index: 3, kind: output, shape index: {}]
  %s4 = sld [smem:[#allocation0]]
  $region94: #{_lambda_.11} parent=0
    _
  %s6 = ssub.s32 1, %s4
  %s7 = scalar_select 0, %s6, %s4
  $region1: #{_lambda_.11} parent=0
    #allocation3 [shape = 'u8[16384]{0}', space=vmem, size = 0x4000, scoped, tag = 'input window, operand 0']
    loop: start=0, step=1, limit=11
    $region2: #{_lambda_.11} parent=1 // loop_pre_header
      _
    $region3: #{_lambda_.11} parent=1 // loop_header
      %s9 = sphi 0, %s13
      %p10 = scmp.ge.s32.totalorder %s9, 11
      %s16 = sphi 0, %s35
      %s17 = sphi 0, %s31
      %s18 = sphi 0, %s27
      %s19 = sphi 0, %s16
      %s20 = sphi 0, %s17
      %s21 = sphi 0, %s18
      %s22 = sphi 0, %s19
      %s23 = sphi 0, %s20
      %s24 = sphi 0, %s21
      %s40 = sphi 0, %s42
      %s43 = sphi 0, %s40
      %s44 = sphi 0, %s43
      %s60 = sphi 0, %s44
      %s68 = sphi 0, %s70
      %s71 = sphi 0, %s68
      %s72 = sphi 0, %s71
      %s88 = sphi 0, %s72
      %s94 = sphi 0, %s96
      %s97 = sphi 0, %s94
      %s98 = sphi 0, %s97
      %s114 = sphi 0, %s98
      %s122 = sphi 0, %s124
      %s125 = sphi 0, %s122
      %s126 = sphi 0, %s125
      %s142 = sphi 0, %s126
    $region4: #{_lambda_.11} parent=1 // loop_header_branch
      %12 = sbr.rel (%p10) target = $region8
    $region5: #{_lambda_.11} parent=1 // loop_body
      %s14 = ssub.s32 %s9, 1
      %s15 = ssub.s32 %s9, 2
      %s25 = sadd.s32 1, %s18
      %p26 = scmp.ge.s32.totalorder %s25, 9
      %s27 = scalar_select %p26, 0, %s25
      %s28 = sadd.s32 1, %s17
      %s29 = scalar_select %p26, %s28, %s17
      %p30 = scmp.ge.s32.totalorder %s29, 1
      %s31 = scalar_select %p30, 0, %s29
      %s32 = sadd.s32 1, %s16
      %s33 = scalar_select %p30, %s32, %s16
      %p34 = scmp.ge.s32.totalorder %s33, 1
      %s35 = scalar_select %p34, 0, %s33
      %s36 = ssub.s32 %s16, %s35
      %s37 = ssub.s32 %s18, %s27
      %s38 = sor.u32 %s36, %s37
      %p39 = scmp.eq.s32.totalorder %s38, 0
      %s41 = sadd.s32 %s40, 1
      %s42 = scalar_select %p39, %s40, %s41
      %p45 = pneg %p39
      %p46 = scmp.eq.s32.totalorder %s9, 8
      %p47 = por %p45, %p46
      %p48 = scmp.ne.s32.totalorder %s40, %s43
      %p49 = scmp.eq.s32.totalorder %s9, 0
      %p50 = por %p48, %p49
      %p51 = scmp.ne.s32.totalorder %s40, %s43
      %p52 = scmp.eq.s32.totalorder %s14, 8
      %p53 = por %p51, %p52
      %p54 = scmp.ne.s32.totalorder %s43, %s44
      %p55 = scmp.eq.s32.totalorder %s14, 0
      %p56 = por %p54, %p55
      %p57 = scmp.ne.s32.totalorder %s43, %s44
      %p58 = scmp.eq.s32.totalorder %s15, 8
      %p59 = por %p57, %p58
      %p61 = scmp.ne.s32.totalorder %s44, %s60
      %p62 = scmp.eq.s32.totalorder %s15, 0
      %p63 = por %p61, %p62
      %s64 = ssub.s32 %s18, %s27
      %s65 = ssub.s32 %s17, %s31
      %s66 = sor.u32 %s64, %s65
      %p67 = scmp.eq.s32.totalorder %s66, 0
      %s69 = sadd.s32 %s68, 1
      %s70 = scalar_select %p67, %s68, %s69
      %p73 = pneg %p67
      %p74 = scmp.eq.s32.totalorder %s9, 8
      %p75 = por %p73, %p74
      %p76 = scmp.ne.s32.totalorder %s68, %s71
      %p77 = scmp.eq.s32.totalorder %s9, 0
      %p78 = por %p76, %p77
      %p79 = scmp.ne.s32.totalorder %s68, %s71
      %p80 = scmp.eq.s32.totalorder %s14, 8
      %p81 = por %p79, %p80
      %p82 = scmp.ne.s32.totalorder %s71, %s72
      %p83 = scmp.eq.s32.totalorder %s14, 0
      %p84 = por %p82, %p83
      %p85 = scmp.ne.s32.totalorder %s71, %s72
      %p86 = scmp.eq.s32.totalorder %s15, 8
      %p87 = por %p85, %p86
      %p89 = scmp.ne.s32.totalorder %s72, %s88
      %p90 = scmp.eq.s32.totalorder %s15, 0
      %p91 = por %p89, %p90
      %s92 = ssub.s32 %s17, %s31
      %p93 = scmp.eq.s32.totalorder %s92, 0
      %s95 = sadd.s32 %s94, 1
      %s96 = scalar_select %p93, %s94, %s95
      %p99 = pneg %p93
      %p100 = scmp.eq.s32.totalorder %s9, 8
      %p101 = por %p99, %p100
      %p102 = scmp.ne.s32.totalorder %s94, %s97
      %p103 = scmp.eq.s32.totalorder %s9, 0
      %p104 = por %p102, %p103
      %p105 = scmp.ne.s32.totalorder %s94, %s97
      %p106 = scmp.eq.s32.totalorder %s14, 8
      %p107 = por %p105, %p106
      %p108 = scmp.ne.s32.totalorder %s97, %s98
      %p109 = scmp.eq.s32.totalorder %s14, 0
      %p110 = por %p108, %p109
      %p111 = scmp.ne.s32.totalorder %s97, %s98
      %p112 = scmp.eq.s32.totalorder %s15, 8
      %p113 = por %p111, %p112
      %p115 = scmp.ne.s32.totalorder %s98, %s114
      %p116 = scmp.eq.s32.totalorder %s15, 0
      %p117 = por %p115, %p116
      %s118 = ssub.s32 %s16, %s35
      %s119 = ssub.s32 %s17, %s31
      %s120 = sor.u32 %s118, %s119
      %p121 = scmp.eq.s32.totalorder %s120, 0
      %s123 = sadd.s32 %s122, 1
      %s124 = scalar_select %p121, %s122, %s123
      %p127 = pneg %p121
      %p128 = scmp.eq.s32.totalorder %s9, 8
      %p129 = por %p127, %p128
      %p130 = scmp.ne.s32.totalorder %s122, %s125
      %p131 = scmp.eq.s32.totalorder %s9, 0
      %p132 = por %p130, %p131
      %p133 = scmp.ne.s32.totalorder %s122, %s125
      %p134 = scmp.eq.s32.totalorder %s14, 8
      %p135 = por %p133, %p134
      %p136 = scmp.ne.s32.totalorder %s125, %s126
      %p137 = scmp.eq.s32.totalorder %s14, 0
      %p138 = por %p136, %p137
      %p139 = scmp.ne.s32.totalorder %s125, %s126
      %p140 = scmp.eq.s32.totalorder %s15, 8
      %p141 = por %p139, %p140
      %p143 = scmp.ne.s32.totalorder %s126, %s142
      %p144 = scmp.eq.s32.totalorder %s15, 0
      %p145 = por %p143, %p144
      %p146 = scmp.le.s32.totalorder 1, %s9
      %p147 = scmp.lt.s32.totalorder %s9, 10
      %p148 = pnand %p146, %p147
      %p149 = pneg %p148
      // Predicated region
      $region9: #{_lambda_.11} parent=5 // pred_check
        _
      $region10: #{_lambda_.11} parent=5 // pred_check_branch
        %151 = sbr.rel (%p148) target = $region12
      $region11: #{_lambda_.11} parent=5 // pred_region
        %s152 = ssub.s32 %s9, 1
        // Predicated region
        $region13: #{_lambda_.11} parent=11 // pred_check
          %p153 = pneg %p110
        $region14: #{_lambda_.11} parent=11 // pred_check_branch
          %155 = sbr.rel (%p153) target = $region16
        $region15: #{_lambda_.11} parent=11 // pred_region
          %s156 = smul.u32 2, %s20
          %p157 = scmp.lt.s32.totalorder %s156, 1
          %s158 = scalar_select %p157, %s156, 1
          %s159 = scalar_lea.vmem %s2, %s158
          %s160 = smul.u32 2, %s20
        $region16: #{_lambda_.11} parent=11 // pred_fallthru
          _
      $region12: #{_lambda_.11} parent=5 // pred_fallthru
        _
      %p161 = scmp.lt.s32.totalorder %s9, 9
      // Predicated region
      $region17: #{_lambda_.11} parent=5 // pred_check
        %p162 = pneg %p161
      $region18: #{_lambda_.11} parent=5 // pred_check_branch
        %164 = sbr.rel (%p162) target = $region20
      $region19: #{_lambda_.11} parent=5 // pred_region
        // Predicated region
        $region21: #{_lambda_.11} parent=19 // pred_check
          %p165 = pneg %p50
        $region22: #{_lambda_.11} parent=19 // pred_check_branch
          %167 = sbr.rel (%p165) target = $region24
        $region23: #{_lambda_.11} parent=19 // pred_region
          %s168 = sand.u32 %s40, 1
          %s169 = sand.u32 %s40, 1
          %s170 = smul.addr %s169, 16
          %s171 = scalar_lea.vmem [#allocation3], %s170
          %s172 = smul.u32 4, %s16
          %s173 = smul.addr %s172, 9
          %s174 = sadd.s32 %s18, %s173
          %s175 = smul.addr %s174, 4
          %s176 = scalar_lea.vmem %s0, %s175
          // Predicated region
          $region25: #{_lambda_.11} parent=23 // pred_check
            _
          $region26: #{_lambda_.11} parent=23 // pred_check_branch
            %178 = sbr.rel (0) target = $region28
          $region27: #{_lambda_.11} parent=23 // pred_region
            // Predicated region
            $region29: #{_lambda_.11} parent=27 // pred_check
              _
            $region30: #{_lambda_.11} parent=27 // pred_check_branch
              %180 = sbr.rel target = $region32
            $region31: #{_lambda_.11} parent=27 // pred_region
              // Predicated region
              $region44: #{_lambda_.11} parent=31 // pred_check
                _
              $region45: #{_lambda_.11} parent=31 // pred_check_branch
                %201 = sbr.rel (0) target = $region47
              $region46: #{_lambda_.11} parent=31 // pred_region
                loop: start=0, step=1, limit=1
                $region48: #{_lambda_.11} parent=46 // loop_pre_header
                  _
                $region49: #{_lambda_.11} parent=46 // loop_header
                  %s203 = sphi 0, %s207
                  %p204 = scmp.ge.s32.totalorder %s203, 1
                  %s208 = sphi %s176, %s176
                  %s209 = sphi %s171, %s171
                $region50: #{_lambda_.11} parent=46 // loop_header_branch
                  %206 = sbr.rel (%p204) target = $region54
                $region51: #{_lambda_.11} parent=46 // loop_body
                  _
                $region52: #{_lambda_.11} parent=46 // loop_footer
                  %s207 = sadd.s32 1, %s203
                $region53: #{_lambda_.11} parent=46 // loop_footer_branch
                  %202 = sbr.rel target = $region49
                $region54: #{_lambda_.11} parent=46 // loop_exit
                  _
                loop: start=0, step=1, limit=1
                $region55: #{_lambda_.11} parent=46 // loop_pre_header
                  _
                $region56: #{_lambda_.11} parent=46 // loop_header
                  %s212 = sphi 0, %s216
                  %p213 = scmp.ge.s32.totalorder %s212, 1
                  %s217 = sphi %s176, %s176
                  %s218 = sphi %s171, %s171
                $region57: #{_lambda_.11} parent=46 // loop_header_branch
                  %215 = sbr.rel (%p213) target = $region61
                $region58: #{_lambda_.11} parent=46 // loop_body
                  %v219 = vld [vmem:[%s217] sm:$0xf]
                  %220 = vst [vmem:[%s218] sm:$0xf] %v219
                  %v221 = vld [vmem:[%s217 + $0x24] sm:$0xf]
                  %222 = vst [vmem:[%s218 + $0x4] sm:$0xf] %v221
                  %v223 = vld [vmem:[%s217 + $0x48] sm:$0xf]
                  %224 = vst [vmem:[%s218 + $0x8] sm:$0xf] %v223
                  %v225 = vld [vmem:[%s217 + $0x6c] sm:$0xf]
                  %226 = vst [vmem:[%s218 + $0xc] sm:$0xf] %v225
                $region59: #{_lambda_.11} parent=46 // loop_footer
                  %s216 = sadd.s32 1, %s212
                $region60: #{_lambda_.11} parent=46 // loop_footer_branch
                  %211 = sbr.rel target = $region56
                $region61: #{_lambda_.11} parent=46 // loop_exit
                  _
              $region47: #{_lambda_.11} parent=31 // pred_fallthru
                _
            $region32: #{_lambda_.11} parent=27 // pred_fallthru
              _
            // Predicated region
            $region33: #{_lambda_.11} parent=27 // pred_check
              _
            $region34: #{_lambda_.11} parent=27 // pred_check_branch
              %182 = sbr.rel (0) target = $region36
            $region35: #{_lambda_.11} parent=27 // pred_region
              loop: start=0, step=1, limit=1
              $region37: #{_lambda_.11} parent=35 // loop_pre_header
                _
              $region38: #{_lambda_.11} parent=35 // loop_header
                %s185 = sphi 0, %s189
                %p186 = scmp.ge.s32.totalorder %s185, 1
                %s190 = sphi %s176, %s176
                %s191 = sphi %s171, %s171
              $region39: #{_lambda_.11} parent=35 // loop_header_branch
                %188 = sbr.rel (%p186) target = $region43
              $region40: #{_lambda_.11} parent=35 // loop_body
                %v192 = vld [vmem:[%s190] sm:$0xf]
                %193 = vst [vmem:[%s191] sm:$0xf] %v192
                %v194 = vld [vmem:[%s190 + $0x24] sm:$0xf]
                %195 = vst [vmem:[%s191 + $0x4] sm:$0xf] %v194
                %v196 = vld [vmem:[%s190 + $0x48] sm:$0xf]
                %197 = vst [vmem:[%s191 + $0x8] sm:$0xf] %v196
                %v198 = vld [vmem:[%s190 + $0x6c] sm:$0xf]
                %199 = vst [vmem:[%s191 + $0xc] sm:$0xf] %v198
              $region41: #{_lambda_.11} parent=35 // loop_footer
                %s189 = sadd.s32 1, %s185
              $region42: #{_lambda_.11} parent=35 // loop_footer_branch
                %184 = sbr.rel target = $region38
              $region43: #{_lambda_.11} parent=35 // loop_exit
                _
            $region36: #{_lambda_.11} parent=27 // pred_fallthru
              _
          $region28: #{_lambda_.11} parent=23 // pred_fallthru
            _
          %227 = vnop
        $region24: #{_lambda_.11} parent=19 // pred_fallthru
          _
        // Predicated region
        $region62: #{_lambda_.11} parent=19 // pred_check
          %p228 = pneg %p78
        $region63: #{_lambda_.11} parent=19 // pred_check_branch
          %230 = sbr.rel (%p228) target = $region65
        $region64: #{_lambda_.11} parent=19 // pred_region
          %s231 = smul.u32 16, %s18
          %s232 = smul.u32 2, %s17
          %p233 = scmp.lt.s32.totalorder %s231, 143
          %s234 = scalar_select %p233, %s231, 143
          %p235 = scmp.lt.s32.totalorder %s232, 1
          %s236 = scalar_select %p235, %s232, 1
          %s237 = smul.addr %s234, 2
          %s238 = sadd.s32 %s236, %s237
          %s239 = smul.addr %s238, 4
          %s240 = scalar_lea.vmem %s1, %s239
          %s241 = smul.u32 16, %s18
          %s242 = smul.u32 2, %s17
        $region65: #{_lambda_.11} parent=19 // pred_fallthru
          _
      $region20: #{_lambda_.11} parent=5 // pred_fallthru
        _
      %p243 = scmp.le.s32.totalorder 1, %s9
      %p244 = scmp.lt.s32.totalorder %s9, 10
      %p245 = pnand %p243, %p244
      %p246 = pneg %p245
      // Predicated region
      $region66: #{_lambda_.11} parent=5 // pred_check
        _
      $region67: #{_lambda_.11} parent=5 // pred_check_branch
        %248 = sbr.rel (%p245) target = $region69
      $region68: #{_lambda_.11} parent=5 // pred_region
        %s249 = ssub.s32 %s9, 1
        %s250 = sand.u32 %s43, 1
        %s251 = sand.u32 %s43, 1
        %s252 = smul.addr %s251, 16
        %s253 = scalar_lea.vmem [#allocation3], %s252
        // Predicated region
        $region70: #{_lambda_.11} parent=68 // pred_check
          %p254 = pneg %p56
        $region71: #{_lambda_.11} parent=68 // pred_check_branch
          %256 = sbr.rel (%p254) target = $region73
        $region72: #{_lambda_.11} parent=68 // pred_region
          _
        $region73: #{_lambda_.11} parent=68 // pred_fallthru
          _
        %s257 = sand.u32 %s43, 1
        %s258 = sand.u32 %s43, 1
        %s259 = smul.addr %s258, 16
        %s260 = scalar_lea.vmem [#allocation3], %s259
        %p261 = pneg %p56
        %p262 = pneg %p53
        %s263 = smul.u32 16, %s21
        %s264 = smul.u32 2, %s20
        %p265 = scmp.lt.s32.totalorder %s263, 143
        %s266 = scalar_select %p265, %s263, 143
        %p267 = scmp.lt.s32.totalorder %s264, 1
        %s268 = scalar_select %p267, %s264, 1
        %s269 = smul.addr %s266, 2
        %s270 = sadd.s32 %s268, %s269
        %s271 = smul.addr %s270, 4
        %s272 = scalar_lea.vmem %s1, %s271
        %p273 = pneg %p84
        %p274 = pneg %p81
        %s275 = smul.u32 2, %s20
        %p276 = scmp.lt.s32.totalorder %s275, 1
        %s277 = scalar_select %p276, %s275, 1
        %s278 = scalar_lea.vmem %s2, %s277
        %p279 = pneg %p110
        %p280 = pneg %p107
        %p281 = pneg %p138
        %p282 = pneg %p135
        %s283 = smul.u32 4, %s19
        %s284 = smul.u32 2, %s20
        %p285 = scmp.lt.s32.totalorder %s283, 3
        %s286 = scalar_select %p285, %s283, 3
        %p287 = scmp.lt.s32.totalorder %s284, 1
        %s288 = scalar_select %p287, %s284, 1
        %s289 = smul.addr %s286, 2
        %s290 = sadd.s32 %s288, %s289
        %s291 = smul.addr %s290, 4
        %s292 = scalar_lea.vmem %s3, %s291
        %s293 = smul.u32 4, %s19
        %s294 = smul.u32 16, %s21
        %s295 = smul.u32 2, %s20
        %p296 = scmp.lt.s32.totalorder %s294, 143
        %s297 = scalar_select %p296, %s294, 143
        %p298 = scmp.lt.s32.totalorder %s295, 1
        %s299 = scalar_select %p298, %s295, 1
        %s300 = smul.addr %s297, 2
        %s301 = sadd.s32 %s299, %s300
        %s302 = smul.addr %s301, 4
        %s303 = scalar_lea.vmem %s1, %s302
        %s304 = smul.u32 16, %s21
        %s305 = smul.u32 2, %s20
        %s306 = smul.u32 2, %s20
        %p307 = scmp.lt.s32.totalorder %s306, 1
        %s308 = scalar_select %p307, %s306, 1
        %s309 = scalar_lea.vmem %s2, %s308
        %s310 = smul.u32 2, %s20
        %s311 = smul.u32 4, %s19
        %s312 = smul.u32 2, %s20
        %p313 = scmp.lt.s32.totalorder %s311, 3
        %s314 = scalar_select %p313, %s311, 3
        %p315 = scmp.lt.s32.totalorder %s312, 1
        %s316 = scalar_select %p315, %s312, 1
        %s317 = smul.addr %s314, 2
        %s318 = sadd.s32 %s316, %s317
        %s319 = smul.addr %s318, 4
        %s320 = scalar_lea.vmem %s3, %s319
        %s321 = smul.u32 4, %s19
        %s322 = smul.u32 2, %s20
        %p324 = scmp.eq.s32.totalorder %s21, 0
        // Predicated region
        $region74: #{_lambda_.11} parent=68 // pred_check
          %p325 = pneg %p324
        $region75: #{_lambda_.11} parent=68 // pred_check_branch
          %327 = sbr.rel (%p325) target = $region77
        $region76: #{_lambda_.11} parent=68 // pred_region
          %328 = vst [vmem:[#allocation2] sm:$0xff] 0.0
          %329 = vst [vmem:[#allocation2 + $0x8] sm:$0xff] 0.0
          %330 = vst [vmem:[#allocation2 + $0x10] sm:$0xff] 0.0
          %331 = vst [vmem:[#allocation2 + $0x18] sm:$0xff] 0.0
          %332 = vst [vmem:[#allocation2 + $0x20] sm:$0xff] 0.0
          %333 = vst [vmem:[#allocation2 + $0x28] sm:$0xff] 0.0
          %334 = vst [vmem:[#allocation2 + $0x30] sm:$0xff] 0.0
          %335 = vst [vmem:[#allocation2 + $0x38] sm:$0xff] 0.0
        $region77: #{_lambda_.11} parent=68 // pred_fallthru
          _
        %v336 = vld [vmem:[#allocation2] sm:$0xff]
        %v337 = vld [vmem:[#allocation2 + $0x8] sm:$0xff]
        %v338 = vld [vmem:[#allocation2 + $0x10] sm:$0xff]
        %v339 = vld [vmem:[#allocation2 + $0x18] sm:$0xff]
        %v340 = vld [vmem:[#allocation2 + $0x20] sm:$0xff]
        %v341 = vld [vmem:[#allocation2 + $0x28] sm:$0xff]
        %v342 = vld [vmem:[#allocation2 + $0x30] sm:$0xff]
        %v343 = vld [vmem:[#allocation2 + $0x38] sm:$0xff]
        %v344 = vld [vmem:[%s253] sm:$0xf]
        %v345 = vld [vmem:[%s253 + $0x4] sm:$0xf]
        %v346 = vld [vmem:[%s253 + $0x8] sm:$0xf]
        %v347 = vld [vmem:[%s253 + $0xc] sm:$0xf]
        %v348 = vld [vmem:[%s303] sm:$0xff]
        %v349 = vld [vmem:[%s303 + $0x8] sm:$0xff]
        %v350 = vld [vmem:[%s303 + $0x10] sm:$0xff]
        %v351 = vld [vmem:[%s303 + $0x18] sm:$0xff]
        %v352 = vld [vmem:[%s303 + $0x20] sm:$0xff]
        %v353 = vld [vmem:[%s303 + $0x28] sm:$0xff]
        %v354 = vld [vmem:[%s303 + $0x30] sm:$0xff]
        %v355 = vld [vmem:[%s303 + $0x38] sm:$0xff]
        %v356 = vld [vmem:[%s303 + $0x40] sm:$0xff]
        %v357 = vld [vmem:[%s303 + $0x48] sm:$0xff]
        %v358 = vld [vmem:[%s303 + $0x50] sm:$0xff]
        %v359 = vld [vmem:[%s303 + $0x58] sm:$0xff]
        %v360 = vld [vmem:[%s303 + $0x60] sm:$0xff]
        %v361 = vld [vmem:[%s303 + $0x68] sm:$0xff]
        %v362 = vld [vmem:[%s303 + $0x70] sm:$0xff]
        %v363 = vld [vmem:[%s303 + $0x78] sm:$0xff]
        %v368 = vunpack.c.l.b16 %v344
        %v369 = vunpack.c.l.b16 %v345
        %v370 = vunpack.c.l.b16 %v346
        %v371 = vunpack.c.l.b16 %v347
        %v372 = vpack.c.b16 %v369, %v368
        %v373 = vpack.c.b16 %v371, %v370
        %v392 = vunpack.c.l.b16 %v348
        %v393 = vunpack.c.h.b16 %v348
        %v394 = vunpack.c.l.b16 %v349
        %v395 = vunpack.c.h.b16 %v349
        %v396 = vunpack.c.l.b16 %v350
        %v397 = vunpack.c.h.b16 %v350
        %v398 = vunpack.c.l.b16 %v351
        %v399 = vunpack.c.h.b16 %v351
        %v400 = vunpack.c.l.b16 %v352
        %v401 = vunpack.c.h.b16 %v352
        %v402 = vunpack.c.l.b16 %v353
        %v403 = vunpack.c.h.b16 %v353
        %v404 = vunpack.c.l.b16 %v354
        %v405 = vunpack.c.h.b16 %v354
        %v406 = vunpack.c.l.b16 %v355
        %v407 = vunpack.c.h.b16 %v355
        %v408 = vunpack.c.l.b16 %v356
        %v409 = vunpack.c.h.b16 %v356
        %v410 = vunpack.c.l.b16 %v357
        %v411 = vunpack.c.h.b16 %v357
        %v412 = vunpack.c.l.b16 %v358
        %v413 = vunpack.c.h.b16 %v358
        %v414 = vunpack.c.l.b16 %v359
        %v415 = vunpack.c.h.b16 %v359
        %v416 = vunpack.c.l.b16 %v360
        %v417 = vunpack.c.h.b16 %v360
        %v418 = vunpack.c.l.b16 %v361
        %v419 = vunpack.c.h.b16 %v361
        %v420 = vunpack.c.l.b16 %v362
        %v421 = vunpack.c.h.b16 %v362
        %v422 = vunpack.c.l.b16 %v363
        %v423 = vunpack.c.h.b16 %v363
        %v424 = vpack.c.b16 %v394, %v392
        %v425 = vpack.c.b16 %v395, %v393
        %v426 = vpack.c.b16 %v398, %v396
        %v427 = vpack.c.b16 %v399, %v397
        %v428 = vpack.c.b16 %v402, %v400
        %v429 = vpack.c.b16 %v403, %v401
        %v430 = vpack.c.b16 %v406, %v404
        %v431 = vpack.c.b16 %v407, %v405
        %v432 = vpack.c.b16 %v410, %v408
        %v433 = vpack.c.b16 %v411, %v409
        %v434 = vpack.c.b16 %v414, %v412
        %v435 = vpack.c.b16 %v415, %v413
        %v436 = vpack.c.b16 %v418, %v416
        %v437 = vpack.c.b16 %v419, %v417
        %v438 = vpack.c.b16 %v422, %v420
        %v439 = vpack.c.b16 %v423, %v421
        %456 = vmatprep.subr.bf16.mxu0 %v425
        %457 = vmatpush1.bf16.msra.mxu0 %v424
        %458 = vmatprep.subr.bf16.mxu0 %v427
        %459 = vmatpush1.bf16.msra.mxu0 %v426
        %460 = vmatprep.subr.bf16.mxu0 %v429
        %461 = vmatpush1.bf16.msra.mxu0 %v428
        %462 = vmatprep.subr.bf16.mxu0 %v431
        %463 = vmatpush1.bf16.msra.mxu0 %v430
        %464 = vmatprep.subr.bf16.mxu0 %v433
        %465 = vmatpush1.bf16.msra.mxu0 %v432
        %466 = vmatprep.subr.bf16.mxu0 %v435
        %467 = vmatpush1.bf16.msra.mxu0 %v434
        %468 = vmatprep.subr.bf16.mxu0 %v437
        %469 = vmatpush1.bf16.msra.mxu0 %v436
        %470 = vmatprep.subr.bf16.mxu0 %v439
        %471 = vmatpush1.bf16.msra.mxu0 %v438
        %472 = vmatprep.subr.bf16.mxu0 0
        %473 = vmatpush1.bf16.msra.mxu0 0
        %474 = vmatprep.subr.bf16.mxu0 0
        %475 = vmatpush1.bf16.msra.mxu0 0
        %476 = vmatprep.subr.bf16.mxu0 0
        %477 = vmatpush1.bf16.msra.mxu0 0
        %478 = vmatprep.subr.bf16.mxu0 0
        %479 = vmatpush1.bf16.msra.mxu0 0
        %480 = vmatprep.subr.bf16.mxu0 0
        %481 = vmatpush1.bf16.msra.mxu0 0
        %482 = vmatprep.subr.bf16.mxu0 0
        %483 = vmatpush1.bf16.msra.mxu0 0
        %484 = vmatprep.subr.bf16.mxu0 0
        %485 = vmatpush1.bf16.msra.mxu0 0
        %486 = vmatprep.subr.bf16.mxu0 0
        %487 = vmatpush1.bf16.msra.mxu0 0
        %488 = vmatprep.mubr.bf16.mxu0 0
        %489 = vmatmul.mubr.bf16.gmra.mrb[0].mxu0 %v372
        %v490 = vpop.f32.mrb[0].mxu0
        %v491 = vadd.f32 0.0, %v490
        %v492 = vpop.f32.mrb[0].mxu0
        %v493 = vadd.f32 0.0, %v492
        %v494 = vpop.f32.mrb[0].mxu0
        %v495 = vadd.f32 0.0, %v494
        %v496 = vpop.f32.mrb[0].mxu0
        %v497 = vadd.f32 0.0, %v496
        %498 = vmatprep.mubr.bf16.mxu0 0
        %499 = vmatmul.mubr.bf16.gmra.mrb[0].mxu0 %v373
        %v500 = vpop.f32.mrb[0].mxu0
        %v501 = vadd.f32 0.0, %v500
        %v502 = vpop.f32.mrb[0].mxu0
        %v503 = vadd.f32 0.0, %v502
        %v504 = vpop.f32.mrb[0].mxu0
        %v505 = vadd.f32 0.0, %v504
        %v506 = vpop.f32.mrb[0].mxu0
        %v507 = vadd.f32 0.0, %v506
        %508 = vdwg.mxu0
        %v509 = vadd.f32 %v336, %v491
        %v510 = vadd.f32 %v337, %v493
        %v511 = vadd.f32 %v338, %v495
        %v512 = vadd.f32 %v339, %v497
        %v513 = vadd.f32 %v340, %v501
        %v514 = vadd.f32 %v341, %v503
        %v515 = vadd.f32 %v342, %v505
        %v516 = vadd.f32 %v343, %v507
        %517 = vst [vmem:[#allocation2] sm:$0xff] %v509
        %518 = vst [vmem:[#allocation2 + $0x8] sm:$0xff] %v510
        %519 = vst [vmem:[#allocation2 + $0x10] sm:$0xff] %v511
        %520 = vst [vmem:[#allocation2 + $0x18] sm:$0xff] %v512
        %521 = vst [vmem:[#allocation2 + $0x20] sm:$0xff] %v513
        %522 = vst [vmem:[#allocation2 + $0x28] sm:$0xff] %v514
        %523 = vst [vmem:[#allocation2 + $0x30] sm:$0xff] %v515
        %524 = vst [vmem:[#allocation2 + $0x38] sm:$0xff] %v516
        %p525 = scmp.eq.s32.totalorder %s21, 8
        // Predicated region
        $region78: #{_lambda_.11} parent=68 // pred_check
          %p526 = pneg %p525
        $region79: #{_lambda_.11} parent=68 // pred_check_branch
          %528 = sbr.rel (%p526) target = $region81
        $region80: #{_lambda_.11} parent=68 // pred_region
          %v529 = vld [vmem:[#allocation2] sm:$0xff]
          %v530 = vld [vmem:[#allocation2 + $0x8] sm:$0xff]
          %v531 = vld [vmem:[#allocation2 + $0x10] sm:$0xff]
          %v532 = vld [vmem:[#allocation2 + $0x18] sm:$0xff]
          %v533 = vld [vmem:[#allocation2 + $0x20] sm:$0xff]
          %v534 = vld [vmem:[#allocation2 + $0x28] sm:$0xff]
          %v535 = vld [vmem:[#allocation2 + $0x30] sm:$0xff]
          %v536 = vld [vmem:[#allocation2 + $0x38] sm:$0xff]
          %v537 = vld [vmem:[%s309] sm:$0x3]
          %v539 = vlaneseq
          %v540 = vshrl.u32 %v539, 7
          %v541 = vsub.s32 0, %v540
          %v542 = vrot.slane %v537, %v541
          %v543 = vlaneseq
          %v544 = vshrl.u32 %v543, 7
          %v545 = vsub.s32 1, %v544
          %v546 = vrot.slane %v537, %v545
          %v549 = vadd.f32 %v529, %v542
          %v550 = vadd.f32 %v530, %v546
          %v551 = vadd.f32 %v531, %v542
          %v552 = vadd.f32 %v532, %v546
          %v553 = vadd.f32 %v533, %v542
          %v554 = vadd.f32 %v534, %v546
          %v555 = vadd.f32 %v535, %v542
          %v556 = vadd.f32 %v536, %v546
          %v557 = vmax.f32 %v549, 0.0
          %v558 = vmax.f32 %v550, 0.0
          %v559 = vmax.f32 %v551, 0.0
          %v560 = vmax.f32 %v552, 0.0
          %v561 = vmax.f32 %v553, 0.0
          %v562 = vmax.f32 %v554, 0.0
          %v563 = vmax.f32 %v555, 0.0
          %v564 = vmax.f32 %v556, 0.0
          %v565 = vpack.c.bf16 %v559, %v557
          %v566 = vpack.c.bf16 %v560, %v558
          %v567 = vpack.c.bf16 %v563, %v561
          %v568 = vpack.c.bf16 %v564, %v562
          %v573 = vunpack.c.l.b16 %v565
          %v574 = vunpack.c.l.b16 %v566
          %v575 = vunpack.c.h.b16 %v565
          %v576 = vunpack.c.h.b16 %v566
          %v577 = vunpack.c.l.b16 %v567
          %v578 = vunpack.c.l.b16 %v568
          %v579 = vunpack.c.h.b16 %v567
          %v580 = vunpack.c.h.b16 %v568
          %v581 = vpack.c.b16 %v574, %v573
          %v582 = vpack.c.b16 %v576, %v575
          %v583 = vpack.c.b16 %v578, %v577
          %v584 = vpack.c.b16 %v580, %v579
          %589 = vst [vmem:[%s320] sm:$0xff] %v581
          %590 = vst [vmem:[%s320 + $0x8] sm:$0xff] %v582
          %591 = vst [vmem:[%s320 + $0x10] sm:$0xff] %v583
          %592 = vst [vmem:[%s320 + $0x18] sm:$0xff] %v584
        $region81: #{_lambda_.11} parent=68 // pred_fallthru
          _
        %s593 = smul.u32 4, %s19
        %s594 = smul.u32 2, %s20
        %p595 = scmp.lt.s32.totalorder %s593, 3
        %s596 = scalar_select %p595, %s593, 3
        %p597 = scmp.lt.s32.totalorder %s594, 1
        %s598 = scalar_select %p597, %s594, 1
        %s599 = smul.addr %s596, 2
        %s600 = sadd.s32 %s598, %s599
        %s601 = smul.addr %s600, 4
        %s602 = scalar_lea.vmem %s3, %s601
        // Predicated region
        $region82: #{_lambda_.11} parent=68 // pred_check
          %p603 = pneg %p135
        $region83: #{_lambda_.11} parent=68 // pred_check_branch
          %605 = sbr.rel (%p603) target = $region85
        $region84: #{_lambda_.11} parent=68 // pred_region
          %s606 = smul.u32 4, %s19
          %s607 = smul.u32 2, %s20
        $region85: #{_lambda_.11} parent=68 // pred_fallthru
          _
        // Predicated region
        $region86: #{_lambda_.11} parent=68 // pred_check
          %p608 = pneg %p135
        $region87: #{_lambda_.11} parent=68 // pred_check_branch
          %610 = sbr.rel (%p608) target = $region89
        $region88: #{_lambda_.11} parent=68 // pred_region
          %s611 = smul.u32 4, %s19
          %s612 = smul.u32 2, %s20
          %p613 = scmp.lt.s32.totalorder %s611, 3
          %s614 = scalar_select %p613, %s611, 3
          %p615 = scmp.lt.s32.totalorder %s612, 1
          %s616 = scalar_select %p615, %s612, 1
          %s617 = smul.addr %s614, 2
          %s618 = sadd.s32 %s616, %s617
          %s619 = smul.addr %s618, 4
          %s620 = scalar_lea.vmem %s3, %s619
        $region89: #{_lambda_.11} parent=68 // pred_fallthru
          _
      $region69: #{_lambda_.11} parent=5 // pred_fallthru
        _
      %p621 = scmp.le.s32.totalorder 2, %s9
      // Predicated region
      $region90: #{_lambda_.11} parent=5 // pred_check
        %p622 = pneg %p621
      $region91: #{_lambda_.11} parent=5 // pred_check_branch
        %624 = sbr.rel (%p622) target = $region93
      $region92: #{_lambda_.11} parent=5 // pred_region
        %s625 = ssub.s32 %s9, 2
      $region93: #{_lambda_.11} parent=5 // pred_fallthru
        _
    $region6: #{_lambda_.11} parent=1 // loop_footer
      %s13 = sadd.s32 1, %s9
    $region7: #{_lambda_.11} parent=1 // loop_footer_branch
      %8 = sbr.rel target = $region3
    $region8: #{_lambda_.11} parent=1 // loop_exit
      _

// kernel: _lambda_.12
$region0: #{_lambda_.12}
  #allocation0 [shape = 'u32[]', space=smem, size = 0x4, offset = 0x4, fixed_abs, tag = 'smem constant byte address 0x4 - core index']
  #allocation1 [shape = 'u32[144,128]{1,0:T(1,128)}', space=vmem, size = 0x12000, scoped, tag = 'internal scratch']
  #allocation2 [shape = 'f32[8,256]{1,0:T(8,128)}', space=vmem, size = 0x2000, scoped, tag = 'scratch operand']
  %s0 = inlined_call_operand.vmem [shape: bf16[8,2304], index: 0, kind: input, shape index: {}]
  %s1 = inlined_call_operand.vmem [shape: bf16[2304,256], index: 1, kind: input, shape index: {}]
  %s2 = inlined_call_operand.vmem [shape: f32[1,256], index: 2, kind: input, shape index: {}]
  %s3 = inlined_call_operand.vmem [shape: bf16[8,256], index: 3, kind: output, shape index: {}]
  %s4 = sld [smem:[#allocation0]]
  $region53: #{_lambda_.12} parent=0
    _
  %s6 = ssub.s32 1, %s4
  %s7 = scalar_select 0, %s6, %s4
  loop: start=0, step=1, limit=11
  $region2: #{_lambda_.12} parent=0 // loop_pre_header
    _
  $region3: #{_lambda_.12} parent=0 // loop_header
    %s9 = sphi 0, %s13
    %p10 = scmp.ge.s32.totalorder %s9, 11
    %s16 = sphi 0, %s35
    %s17 = sphi 0, %s31
    %s18 = sphi 0, %s27
    %s19 = sphi 0, %s16
    %s20 = sphi 0, %s17
    %s21 = sphi 0, %s18
    %s22 = sphi 0, %s19
    %s23 = sphi 0, %s20
    %s24 = sphi 0, %s21
    %s40 = sphi 0, %s42
    %s43 = sphi 0, %s40
    %s44 = sphi 0, %s43
    %s60 = sphi 0, %s44
    %s68 = sphi 0, %s70
    %s71 = sphi 0, %s68
    %s72 = sphi 0, %s71
    %s88 = sphi 0, %s72
    %s94 = sphi 0, %s96
    %s97 = sphi 0, %s94
    %s98 = sphi 0, %s97
    %s114 = sphi 0, %s98
    %s122 = sphi 0, %s124
    %s125 = sphi 0, %s122
    %s126 = sphi 0, %s125
    %s142 = sphi 0, %s126
  $region4: #{_lambda_.12} parent=0 // loop_header_branch
    %12 = sbr.rel (%p10) target = $region8
  $region5: #{_lambda_.12} parent=0 // loop_body
    %s14 = ssub.s32 %s9, 1
    %s15 = ssub.s32 %s9, 2
    %s25 = sadd.s32 1, %s18
    %p26 = scmp.ge.s32.totalorder %s25, 9
    %s27 = scalar_select %p26, 0, %s25
    %s28 = sadd.s32 1, %s17
    %s29 = scalar_select %p26, %s28, %s17
    %p30 = scmp.ge.s32.totalorder %s29, 1
    %s31 = scalar_select %p30, 0, %s29
    %s32 = sadd.s32 1, %s16
    %s33 = scalar_select %p30, %s32, %s16
    %p34 = scmp.ge.s32.totalorder %s33, 1
    %s35 = scalar_select %p34, 0, %s33
    %s36 = ssub.s32 %s16, %s35
    %s37 = ssub.s32 %s18, %s27
    %s38 = sor.u32 %s36, %s37
    %p39 = scmp.eq.s32.totalorder %s38, 0
    %s41 = sadd.s32 %s40, 1
    %s42 = scalar_select %p39, %s40, %s41
    %p45 = pneg %p39
    %p46 = scmp.eq.s32.totalorder %s9, 8
    %p47 = por %p45, %p46
    %p48 = scmp.ne.s32.totalorder %s40, %s43
    %p49 = scmp.eq.s32.totalorder %s9, 0
    %p50 = por %p48, %p49
    %p51 = scmp.ne.s32.totalorder %s40, %s43
    %p52 = scmp.eq.s32.totalorder %s14, 8
    %p53 = por %p51, %p52
    %p54 = scmp.ne.s32.totalorder %s43, %s44
    %p55 = scmp.eq.s32.totalorder %s14, 0
    %p56 = por %p54, %p55
    %p57 = scmp.ne.s32.totalorder %s43, %s44
    %p58 = scmp.eq.s32.totalorder %s15, 8
    %p59 = por %p57, %p58
    %p61 = scmp.ne.s32.totalorder %s44, %s60
    %p62 = scmp.eq.s32.totalorder %s15, 0
    %p63 = por %p61, %p62
    %s64 = ssub.s32 %s18, %s27
    %s65 = ssub.s32 %s17, %s31
    %s66 = sor.u32 %s64, %s65
    %p67 = scmp.eq.s32.totalorder %s66, 0
    %s69 = sadd.s32 %s68, 1
    %s70 = scalar_select %p67, %s68, %s69
    %p73 = pneg %p67
    %p74 = scmp.eq.s32.totalorder %s9, 8
    %p75 = por %p73, %p74
    %p76 = scmp.ne.s32.totalorder %s68, %s71
    %p77 = scmp.eq.s32.totalorder %s9, 0
    %p78 = por %p76, %p77
    %p79 = scmp.ne.s32.totalorder %s68, %s71
    %p80 = scmp.eq.s32.totalorder %s14, 8
    %p81 = por %p79, %p80
    %p82 = scmp.ne.s32.totalorder %s71, %s72
    %p83 = scmp.eq.s32.totalorder %s14, 0
    %p84 = por %p82, %p83
    %p85 = scmp.ne.s32.totalorder %s71, %s72
    %p86 = scmp.eq.s32.totalorder %s15, 8
    %p87 = por %p85, %p86
    %p89 = scmp.ne.s32.totalorder %s72, %s88
    %p90 = scmp.eq.s32.totalorder %s15, 0
    %p91 = por %p89, %p90
    %s92 = ssub.s32 %s17, %s31
    %p93 = scmp.eq.s32.totalorder %s92, 0
    %s95 = sadd.s32 %s94, 1
    %s96 = scalar_select %p93, %s94, %s95
    %p99 = pneg %p93
    %p100 = scmp.eq.s32.totalorder %s9, 8
    %p101 = por %p99, %p100
    %p102 = scmp.ne.s32.totalorder %s94, %s97
    %p103 = scmp.eq.s32.totalorder %s9, 0
    %p104 = por %p102, %p103
    %p105 = scmp.ne.s32.totalorder %s94, %s97
    %p106 = scmp.eq.s32.totalorder %s14, 8
    %p107 = por %p105, %p106
    %p108 = scmp.ne.s32.totalorder %s97, %s98
    %p109 = scmp.eq.s32.totalorder %s14, 0
    %p110 = por %p108, %p109
    %p111 = scmp.ne.s32.totalorder %s97, %s98
    %p112 = scmp.eq.s32.totalorder %s15, 8
    %p113 = por %p111, %p112
    %p115 = scmp.ne.s32.totalorder %s98, %s114
    %p116 = scmp.eq.s32.totalorder %s15, 0
    %p117 = por %p115, %p116
    %s118 = ssub.s32 %s16, %s35
    %s119 = ssub.s32 %s17, %s31
    %s120 = sor.u32 %s118, %s119
    %p121 = scmp.eq.s32.totalorder %s120, 0
    %s123 = sadd.s32 %s122, 1
    %s124 = scalar_select %p121, %s122, %s123
    %p127 = pneg %p121
    %p128 = scmp.eq.s32.totalorder %s9, 8
    %p129 = por %p127, %p128
    %p130 = scmp.ne.s32.totalorder %s122, %s125
    %p131 = scmp.eq.s32.totalorder %s9, 0
    %p132 = por %p130, %p131
    %p133 = scmp.ne.s32.totalorder %s122, %s125
    %p134 = scmp.eq.s32.totalorder %s14, 8
    %p135 = por %p133, %p134
    %p136 = scmp.ne.s32.totalorder %s125, %s126
    %p137 = scmp.eq.s32.totalorder %s14, 0
    %p138 = por %p136, %p137
    %p139 = scmp.ne.s32.totalorder %s125, %s126
    %p140 = scmp.eq.s32.totalorder %s15, 8
    %p141 = por %p139, %p140
    %p143 = scmp.ne.s32.totalorder %s126, %s142
    %p144 = scmp.eq.s32.totalorder %s15, 0
    %p145 = por %p143, %p144
    %p146 = scmp.le.s32.totalorder 1, %s9
    %p147 = scmp.lt.s32.totalorder %s9, 10
    %p148 = pnand %p146, %p147
    %p149 = pneg %p148
    // Predicated region
    $region9: #{_lambda_.12} parent=5 // pred_check
      _
    $region10: #{_lambda_.12} parent=5 // pred_check_branch
      %151 = sbr.rel (%p148) target = $region12
    $region11: #{_lambda_.12} parent=5 // pred_region
      %s152 = ssub.s32 %s9, 1
      // Predicated region
      $region13: #{_lambda_.12} parent=11 // pred_check
        %p153 = pneg %p110
      $region14: #{_lambda_.12} parent=11 // pred_check_branch
        %155 = sbr.rel (%p153) target = $region16
      $region15: #{_lambda_.12} parent=11 // pred_region
        %s156 = smul.u32 2, %s20
        %p157 = scmp.lt.s32.totalorder %s156, 1
        %s158 = scalar_select %p157, %s156, 1
        %s159 = scalar_lea.vmem %s2, %s158
        %s160 = smul.u32 2, %s20
      $region16: #{_lambda_.12} parent=11 // pred_fallthru
        _
    $region12: #{_lambda_.12} parent=5 // pred_fallthru
      _
    %p161 = scmp.lt.s32.totalorder %s9, 9
    // Predicated region
    $region17: #{_lambda_.12} parent=5 // pred_check
      %p162 = pneg %p161
    $region18: #{_lambda_.12} parent=5 // pred_check_branch
      %164 = sbr.rel (%p162) target = $region20
    $region19: #{_lambda_.12} parent=5 // pred_region
      // Predicated region
      $region21: #{_lambda_.12} parent=19 // pred_check
        %p165 = pneg %p50
      $region22: #{_lambda_.12} parent=19 // pred_check_branch
        %167 = sbr.rel (%p165) target = $region24
      $region23: #{_lambda_.12} parent=19 // pred_region
        %s168 = smul.u32 2, %s18
        %p169 = scmp.lt.s32.totalorder %s16, 0
        %s170 = scalar_select %p169, %s16, 0
        %p171 = scmp.lt.s32.totalorder %s168, 17
        %s172 = scalar_select %p171, %s168, 17
        %s173 = smul.addr %s170, 18
        %s174 = sadd.s32 %s172, %s173
        %s175 = smul.addr %s174, 4
        %s176 = scalar_lea.vmem %s0, %s175
        %s177 = smul.u32 2, %s18
      $region24: #{_lambda_.12} parent=19 // pred_fallthru
        _
      // Predicated region
      $region25: #{_lambda_.12} parent=19 // pred_check
        %p178 = pneg %p78
      $region26: #{_lambda_.12} parent=19 // pred_check_branch
        %180 = sbr.rel (%p178) target = $region28
      $region27: #{_lambda_.12} parent=19 // pred_region
        %s181 = smul.u32 32, %s18
        %s182 = smul.u32 2, %s17
        %p183 = scmp.lt.s32.totalorder %s181, 287
        %s184 = scalar_select %p183, %s181, 287
        %p185 = scmp.lt.s32.totalorder %s182, 1
        %s186 = scalar_select %p185, %s182, 1
        %s187 = smul.addr %s184, 2
        %s188 = sadd.s32 %s186, %s187
        %s189 = smul.addr %s188, 4
        %s190 = scalar_lea.vmem %s1, %s189
        %s191 = smul.u32 32, %s18
        %s192 = smul.u32 2, %s17
      $region28: #{_lambda_.12} parent=19 // pred_fallthru
        _
    $region20: #{_lambda_.12} parent=5 // pred_fallthru
      _
    %p193 = scmp.le.s32.totalorder 1, %s9
    %p194 = scmp.lt.s32.totalorder %s9, 10
    %p195 = pnand %p193, %p194
    %p196 = pneg %p195
    // Predicated region
    $region29: #{_lambda_.12} parent=5 // pred_check
      _
    $region30: #{_lambda_.12} parent=5 // pred_check_branch
      %198 = sbr.rel (%p195) target = $region32
    $region31: #{_lambda_.12} parent=5 // pred_region
      %s199 = ssub.s32 %s9, 1
      %s200 = smul.u32 2, %s21
      %p201 = scmp.lt.s32.totalorder %s19, 0
      %s202 = scalar_select %p201, %s19, 0
      %p203 = scmp.lt.s32.totalorder %s200, 17
      %s204 = scalar_select %p203, %s200, 17
      %s205 = smul.addr %s202, 18
      %s206 = sadd.s32 %s204, %s205
      %s207 = smul.addr %s206, 4
      %s208 = scalar_lea.vmem %s0, %s207
      %p209 = pneg %p56
      %p210 = pneg %p53
      %s211 = smul.u32 32, %s21
      %s212 = smul.u32 2, %s20
      %p213 = scmp.lt.s32.totalorder %s211, 287
      %s214 = scalar_select %p213, %s211, 287
      %p215 = scmp.lt.s32.totalorder %s212, 1
      %s216 = scalar_select %p215, %s212, 1
      %s217 = smul.addr %s214, 2
      %s218 = sadd.s32 %s216, %s217
      %s219 = smul.addr %s218, 4
      %s220 = scalar_lea.vmem %s1, %s219
      %p221 = pneg %p84
      %p222 = pneg %p81
      %s223 = smul.u32 2, %s20
      %p224 = scmp.lt.s32.totalorder %s223, 1
      %s225 = scalar_select %p224, %s223, 1
      %s226 = scalar_lea.vmem %s2, %s225
      %p227 = pneg %p110
      %p228 = pneg %p107
      %p229 = pneg %p138
      %p230 = pneg %p135
      %s231 = smul.u32 2, %s20
      %p232 = scmp.lt.s32.totalorder %s19, 0
      %s233 = scalar_select %p232, %s19, 0
      %p234 = scmp.lt.s32.totalorder %s231, 1
      %s235 = scalar_select %p234, %s231, 1
      %s236 = smul.addr %s233, 2
      %s237 = sadd.s32 %s235, %s236
      %s238 = smul.addr %s237, 4
      %s239 = scalar_lea.vmem %s3, %s238
      %s240 = smul.u32 2, %s21
      %p241 = scmp.lt.s32.totalorder %s19, 0
      %s242 = scalar_select %p241, %s19, 0
      %p243 = scmp.lt.s32.totalorder %s240, 17
      %s244 = scalar_select %p243, %s240, 17
      %s245 = smul.addr %s242, 18
      %s246 = sadd.s32 %s244, %s245
      %s247 = smul.addr %s246, 4
      %s248 = scalar_lea.vmem %s0, %s247
      %s249 = smul.u32 2, %s21
      %s250 = smul.u32 32, %s21
      %s251 = smul.u32 2, %s20
      %p252 = scmp.lt.s32.totalorder %s250, 287
      %s253 = scalar_select %p252, %s250, 287
      %p254 = scmp.lt.s32.totalorder %s251, 1
      %s255 = scalar_select %p254, %s251, 1
      %s256 = smul.addr %s253, 2
      %s257 = sadd.s32 %s255, %s256
      %s258 = smul.addr %s257, 4
      %s259 = scalar_lea.vmem %s1, %s258
      %s260 = smul.u32 32, %s21
      %s261 = smul.u32 2, %s20
      %s262 = smul.u32 2, %s20
      %p263 = scmp.lt.s32.totalorder %s262, 1
      %s264 = scalar_select %p263, %s262, 1
      %s265 = scalar_lea.vmem %s2, %s264
      %s266 = smul.u32 2, %s20
      %s267 = smul.u32 2, %s20
      %p268 = scmp.lt.s32.totalorder %s19, 0
      %s269 = scalar_select %p268, %s19, 0
      %p270 = scmp.lt.s32.totalorder %s267, 1
      %s271 = scalar_select %p270, %s267, 1
      %s272 = smul.addr %s269, 2
      %s273 = sadd.s32 %s271, %s272
      %s274 = smul.addr %s273, 4
      %s275 = scalar_lea.vmem %s3, %s274
      %s276 = smul.u32 2, %s20
      %p277 = scmp.eq.s32.totalorder %s21, 0
      // Predicated region
      $region33: #{_lambda_.12} parent=31 // pred_check
        %p278 = pneg %p277
      $region34: #{_lambda_.12} parent=31 // pred_check_branch
        %280 = sbr.rel (%p278) target = $region36
      $region35: #{_lambda_.12} parent=31 // pred_region
        %281 = vst [vmem:[#allocation2] sm:$0xff] 0.0
        %282 = vst [vmem:[#allocation2 + $0x8] sm:$0xff] 0.0
      $region36: #{_lambda_.12} parent=31 // pred_fallthru
        _
      %v283 = vld [vmem:[#allocation2] sm:$0xff]
      %v284 = vld [vmem:[#allocation2 + $0x8] sm:$0xff]
      %v285 = vld [vmem:[%s248] sm:$0xff]
      %v286 = vld [vmem:[%s259] sm:$0xff]
      %v287 = vld [vmem:[%s259 + $0x8] sm:$0xff]
      %v288 = vld [vmem:[%s259 + $0x10] sm:$0xff]
      %v289 = vld [vmem:[%s259 + $0x18] sm:$0xff]
      %v290 = vld [vmem:[%s259 + $0x20] sm:$0xff]
      %v291 = vld [vmem:[%s259 + $0x28] sm:$0xff]
      %v292 = vld [vmem:[%s259 + $0x30] sm:$0xff]
      %v293 = vld [vmem:[%s259 + $0x38] sm:$0xff]
      %v294 = vld [vmem:[%s259 + $0x40] sm:$0xff]
      %v295 = vld [vmem:[%s259 + $0x48] sm:$0xff]
      %v296 = vld [vmem:[%s259 + $0x50] sm:$0xff]
      %v297 = vld [vmem:[%s259 + $0x58] sm:$0xff]
      %v298 = vld [vmem:[%s259 + $0x60] sm:$0xff]
      %v299 = vld [vmem:[%s259 + $0x68] sm:$0xff]
      %v300 = vld [vmem:[%s259 + $0x70] sm:$0xff]
      %v301 = vld [vmem:[%s259 + $0x78] sm:$0xff]
      %v302 = vld [vmem:[%s259 + $0x80] sm:$0xff]
      %v303 = vld [vmem:[%s259 + $0x88] sm:$0xff]
      %v304 = vld [vmem:[%s259 + $0x90] sm:$0xff]
      %v305 = vld [vmem:[%s259 + $0x98] sm:$0xff]
      %v306 = vld [vmem:[%s259 + $0xa0] sm:$0xff]
      %v307 = vld [vmem:[%s259 + $0xa8] sm:$0xff]
      %v308 = vld [vmem:[%s259 + $0xb0] sm:$0xff]
      %v309 = vld [vmem:[%s259 + $0xb8] sm:$0xff]
      %v310 = vld [vmem:[%s259 + $0xc0] sm:$0xff]
      %v311 = vld [vmem:[%s259 + $0xc8] sm:$0xff]
      %v312 = vld [vmem:[%s259 + $0xd0] sm:$0xff]
      %v313 = vld [vmem:[%s259 + $0xd8] sm:$0xff]
      %v314 = vld [vmem:[%s259 + $0xe0] sm:$0xff]
      %v315 = vld [vmem:[%s259 + $0xe8] sm:$0xff]
      %v316 = vld [vmem:[%s259 + $0xf0] sm:$0xff]
      %v317 = vld [vmem:[%s259 + $0xf8] sm:$0xff]
      %v319 = vunpack.c.l.b16 %v285
      %v320 = vunpack.c.h.b16 %v285
      %v321 = vpack.c.b16 %v319, %v319
      %v322 = vpack.c.b16 %v320, %v320
      %v357 = vunpack.c.l.b16 %v286
      %v358 = vunpack.c.h.b16 %v286
      %v359 = vunpack.c.l.b16 %v287
      %v360 = vunpack.c.h.b16 %v287
      %v361 = vunpack.c.l.b16 %v288
      %v362 = vunpack.c.h.b16 %v288
      %v363 = vunpack.c.l.b16 %v289
      %v364 = vunpack.c.h.b16 %v289
      %v365 = vunpack.c.l.b16 %v290
      %v366 = vunpack.c.h.b16 %v290
      %v367 = vunpack.c.l.b16 %v291
      %v368 = vunpack.c.h.b16 %v291
      %v369 = vunpack.c.l.b16 %v292
      %v370 = vunpack.c.h.b16 %v292
      %v371 = vunpack.c.l.b16 %v293
      %v372 = vunpack.c.h.b16 %v293
      %v373 = vunpack.c.l.b16 %v294
      %v374 = vunpack.c.h.b16 %v294
      %v375 = vunpack.c.l.b16 %v295
      %v376 = vunpack.c.h.b16 %v295
      %v377 = vunpack.c.l.b16 %v296
      %v378 = vunpack.c.h.b16 %v296
      %v379 = vunpack.c.l.b16 %v297
      %v380 = vunpack.c.h.b16 %v297
      %v381 = vunpack.c.l.b16 %v298
      %v382 = vunpack.c.h.b16 %v298
      %v383 = vunpack.c.l.b16 %v299
      %v384 = vunpack.c.h.b16 %v299
      %v385 = vunpack.c.l.b16 %v300
      %v386 = vunpack.c.h.b16 %v300
      %v387 = vunpack.c.l.b16 %v301
      %v388 = vunpack.c.h.b16 %v301
      %v389 = vunpack.c.l.b16 %v302
      %v390 = vunpack.c.h.b16 %v302
      %v391 = vunpack.c.l.b16 %v303
      %v392 = vunpack.c.h.b16 %v303
      %v393 = vunpack.c.l.b16 %v304
      %v394 = vunpack.c.h.b16 %v304
      %v395 = vunpack.c.l.b16 %v305
      %v396 = vunpack.c.h.b16 %v305
      %v397 = vunpack.c.l.b16 %v306
      %v398 = vunpack.c.h.b16 %v306
      %v399 = vunpack.c.l.b16 %v307
      %v400 = vunpack.c.h.b16 %v307
      %v401 = vunpack.c.l.b16 %v308
      %v402 = vunpack.c.h.b16 %v308
      %v403 = vunpack.c.l.b16 %v309
      %v404 = vunpack.c.h.b16 %v309
      %v405 = vunpack.c.l.b16 %v310
      %v406 = vunpack.c.h.b16 %v310
      %v407 = vunpack.c.l.b16 %v311
      %v408 = vunpack.c.h.b16 %v311
      %v409 = vunpack.c.l.b16 %v312
      %v410 = vunpack.c.h.b16 %v312
      %v411 = vunpack.c.l.b16 %v313
      %v412 = vunpack.c.h.b16 %v313
      %v413 = vunpack.c.l.b16 %v314
      %v414 = vunpack.c.h.b16 %v314
      %v415 = vunpack.c.l.b16 %v315
      %v416 = vunpack.c.h.b16 %v315
      %v417 = vunpack.c.l.b16 %v316
      %v418 = vunpack.c.h.b16 %v316
      %v419 = vunpack.c.l.b16 %v317
      %v420 = vunpack.c.h.b16 %v317
      %v421 = vpack.c.b16 %v359, %v357
      %v422 = vpack.c.b16 %v360, %v358
      %v423 = vpack.c.b16 %v363, %v361
      %v424 = vpack.c.b16 %v364, %v362
      %v425 = vpack.c.b16 %v367, %v365
      %v426 = vpack.c.b16 %v368, %v366
      %v427 = vpack.c.b16 %v371, %v369
      %v428 = vpack.c.b16 %v372, %v370
      %v429 = vpack.c.b16 %v375, %v373
      %v430 = vpack.c.b16 %v376, %v374
      %v431 = vpack.c.b16 %v379, %v377
      %v432 = vpack.c.b16 %v380, %v378
      %v433 = vpack.c.b16 %v383, %v381
      %v434 = vpack.c.b16 %v384, %v382
      %v435 = vpack.c.b16 %v387, %v385
      %v436 = vpack.c.b16 %v388, %v386
      %v437 = vpack.c.b16 %v391, %v389
      %v438 = vpack.c.b16 %v392, %v390
      %v439 = vpack.c.b16 %v395, %v393
      %v440 = vpack.c.b16 %v396, %v394
      %v441 = vpack.c.b16 %v399, %v397
      %v442 = vpack.c.b16 %v400, %v398
      %v443 = vpack.c.b16 %v403, %v401
      %v444 = vpack.c.b16 %v404, %v402
      %v445 = vpack.c.b16 %v407, %v405
      %v446 = vpack.c.b16 %v408, %v406
      %v447 = vpack.c.b16 %v411, %v409
      %v448 = vpack.c.b16 %v412, %v410
      %v449 = vpack.c.b16 %v415, %v413
      %v450 = vpack.c.b16 %v416, %v414
      %v451 = vpack.c.b16 %v419, %v417
      %v452 = vpack.c.b16 %v420, %v418
      %485 = vmatprep.subr.bf16.mxu0 %v422
      %486 = vmatpush1.bf16.msra.mxu0 %v421
      %487 = vmatprep.subr.bf16.mxu0 %v424
      %488 = vmatpush1.bf16.msra.mxu0 %v423
      %489 = vmatprep.subr.bf16.mxu0 %v426
      %490 = vmatpush1.bf16.msra.mxu0 %v425
      %491 = vmatprep.subr.bf16.mxu0 %v428
      %492 = vmatpush1.bf16.msra.mxu0 %v427
      %493 = vmatprep.subr.bf16.mxu0 %v430
      %494 = vmatpush1.bf16.msra.mxu0 %v429
      %495 = vmatprep.subr.bf16.mxu0 %v432
      %496 = vmatpush1.bf16.msra.mxu0 %v431
      %497 = vmatprep.subr.bf16.mxu0 %v434
      %498 = vmatpush1.bf16.msra.mxu0 %v433
      %499 = vmatprep.subr.bf16.mxu0 %v436
      %500 = vmatpush1.bf16.msra.mxu0 %v435
      %501 = vmatprep.subr.bf16.mxu0 %v438
      %502 = vmatpush1.bf16.msra.mxu0 %v437
      %503 = vmatprep.subr.bf16.mxu0 %v440
      %504 = vmatpush1.bf16.msra.mxu0 %v439
      %505 = vmatprep.subr.bf16.mxu0 %v442
      %506 = vmatpush1.bf16.msra.mxu0 %v441
      %507 = vmatprep.subr.bf16.mxu0 %v444
      %508 = vmatpush1.bf16.msra.mxu0 %v443
      %509 = vmatprep.subr.bf16.mxu0 %v446
      %510 = vmatpush1.bf16.msra.mxu0 %v445
      %511 = vmatprep.subr.bf16.mxu0 %v448
      %512 = vmatpush1.bf16.msra.mxu0 %v447
      %513 = vmatprep.subr.bf16.mxu0 %v450
      %514 = vmatpush1.bf16.msra.mxu0 %v449
      %515 = vmatprep.subr.bf16.mxu0 %v452
      %516 = vmatpush1.bf16.msra.mxu0 %v451
      %517 = vmatprep.mubr.bf16.mxu0 %v322
      %518 = vmatmul.mubr.bf16.gmra.mrb[0].mxu0 %v321
      %v519 = vpop.f32.mrb[0].mxu0
      %v520 = vadd.f32 0.0, %v519
      %v521 = vpop.f32.mrb[0].mxu0
      %v522 = vadd.f32 0.0, %v521
      %v523 = vpop.f32.mrb[0].mxu0
      %v524 = vpop.f32.mrb[0].mxu0
      %525 = vdwg.mxu0
      %v526 = vadd.f32 %v283, %v520
      %v527 = vadd.f32 %v284, %v522
      %528 = vst [vmem:[#allocation2] sm:$0xff] %v526
      %529 = vst [vmem:[#allocation2 + $0x8] sm:$0xff] %v527
      %p530 = scmp.eq.s32.totalorder %s21, 8
      // Predicated region
      $region37: #{_lambda_.12} parent=31 // pred_check
        %p531 = pneg %p530
      $region38: #{_lambda_.12} parent=31 // pred_check_branch
        %533 = sbr.rel (%p531) target = $region40
      $region39: #{_lambda_.12} parent=31 // pred_region
        %v534 = vld [vmem:[#allocation2] sm:$0xff]
        %v535 = vld [vmem:[#allocation2 + $0x8] sm:$0xff]
        %v536 = vld [vmem:[%s265] sm:$0x3]
        %v538 = vlaneseq
        %v539 = vshrl.u32 %v538, 7
        %v540 = vsub.s32 0, %v539
        %v541 = vrot.slane %v536, %v540
        %v542 = vlaneseq
        %v543 = vshrl.u32 %v542, 7
        %v544 = vsub.s32 1, %v543
        %v545 = vrot.slane %v536, %v544
        %v548 = vadd.f32 %v534, %v541
        %v549 = vadd.f32 %v535, %v545
        %v550 = vmax.f32 %v548, 0.0
        %v551 = vmax.f32 %v549, 0.0
        %v552 = vpack.c.bf16 %v550, %v550
        %v553 = vpack.c.bf16 %v551, %v551
        %v556 = vunpack.c.l.b16 %v552
        %v557 = vunpack.c.l.b16 %v553
        %v558 = vpack.c.b16 %v557, %v556
        %560 = vst [vmem:[%s275] sm:$0xff] %v558
      $region40: #{_lambda_.12} parent=31 // pred_fallthru
        _
      %s561 = smul.u32 2, %s20
      %p562 = scmp.lt.s32.totalorder %s19, 0
      %s563 = scalar_select %p562, %s19, 0
      %p564 = scmp.lt.s32.totalorder %s561, 1
      %s565 = scalar_select %p564, %s561, 1
      %s566 = smul.addr %s563, 2
      %s567 = sadd.s32 %s565, %s566
      %s568 = smul.addr %s567, 4
      %s569 = scalar_lea.vmem %s3, %s568
      // Predicated region
      $region41: #{_lambda_.12} parent=31 // pred_check
        %p570 = pneg %p135
      $region42: #{_lambda_.12} parent=31 // pred_check_branch
        %572 = sbr.rel (%p570) target = $region44
      $region43: #{_lambda_.12} parent=31 // pred_region
        %s573 = smul.u32 2, %s20
      $region44: #{_lambda_.12} parent=31 // pred_fallthru
        _
      // Predicated region
      $region45: #{_lambda_.12} parent=31 // pred_check
        %p574 = pneg %p135
      $region46: #{_lambda_.12} parent=31 // pred_check_branch
        %576 = sbr.rel (%p574) target = $region48
      $region47: #{_lambda_.12} parent=31 // pred_region
        %s577 = smul.u32 2, %s20
        %p578 = scmp.lt.s32.totalorder %s19, 0
        %s579 = scalar_select %p578, %s19, 0
        %p580 = scmp.lt.s32.totalorder %s577, 1
        %s581 = scalar_select %p580, %s577, 1
        %s582 = smul.addr %s579, 2
        %s583 = sadd.s32 %s581, %s582
        %s584 = smul.addr %s583, 4
        %s585 = scalar_lea.vmem %s3, %s584
      $region48: #{_lambda_.12} parent=31 // pred_fallthru
        _
    $region32: #{_lambda_.12} parent=5 // pred_fallthru
      _
    %p586 = scmp.le.s32.totalorder 2, %s9
    // Predicated region
    $region49: #{_lambda_.12} parent=5 // pred_check
      %p587 = pneg %p586
    $region50: #{_lambda_.12} parent=5 // pred_check_branch
      %589 = sbr.rel (%p587) target = $region52
    $region51: #{_lambda_.12} parent=5 // pred_region
      %s590 = ssub.s32 %s9, 2
    $region52: #{_lambda_.12} parent=5 // pred_fallthru
      _
  $region6: #{_lambda_.12} parent=0 // loop_footer
    %s13 = sadd.s32 1, %s9
  $region7: #{_lambda_.12} parent=0 // loop_footer_branch
    %8 = sbr.rel target = $region3
  $region8: #{_lambda_.12} parent=0 // loop_exit
    _

// kernel: _lambda_.13
$region0: #{_lambda_.13}
  #allocation0 [shape = 'u32[]', space=smem, size = 0x4, offset = 0x4, fixed_abs, tag = 'smem constant byte address 0x4 - core index']
  #allocation1 [shape = 'u32[144,128]{1,0:T(1,128)}', space=vmem, size = 0x12000, scoped, tag = 'internal scratch']
  #allocation2 [shape = 'f32[8,256]{1,0:T(8,128)}', space=vmem, size = 0x2000, scoped, tag = 'scratch operand']
  %s0 = inlined_call_operand.vmem [shape: bf16[8,2304], index: 0, kind: input, shape index: {}]
  %s1 = inlined_call_operand.vmem [shape: bf16[2304,512], index: 1, kind: input, shape index: {}]
  %s2 = inlined_call_operand.vmem [shape: f32[1,512], index: 2, kind: input, shape index: {}]
  %s3 = inlined_call_operand.vmem [shape: bf16[8,512], index: 3, kind: output, shape index: {}]
  %s4 = sld [smem:[#allocation0]]
  $region91: #{_lambda_.13} parent=0
    _
  %s6 = ssub.s32 1, %s4
  %s7 = scalar_select 0, %s6, %s4
  $region1: #{_lambda_.13} parent=0
    #allocation3 [shape = 'u8[262144]{0}', space=vmem, size = 0x40000, scoped, tag = 'input window, operand 1']
    loop: start=0, step=1, limit=20
    $region2: #{_lambda_.13} parent=1 // loop_pre_header
      _
    $region3: #{_lambda_.13} parent=1 // loop_header
      %s9 = sphi 0, %s13
      %p10 = scmp.ge.s32.totalorder %s9, 20
      %s16 = sphi 0, %s35
      %s17 = sphi 0, %s31
      %s18 = sphi 0, %s27
      %s19 = sphi 0, %s16
      %s20 = sphi 0, %s17
      %s21 = sphi 0, %s18
      %s22 = sphi 0, %s19
      %s23 = sphi 0, %s20
      %s24 = sphi 0, %s21
      %s40 = sphi 0, %s42
      %s43 = sphi 0, %s40
      %s44 = sphi 0, %s43
      %s60 = sphi 0, %s44
      %s68 = sphi 0, %s70
      %s71 = sphi 0, %s68
      %s72 = sphi 0, %s71
      %s88 = sphi 0, %s72
      %s94 = sphi 0, %s96
      %s97 = sphi 0, %s94
      %s98 = sphi 0, %s97
      %s114 = sphi 0, %s98
      %s122 = sphi 0, %s124
      %s125 = sphi 0, %s122
      %s126 = sphi 0, %s125
      %s142 = sphi 0, %s126
    $region4: #{_lambda_.13} parent=1 // loop_header_branch
      %12 = sbr.rel (%p10) target = $region8
    $region5: #{_lambda_.13} parent=1 // loop_body
      %s14 = ssub.s32 %s9, 1
      %s15 = ssub.s32 %s9, 2
      %s25 = sadd.s32 1, %s18
      %p26 = scmp.ge.s32.totalorder %s25, 9
      %s27 = scalar_select %p26, 0, %s25
      %s28 = sadd.s32 1, %s17
      %s29 = scalar_select %p26, %s28, %s17
      %p30 = scmp.ge.s32.totalorder %s29, 2
      %s31 = scalar_select %p30, 0, %s29
      %s32 = sadd.s32 1, %s16
      %s33 = scalar_select %p30, %s32, %s16
      %p34 = scmp.ge.s32.totalorder %s33, 1
      %s35 = scalar_select %p34, 0, %s33
      %s36 = ssub.s32 %s16, %s35
      %s37 = ssub.s32 %s18, %s27
      %s38 = sor.u32 %s36, %s37
      %p39 = scmp.eq.s32.totalorder %s38, 0
      %s41 = sadd.s32 %s40, 1
      %s42 = scalar_select %p39, %s40, %s41
      %p45 = pneg %p39
      %p46 = scmp.eq.s32.totalorder %s9, 17
      %p47 = por %p45, %p46
      %p48 = scmp.ne.s32.totalorder %s40, %s43
      %p49 = scmp.eq.s32.totalorder %s9, 0
      %p50 = por %p48, %p49
      %p51 = scmp.ne.s32.totalorder %s40, %s43
      %p52 = scmp.eq.s32.totalorder %s14, 17
      %p53 = por %p51, %p52
      %p54 = scmp.ne.s32.totalorder %s43, %s44
      %p55 = scmp.eq.s32.totalorder %s14, 0
      %p56 = por %p54, %p55
      %p57 = scmp.ne.s32.totalorder %s43, %s44
      %p58 = scmp.eq.s32.totalorder %s15, 17
      %p59 = por %p57, %p58
      %p61 = scmp.ne.s32.totalorder %s44, %s60
      %p62 = scmp.eq.s32.totalorder %s15, 0
      %p63 = por %p61, %p62
      %s64 = ssub.s32 %s18, %s27
      %s65 = ssub.s32 %s17, %s31
      %s66 = sor.u32 %s64, %s65
      %p67 = scmp.eq.s32.totalorder %s66, 0
      %s69 = sadd.s32 %s68, 1
      %s70 = scalar_select %p67, %s68, %s69
      %p73 = pneg %p67
      %p74 = scmp.eq.s32.totalorder %s9, 17
      %p75 = por %p73, %p74
      %p76 = scmp.ne.s32.totalorder %s68, %s71
      %p77 = scmp.eq.s32.totalorder %s9, 0
      %p78 = por %p76, %p77
      %p79 = scmp.ne.s32.totalorder %s68, %s71
      %p80 = scmp.eq.s32.totalorder %s14, 17
      %p81 = por %p79, %p80
      %p82 = scmp.ne.s32.totalorder %s71, %s72
      %p83 = scmp.eq.s32.totalorder %s14, 0
      %p84 = por %p82, %p83
      %p85 = scmp.ne.s32.totalorder %s71, %s72
      %p86 = scmp.eq.s32.totalorder %s15, 17
      %p87 = por %p85, %p86
      %p89 = scmp.ne.s32.totalorder %s72, %s88
      %p90 = scmp.eq.s32.totalorder %s15, 0
      %p91 = por %p89, %p90
      %s92 = ssub.s32 %s17, %s31
      %p93 = scmp.eq.s32.totalorder %s92, 0
      %s95 = sadd.s32 %s94, 1
      %s96 = scalar_select %p93, %s94, %s95
      %p99 = pneg %p93
      %p100 = scmp.eq.s32.totalorder %s9, 17
      %p101 = por %p99, %p100
      %p102 = scmp.ne.s32.totalorder %s94, %s97
      %p103 = scmp.eq.s32.totalorder %s9, 0
      %p104 = por %p102, %p103
      %p105 = scmp.ne.s32.totalorder %s94, %s97
      %p106 = scmp.eq.s32.totalorder %s14, 17
      %p107 = por %p105, %p106
      %p108 = scmp.ne.s32.totalorder %s97, %s98
      %p109 = scmp.eq.s32.totalorder %s14, 0
      %p110 = por %p108, %p109
      %p111 = scmp.ne.s32.totalorder %s97, %s98
      %p112 = scmp.eq.s32.totalorder %s15, 17
      %p113 = por %p111, %p112
      %p115 = scmp.ne.s32.totalorder %s98, %s114
      %p116 = scmp.eq.s32.totalorder %s15, 0
      %p117 = por %p115, %p116
      %s118 = ssub.s32 %s16, %s35
      %s119 = ssub.s32 %s17, %s31
      %s120 = sor.u32 %s118, %s119
      %p121 = scmp.eq.s32.totalorder %s120, 0
      %s123 = sadd.s32 %s122, 1
      %s124 = scalar_select %p121, %s122, %s123
      %p127 = pneg %p121
      %p128 = scmp.eq.s32.totalorder %s9, 17
      %p129 = por %p127, %p128
      %p130 = scmp.ne.s32.totalorder %s122, %s125
      %p131 = scmp.eq.s32.totalorder %s9, 0
      %p132 = por %p130, %p131
      %p133 = scmp.ne.s32.totalorder %s122, %s125
      %p134 = scmp.eq.s32.totalorder %s14, 17
      %p135 = por %p133, %p134
      %p136 = scmp.ne.s32.totalorder %s125, %s126
      %p137 = scmp.eq.s32.totalorder %s14, 0
      %p138 = por %p136, %p137
      %p139 = scmp.ne.s32.totalorder %s125, %s126
      %p140 = scmp.eq.s32.totalorder %s15, 17
      %p141 = por %p139, %p140
      %p143 = scmp.ne.s32.totalorder %s126, %s142
      %p144 = scmp.eq.s32.totalorder %s15, 0
      %p145 = por %p143, %p144
      %p146 = scmp.le.s32.totalorder 1, %s9
      %p147 = scmp.lt.s32.totalorder %s9, 19
      %p148 = pnand %p146, %p147
      %p149 = pneg %p148
      // Predicated region
      $region9: #{_lambda_.13} parent=5 // pred_check
        _
      $region10: #{_lambda_.13} parent=5 // pred_check_branch
        %151 = sbr.rel (%p148) target = $region12
      $region11: #{_lambda_.13} parent=5 // pred_region
        %s152 = ssub.s32 %s9, 1
      $region12: #{_lambda_.13} parent=5 // pred_fallthru
        _
      %p153 = scmp.lt.s32.totalorder %s9, 18
      // Predicated region
      $region13: #{_lambda_.13} parent=5 // pred_check
        %p154 = pneg %p153
      $region14: #{_lambda_.13} parent=5 // pred_check_branch
        %156 = sbr.rel (%p154) target = $region16
      $region15: #{_lambda_.13} parent=5 // pred_region
        // Predicated region
        $region17: #{_lambda_.13} parent=15 // pred_check
          %p157 = pneg %p50
        $region18: #{_lambda_.13} parent=15 // pred_check_branch
          %159 = sbr.rel (%p157) target = $region20
        $region19: #{_lambda_.13} parent=15 // pred_region
          %s160 = smul.u32 2, %s18
          %p161 = scmp.lt.s32.totalorder %s16, 0
          %s162 = scalar_select %p161, %s16, 0
          %p163 = scmp.lt.s32.totalorder %s160, 17
          %s164 = scalar_select %p163, %s160, 17
          %s165 = smul.addr %s162, 18
          %s166 = sadd.s32 %s164, %s165
          %s167 = smul.addr %s166, 4
          %s168 = scalar_lea.vmem %s0, %s167
          %s169 = smul.u32 2, %s18
        $region20: #{_lambda_.13} parent=15 // pred_fallthru
          _
        // Predicated region
        $region21: #{_lambda_.13} parent=15 // pred_check
          %p170 = pneg %p78
        $region22: #{_lambda_.13} parent=15 // pred_check_branch
          %172 = sbr.rel (%p170) target = $region24
        $region23: #{_lambda_.13} parent=15 // pred_region
          %s173 = sand.u32 %s68, 1
          %s174 = sand.u32 %s68, 1
          %s175 = smul.addr %s174, 256
          %s176 = scalar_lea.vmem [#allocation3], %s175
          %s177 = smul.u32 32, %s18
          %s178 = smul.u32 2, %s17
          %s179 = smul.addr %s177, 4
          %s180 = sadd.s32 %s178, %s179
          %s181 = smul.addr %s180, 4
          %s182 = scalar_lea.vmem %s1, %s181
          // Predicated region
          $region25: #{_lambda_.13} parent=23 // pred_check
            _
          $region26: #{_lambda_.13} parent=23 // pred_check_branch
            %184 = sbr.rel (0) target = $region28
          $region27: #{_lambda_.13} parent=23 // pred_region
            // Predicated region
            $region29: #{_lambda_.13} parent=27 // pred_check
              _
            $region30: #{_lambda_.13} parent=27 // pred_check_branch
              %186 = sbr.rel (0) target = $region32
            $region31: #{_lambda_.13} parent=27 // pred_region
              // Predicated region
              $region44: #{_lambda_.13} parent=31 // pred_check
                _
              $region45: #{_lambda_.13} parent=31 // pred_check_branch
                %263 = sbr.rel (0) target = $region47
              $region46: #{_lambda_.13} parent=31 // pred_region
                loop: start=0, step=1, limit=1
                $region48: #{_lambda_.13} parent=46 // loop_pre_header
                  _
                $region49: #{_lambda_.13} parent=46 // loop_header
                  %s265 = sphi 0, %s269
                  %p266 = scmp.ge.s32.totalorder %s265, 1
                  %s270 = sphi %s182, %s182
                  %s271 = sphi %s176, %s176
                $region50: #{_lambda_.13} parent=46 // loop_header_branch
                  %268 = sbr.rel (%p266) target = $region54
                $region51: #{_lambda_.13} parent=46 // loop_body
                  %v272 = vld [vmem:[%s270] sm:$0xff]
                  %273 = vst [vmem:[%s271] sm:$0xff] %v272
                  %v274 = vld [vmem:[%s270 + $0x10] sm:$0xff]
                  %275 = vst [vmem:[%s271 + $0x8] sm:$0xff] %v274
                  %v276 = vld [vmem:[%s270 + $0x20] sm:$0xff]
                  %277 = vst [vmem:[%s271 + $0x10] sm:$0xff] %v276
                  %v278 = vld [vmem:[%s270 + $0x30] sm:$0xff]
                  %279 = vst [vmem:[%s271 + $0x18] sm:$0xff] %v278
                  %v280 = vld [vmem:[%s270 + $0x40] sm:$0xff]
                  %281 = vst [vmem:[%s271 + $0x20] sm:$0xff] %v280
                  %v282 = vld [vmem:[%s270 + $0x50] sm:$0xff]
                  %283 = vst [vmem:[%s271 + $0x28] sm:$0xff] %v282
                  %v284 = vld [vmem:[%s270 + $0x60] sm:$0xff]
                  %285 = vst [vmem:[%s271 + $0x30] sm:$0xff] %v284
                  %v286 = vld [vmem:[%s270 + $0x70] sm:$0xff]
                  %287 = vst [vmem:[%s271 + $0x38] sm:$0xff] %v286
                  %v288 = vld [vmem:[%s270 + $0x80] sm:$0xff]
                  %289 = vst [vmem:[%s271 + $0x40] sm:$0xff] %v288
                  %v290 = vld [vmem:[%s270 + $0x90] sm:$0xff]
                  %291 = vst [vmem:[%s271 + $0x48] sm:$0xff] %v290
                  %v292 = vld [vmem:[%s270 + $0xa0] sm:$0xff]
                  %293 = vst [vmem:[%s271 + $0x50] sm:$0xff] %v292
                  %v294 = vld [vmem:[%s270 + $0xb0] sm:$0xff]
                  %295 = vst [vmem:[%s271 + $0x58] sm:$0xff] %v294
                  %v296 = vld [vmem:[%s270 + $0xc0] sm:$0xff]
                  %297 = vst [vmem:[%s271 + $0x60] sm:$0xff] %v296
                  %v298 = vld [vmem:[%s270 + $0xd0] sm:$0xff]
                  %299 = vst [vmem:[%s271 + $0x68] sm:$0xff] %v298
                  %v300 = vld [vmem:[%s270 + $0xe0] sm:$0xff]
                  %301 = vst [vmem:[%s271 + $0x70] sm:$0xff] %v300
                  %v302 = vld [vmem:[%s270 + $0xf0] sm:$0xff]
                  %303 = vst [vmem:[%s271 + $0x78] sm:$0xff] %v302
                  %v304 = vld [vmem:[%s270 + $0x100] sm:$0xff]
                  %305 = vst [vmem:[%s271 + $0x80] sm:$0xff] %v304
                  %v306 = vld [vmem:[%s270 + $0x110] sm:$0xff]
                  %307 = vst [vmem:[%s271 + $0x88] sm:$0xff] %v306
                  %v308 = vld [vmem:[%s270 + $0x120] sm:$0xff]
                  %309 = vst [vmem:[%s271 + $0x90] sm:$0xff] %v308
                  %v310 = vld [vmem:[%s270 + $0x130] sm:$0xff]
                  %311 = vst [vmem:[%s271 + $0x98] sm:$0xff] %v310
                  %v312 = vld [vmem:[%s270 + $0x140] sm:$0xff]
                  %313 = vst [vmem:[%s271 + $0xa0] sm:$0xff] %v312
                  %v314 = vld [vmem:[%s270 + $0x150] sm:$0xff]
                  %315 = vst [vmem:[%s271 + $0xa8] sm:$0xff] %v314
                  %v316 = vld [vmem:[%s270 + $0x160] sm:$0xff]
                  %317 = vst [vmem:[%s271 + $0xb0] sm:$0xff] %v316
                  %v318 = vld [vmem:[%s270 + $0x170] sm:$0xff]
                  %319 = vst [vmem:[%s271 + $0xb8] sm:$0xff] %v318
                  %v320 = vld [vmem:[%s270 + $0x180] sm:$0xff]
                  %321 = vst [vmem:[%s271 + $0xc0] sm:$0xff] %v320
                  %v322 = vld [vmem:[%s270 + $0x190] sm:$0xff]
                  %323 = vst [vmem:[%s271 + $0xc8] sm:$0xff] %v322
                  %v324 = vld [vmem:[%s270 + $0x1a0] sm:$0xff]
                  %325 = vst [vmem:[%s271 + $0xd0] sm:$0xff] %v324
                  %v326 = vld [vmem:[%s270 + $0x1b0] sm:$0xff]
                  %327 = vst [vmem:[%s271 + $0xd8] sm:$0xff] %v326
                  %v328 = vld [vmem:[%s270 + $0x1c0] sm:$0xff]
                  %329 = vst [vmem:[%s271 + $0xe0] sm:$0xff] %v328
                  %v330 = vld [vmem:[%s270 + $0x1d0] sm:$0xff]
                  %331 = vst [vmem:[%s271 + $0xe8] sm:$0xff] %v330
                  %v332 = vld [vmem:[%s270 + $0x1e0] sm:$0xff]
                  %333 = vst [vmem:[%s271 + $0xf0] sm:$0xff] %v332
                  %v334 = vld [vmem:[%s270 + $0x1f0] sm:$0xff]
                  %335 = vst [vmem:[%s271 + $0xf8] sm:$0xff] %v334
                $region52: #{_lambda_.13} parent=46 // loop_footer
                  %s269 = sadd.s32 1, %s265
                $region53: #{_lambda_.13} parent=46 // loop_footer_branch
                  %264 = sbr.rel target = $region49
                $region54: #{_lambda_.13} parent=46 // loop_exit
                  _
              $region47: #{_lambda_.13} parent=31 // pred_fallthru
                _
              // Predicated region
              $region55: #{_lambda_.13} parent=31 // pred_check
                _
              $region56: #{_lambda_.13} parent=31 // pred_check_branch
                %337 = sbr.rel target = $region58
              $region57: #{_lambda_.13} parent=31 // pred_region
                _
              $region58: #{_lambda_.13} parent=31 // pred_fallthru
                _
            $region32: #{_lambda_.13} parent=27 // pred_fallthru
              _
            // Predicated region
            $region33: #{_lambda_.13} parent=27 // pred_check
              _
            $region34: #{_lambda_.13} parent=27 // pred_check_branch
              %188 = sbr.rel target = $region36
            $region35: #{_lambda_.13} parent=27 // pred_region
              loop: start=0, step=1, limit=1
              $region37: #{_lambda_.13} parent=35 // loop_pre_header
                _
              $region38: #{_lambda_.13} parent=35 // loop_header
                %s191 = sphi 0, %s195
                %p192 = scmp.ge.s32.totalorder %s191, 1
                %s196 = sphi %s182, %s182
                %s197 = sphi %s176, %s176
              $region39: #{_lambda_.13} parent=35 // loop_header_branch
                %194 = sbr.rel (%p192) target = $region43
              $region40: #{_lambda_.13} parent=35 // loop_body
                %v198 = vld [vmem:[%s196] sm:$0xff]
                %199 = vst [vmem:[%s197] sm:$0xff] %v198
                %v200 = vld [vmem:[%s196 + $0x10] sm:$0xff]
                %201 = vst [vmem:[%s197 + $0x8] sm:$0xff] %v200
                %v202 = vld [vmem:[%s196 + $0x20] sm:$0xff]
                %203 = vst [vmem:[%s197 + $0x10] sm:$0xff] %v202
                %v204 = vld [vmem:[%s196 + $0x30] sm:$0xff]
                %205 = vst [vmem:[%s197 + $0x18] sm:$0xff] %v204
                %v206 = vld [vmem:[%s196 + $0x40] sm:$0xff]
                %207 = vst [vmem:[%s197 + $0x20] sm:$0xff] %v206
                %v208 = vld [vmem:[%s196 + $0x50] sm:$0xff]
                %209 = vst [vmem:[%s197 + $0x28] sm:$0xff] %v208
                %v210 = vld [vmem:[%s196 + $0x60] sm:$0xff]
                %211 = vst [vmem:[%s197 + $0x30] sm:$0xff] %v210
                %v212 = vld [vmem:[%s196 + $0x70] sm:$0xff]
                %213 = vst [vmem:[%s197 + $0x38] sm:$0xff] %v212
                %v214 = vld [vmem:[%s196 + $0x80] sm:$0xff]
                %215 = vst [vmem:[%s197 + $0x40] sm:$0xff] %v214
                %v216 = vld [vmem:[%s196 + $0x90] sm:$0xff]
                %217 = vst [vmem:[%s197 + $0x48] sm:$0xff] %v216
                %v218 = vld [vmem:[%s196 + $0xa0] sm:$0xff]
                %219 = vst [vmem:[%s197 + $0x50] sm:$0xff] %v218
                %v220 = vld [vmem:[%s196 + $0xb0] sm:$0xff]
                %221 = vst [vmem:[%s197 + $0x58] sm:$0xff] %v220
                %v222 = vld [vmem:[%s196 + $0xc0] sm:$0xff]
                %223 = vst [vmem:[%s197 + $0x60] sm:$0xff] %v222
                %v224 = vld [vmem:[%s196 + $0xd0] sm:$0xff]
                %225 = vst [vmem:[%s197 + $0x68] sm:$0xff] %v224
                %v226 = vld [vmem:[%s196 + $0xe0] sm:$0xff]
                %227 = vst [vmem:[%s197 + $0x70] sm:$0xff] %v226
                %v228 = vld [vmem:[%s196 + $0xf0] sm:$0xff]
                %229 = vst [vmem:[%s197 + $0x78] sm:$0xff] %v228
                %v230 = vld [vmem:[%s196 + $0x100] sm:$0xff]
                %231 = vst [vmem:[%s197 + $0x80] sm:$0xff] %v230
                %v232 = vld [vmem:[%s196 + $0x110] sm:$0xff]
                %233 = vst [vmem:[%s197 + $0x88] sm:$0xff] %v232
                %v234 = vld [vmem:[%s196 + $0x120] sm:$0xff]
                %235 = vst [vmem:[%s197 + $0x90] sm:$0xff] %v234
                %v236 = vld [vmem:[%s196 + $0x130] sm:$0xff]
                %237 = vst [vmem:[%s197 + $0x98] sm:$0xff] %v236
                %v238 = vld [vmem:[%s196 + $0x140] sm:$0xff]
                %239 = vst [vmem:[%s197 + $0xa0] sm:$0xff] %v238
                %v240 = vld [vmem:[%s196 + $0x150] sm:$0xff]
                %241 = vst [vmem:[%s197 + $0xa8] sm:$0xff] %v240
                %v242 = vld [vmem:[%s196 + $0x160] sm:$0xff]
                %243 = vst [vmem:[%s197 + $0xb0] sm:$0xff] %v242
                %v244 = vld [vmem:[%s196 + $0x170] sm:$0xff]
                %245 = vst [vmem:[%s197 + $0xb8] sm:$0xff] %v244
                %v246 = vld [vmem:[%s196 + $0x180] sm:$0xff]
                %247 = vst [vmem:[%s197 + $0xc0] sm:$0xff] %v246
                %v248 = vld [vmem:[%s196 + $0x190] sm:$0xff]
                %249 = vst [vmem:[%s197 + $0xc8] sm:$0xff] %v248
                %v250 = vld [vmem:[%s196 + $0x1a0] sm:$0xff]
                %251 = vst [vmem:[%s197 + $0xd0] sm:$0xff] %v250
                %v252 = vld [vmem:[%s196 + $0x1b0] sm:$0xff]
                %253 = vst [vmem:[%s197 + $0xd8] sm:$0xff] %v252
                %v254 = vld [vmem:[%s196 + $0x1c0] sm:$0xff]
                %255 = vst [vmem:[%s197 + $0xe0] sm:$0xff] %v254
                %v256 = vld [vmem:[%s196 + $0x1d0] sm:$0xff]
                %257 = vst [vmem:[%s197 + $0xe8] sm:$0xff] %v256
                %v258 = vld [vmem:[%s196 + $0x1e0] sm:$0xff]
                %259 = vst [vmem:[%s197 + $0xf0] sm:$0xff] %v258
                %v260 = vld [vmem:[%s196 + $0x1f0] sm:$0xff]
                %261 = vst [vmem:[%s197 + $0xf8] sm:$0xff] %v260
              $region41: #{_lambda_.13} parent=35 // loop_footer
                %s195 = sadd.s32 1, %s191
              $region42: #{_lambda_.13} parent=35 // loop_footer_branch
                %190 = sbr.rel target = $region38
              $region43: #{_lambda_.13} parent=35 // loop_exit
                _
            $region36: #{_lambda_.13} parent=27 // pred_fallthru
              _
          $region28: #{_lambda_.13} parent=23 // pred_fallthru
            _
          %338 = vnop
        $region24: #{_lambda_.13} parent=15 // pred_fallthru
          _
        // Predicated region
        $region59: #{_lambda_.13} parent=15 // pred_check
          %p339 = pneg %p104
        $region60: #{_lambda_.13} parent=15 // pred_check_branch
          %341 = sbr.rel (%p339) target = $region62
        $region61: #{_lambda_.13} parent=15 // pred_region
          %s342 = smul.u32 2, %s17
          %p343 = scmp.lt.s32.totalorder %s342, 3
          %s344 = scalar_select %p343, %s342, 3
          %s345 = scalar_lea.vmem %s2, %s344
          %s346 = smul.u32 2, %s17
        $region62: #{_lambda_.13} parent=15 // pred_fallthru
          _
      $region16: #{_lambda_.13} parent=5 // pred_fallthru
        _
      %p347 = scmp.le.s32.totalorder 1, %s9
      %p348 = scmp.lt.s32.totalorder %s9, 19
      %p349 = pnand %p347, %p348
      %p350 = pneg %p349
      // Predicated region
      $region63: #{_lambda_.13} parent=5 // pred_check
        _
      $region64: #{_lambda_.13} parent=5 // pred_check_branch
        %352 = sbr.rel (%p349) target = $region66
      $region65: #{_lambda_.13} parent=5 // pred_region
        %s353 = ssub.s32 %s9, 1
        %s354 = sand.u32 %s71, 1
        %s355 = sand.u32 %s71, 1
        %s356 = smul.addr %s355, 256
        %s357 = scalar_lea.vmem [#allocation3], %s356
        // Predicated region
        $region67: #{_lambda_.13} parent=65 // pred_check
          %p358 = pneg %p84
        $region68: #{_lambda_.13} parent=65 // pred_check_branch
          %360 = sbr.rel (%p358) target = $region70
        $region69: #{_lambda_.13} parent=65 // pred_region
          _
        $region70: #{_lambda_.13} parent=65 // pred_fallthru
          _
        %s361 = smul.u32 2, %s21
        %p362 = scmp.lt.s32.totalorder %s19, 0
        %s363 = scalar_select %p362, %s19, 0
        %p364 = scmp.lt.s32.totalorder %s361, 17
        %s365 = scalar_select %p364, %s361, 17
        %s366 = smul.addr %s363, 18
        %s367 = sadd.s32 %s365, %s366
        %s368 = smul.addr %s367, 4
        %s369 = scalar_lea.vmem %s0, %s368
        %p370 = pneg %p56
        %p371 = pneg %p53
        %s372 = sand.u32 %s71, 1
        %s373 = sand.u32 %s71, 1
        %s374 = smul.addr %s373, 256
        %s375 = scalar_lea.vmem [#allocation3], %s374
        %p376 = pneg %p84
        %p377 = pneg %p81
        %s378 = smul.u32 2, %s20
        %p379 = scmp.lt.s32.totalorder %s378, 3
        %s380 = scalar_select %p379, %s378, 3
        %s381 = scalar_lea.vmem %s2, %s380
        %p382 = pneg %p110
        %p383 = pneg %p107
        %p384 = pneg %p138
        %p385 = pneg %p135
        %s386 = smul.u32 2, %s20
        %p387 = scmp.lt.s32.totalorder %s19, 0
        %s388 = scalar_select %p387, %s19, 0
        %p389 = scmp.lt.s32.totalorder %s386, 3
        %s390 = scalar_select %p389, %s386, 3
        %s391 = smul.addr %s388, 4
        %s392 = sadd.s32 %s390, %s391
        %s393 = smul.addr %s392, 4
        %s394 = scalar_lea.vmem %s3, %s393
        %s395 = smul.u32 2, %s21
        %p396 = scmp.lt.s32.totalorder %s19, 0
        %s397 = scalar_select %p396, %s19, 0
        %p398 = scmp.lt.s32.totalorder %s395, 17
        %s399 = scalar_select %p398, %s395, 17
        %s400 = smul.addr %s397, 18
        %s401 = sadd.s32 %s399, %s400
        %s402 = smul.addr %s401, 4
        %s403 = scalar_lea.vmem %s0, %s402
        %s404 = smul.u32 2, %s21
        %s405 = smul.u32 32, %s21
        %s406 = smul.u32 2, %s20
        %s407 = smul.u32 2, %s20
        %p408 = scmp.lt.s32.totalorder %s407, 3
        %s409 = scalar_select %p408, %s407, 3
        %s410 = scalar_lea.vmem %s2, %s409
        %s411 = smul.u32 2, %s20
        %s412 = smul.u32 2, %s20
        %p413 = scmp.lt.s32.totalorder %s19, 0
        %s414 = scalar_select %p413, %s19, 0
        %p415 = scmp.lt.s32.totalorder %s412, 3
        %s416 = scalar_select %p415, %s412, 3
        %s417 = smul.addr %s414, 4
        %s418 = sadd.s32 %s416, %s417
        %s419 = smul.addr %s418, 4
        %s420 = scalar_lea.vmem %s3, %s419
        %s421 = smul.u32 2, %s20
        %p422 = scmp.eq.s32.totalorder %s21, 0
        // Predicated region
        $region71: #{_lambda_.13} parent=65 // pred_check
          %p423 = pneg %p422
        $region72: #{_lambda_.13} parent=65 // pred_check_branch
          %425 = sbr.rel (%p423) target = $region74
        $region73: #{_lambda_.13} parent=65 // pred_region
          %426 = vst [vmem:[#allocation2] sm:$0xff] 0.0
          %427 = vst [vmem:[#allocation2 + $0x8] sm:$0xff] 0.0
        $region74: #{_lambda_.13} parent=65 // pred_fallthru
          _
        %v428 = vld [vmem:[#allocation2] sm:$0xff]
        %v429 = vld [vmem:[#allocation2 + $0x8] sm:$0xff]
        %v430 = vld [vmem:[%s403] sm:$0xff]
        %v431 = vld [vmem:[%s357] sm:$0xff]
        %v432 = vld [vmem:[%s357 + $0x8] sm:$0xff]
        %v433 = vld [vmem:[%s357 + $0x10] sm:$0xff]
        %v434 = vld [vmem:[%s357 + $0x18] sm:$0xff]
        %v435 = vld [vmem:[%s357 + $0x20] sm:$0xff]
        %v436 = vld [vmem:[%s357 + $0x28] sm:$0xff]
        %v437 = vld [vmem:[%s357 + $0x30] sm:$0xff]
        %v438 = vld [vmem:[%s357 + $0x38] sm:$0xff]
        %v439 = vld [vmem:[%s357 + $0x40] sm:$0xff]
        %v440 = vld [vmem:[%s357 + $0x48] sm:$0xff]
        %v441 = vld [vmem:[%s357 + $0x50] sm:$0xff]
        %v442 = vld [vmem:[%s357 + $0x58] sm:$0xff]
        %v443 = vld [vmem:[%s357 + $0x60] sm:$0xff]
        %v444 = vld [vmem:[%s357 + $0x68] sm:$0xff]
        %v445 = vld [vmem:[%s357 + $0x70] sm:$0xff]
        %v446 = vld [vmem:[%s357 + $0x78] sm:$0xff]
        %v447 = vld [vmem:[%s357 + $0x80] sm:$0xff]
        %v448 = vld [vmem:[%s357 + $0x88] sm:$0xff]
        %v449 = vld [vmem:[%s357 + $0x90] sm:$0xff]
        %v450 = vld [vmem:[%s357 + $0x98] sm:$0xff]
        %v451 = vld [vmem:[%s357 + $0xa0] sm:$0xff]
        %v452 = vld [vmem:[%s357 + $0xa8] sm:$0xff]
        %v453 = vld [vmem:[%s357 + $0xb0] sm:$0xff]
        %v454 = vld [vmem:[%s357 + $0xb8] sm:$0xff]
        %v455 = vld [vmem:[%s357 + $0xc0] sm:$0xff]
        %v456 = vld [vmem:[%s357 + $0xc8] sm:$0xff]
        %v457 = vld [vmem:[%s357 + $0xd0] sm:$0xff]
        %v458 = vld [vmem:[%s357 + $0xd8] sm:$0xff]
        %v459 = vld [vmem:[%s357 + $0xe0] sm:$0xff]
        %v460 = vld [vmem:[%s357 + $0xe8] sm:$0xff]
        %v461 = vld [vmem:[%s357 + $0xf0] sm:$0xff]
        %v462 = vld [vmem:[%s357 + $0xf8] sm:$0xff]
        %v464 = vunpack.c.l.b16 %v430
        %v465 = vunpack.c.h.b16 %v430
        %v466 = vpack.c.b16 %v464, %v464
        %v467 = vpack.c.b16 %v465, %v465
        %v502 = vunpack.c.l.b16 %v431
        %v503 = vunpack.c.h.b16 %v431
        %v504 = vunpack.c.l.b16 %v432
        %v505 = vunpack.c.h.b16 %v432
        %v506 = vunpack.c.l.b16 %v433
        %v507 = vunpack.c.h.b16 %v433
        %v508 = vunpack.c.l.b16 %v434
        %v509 = vunpack.c.h.b16 %v434
        %v510 = vunpack.c.l.b16 %v435
        %v511 = vunpack.c.h.b16 %v435
        %v512 = vunpack.c.l.b16 %v436
        %v513 = vunpack.c.h.b16 %v436
        %v514 = vunpack.c.l.b16 %v437
        %v515 = vunpack.c.h.b16 %v437
        %v516 = vunpack.c.l.b16 %v438
        %v517 = vunpack.c.h.b16 %v438
        %v518 = vunpack.c.l.b16 %v439
        %v519 = vunpack.c.h.b16 %v439
        %v520 = vunpack.c.l.b16 %v440
        %v521 = vunpack.c.h.b16 %v440
        %v522 = vunpack.c.l.b16 %v441
        %v523 = vunpack.c.h.b16 %v441
        %v524 = vunpack.c.l.b16 %v442
        %v525 = vunpack.c.h.b16 %v442
        %v526 = vunpack.c.l.b16 %v443
        %v527 = vunpack.c.h.b16 %v443
        %v528 = vunpack.c.l.b16 %v444
        %v529 = vunpack.c.h.b16 %v444
        %v530 = vunpack.c.l.b16 %v445
        %v531 = vunpack.c.h.b16 %v445
        %v532 = vunpack.c.l.b16 %v446
        %v533 = vunpack.c.h.b16 %v446
        %v534 = vunpack.c.l.b16 %v447
        %v535 = vunpack.c.h.b16 %v447
        %v536 = vunpack.c.l.b16 %v448
        %v537 = vunpack.c.h.b16 %v448
        %v538 = vunpack.c.l.b16 %v449
        %v539 = vunpack.c.h.b16 %v449
        %v540 = vunpack.c.l.b16 %v450
        %v541 = vunpack.c.h.b16 %v450
        %v542 = vunpack.c.l.b16 %v451
        %v543 = vunpack.c.h.b16 %v451
        %v544 = vunpack.c.l.b16 %v452
        %v545 = vunpack.c.h.b16 %v452
        %v546 = vunpack.c.l.b16 %v453
        %v547 = vunpack.c.h.b16 %v453
        %v548 = vunpack.c.l.b16 %v454
        %v549 = vunpack.c.h.b16 %v454
        %v550 = vunpack.c.l.b16 %v455
        %v551 = vunpack.c.h.b16 %v455
        %v552 = vunpack.c.l.b16 %v456
        %v553 = vunpack.c.h.b16 %v456
        %v554 = vunpack.c.l.b16 %v457
        %v555 = vunpack.c.h.b16 %v457
        %v556 = vunpack.c.l.b16 %v458
        %v557 = vunpack.c.h.b16 %v458
        %v558 = vunpack.c.l.b16 %v459
        %v559 = vunpack.c.h.b16 %v459
        %v560 = vunpack.c.l.b16 %v460
        %v561 = vunpack.c.h.b16 %v460
        %v562 = vunpack.c.l.b16 %v461
        %v563 = vunpack.c.h.b16 %v461
        %v564 = vunpack.c.l.b16 %v462
        %v565 = vunpack.c.h.b16 %v462
        %v566 = vpack.c.b16 %v504, %v502
        %v567 = vpack.c.b16 %v505, %v503
        %v568 = vpack.c.b16 %v508, %v506
        %v569 = vpack.c.b16 %v509, %v507
        %v570 = vpack.c.b16 %v512, %v510
        %v571 = vpack.c.b16 %v513, %v511
        %v572 = vpack.c.b16 %v516, %v514
        %v573 = vpack.c.b16 %v517, %v515
        %v574 = vpack.c.b16 %v520, %v518
        %v575 = vpack.c.b16 %v521, %v519
        %v576 = vpack.c.b16 %v524, %v522
        %v577 = vpack.c.b16 %v525, %v523
        %v578 = vpack.c.b16 %v528, %v526
        %v579 = vpack.c.b16 %v529, %v527
        %v580 = vpack.c.b16 %v532, %v530
        %v581 = vpack.c.b16 %v533, %v531
        %v582 = vpack.c.b16 %v536, %v534
        %v583 = vpack.c.b16 %v537, %v535
        %v584 = vpack.c.b16 %v540, %v538
        %v585 = vpack.c.b16 %v541, %v539
        %v586 = vpack.c.b16 %v544, %v542
        %v587 = vpack.c.b16 %v545, %v543
        %v588 = vpack.c.b16 %v548, %v546
        %v589 = vpack.c.b16 %v549, %v547
        %v590 = vpack.c.b16 %v552, %v550
        %v591 = vpack.c.b16 %v553, %v551
        %v592 = vpack.c.b16 %v556, %v554
        %v593 = vpack.c.b16 %v557, %v555
        %v594 = vpack.c.b16 %v560, %v558
        %v595 = vpack.c.b16 %v561, %v559
        %v596 = vpack.c.b16 %v564, %v562
        %v597 = vpack.c.b16 %v565, %v563
        %630 = vmatprep.subr.bf16.mxu0 %v567
        %631 = vmatpush1.bf16.msra.mxu0 %v566
        %632 = vmatprep.subr.bf16.mxu0 %v569
        %633 = vmatpush1.bf16.msra.mxu0 %v568
        %634 = vmatprep.subr.bf16.mxu0 %v571
        %635 = vmatpush1.bf16.msra.mxu0 %v570
        %636 = vmatprep.subr.bf16.mxu0 %v573
        %637 = vmatpush1.bf16.msra.mxu0 %v572
        %638 = vmatprep.subr.bf16.mxu0 %v575
        %639 = vmatpush1.bf16.msra.mxu0 %v574
        %640 = vmatprep.subr.bf16.mxu0 %v577
        %641 = vmatpush1.bf16.msra.mxu0 %v576
        %642 = vmatprep.subr.bf16.mxu0 %v579
        %643 = vmatpush1.bf16.msra.mxu0 %v578
        %644 = vmatprep.subr.bf16.mxu0 %v581
        %645 = vmatpush1.bf16.msra.mxu0 %v580
        %646 = vmatprep.subr.bf16.mxu0 %v583
        %647 = vmatpush1.bf16.msra.mxu0 %v582
        %648 = vmatprep.subr.bf16.mxu0 %v585
        %649 = vmatpush1.bf16.msra.mxu0 %v584
        %650 = vmatprep.subr.bf16.mxu0 %v587
        %651 = vmatpush1.bf16.msra.mxu0 %v586
        %652 = vmatprep.subr.bf16.mxu0 %v589
        %653 = vmatpush1.bf16.msra.mxu0 %v588
        %654 = vmatprep.subr.bf16.mxu0 %v591
        %655 = vmatpush1.bf16.msra.mxu0 %v590
        %656 = vmatprep.subr.bf16.mxu0 %v593
        %657 = vmatpush1.bf16.msra.mxu0 %v592
        %658 = vmatprep.subr.bf16.mxu0 %v595
        %659 = vmatpush1.bf16.msra.mxu0 %v594
        %660 = vmatprep.subr.bf16.mxu0 %v597
        %661 = vmatpush1.bf16.msra.mxu0 %v596
        %662 = vmatprep.mubr.bf16.mxu0 %v467
        %663 = vmatmul.mubr.bf16.gmra.mrb[0].mxu0 %v466
        %v664 = vpop.f32.mrb[0].mxu0
        %v665 = vadd.f32 0.0, %v664
        %v666 = vpop.f32.mrb[0].mxu0
        %v667 = vadd.f32 0.0, %v666
        %v668 = vpop.f32.mrb[0].mxu0
        %v669 = vpop.f32.mrb[0].mxu0
        %670 = vdwg.mxu0
        %v671 = vadd.f32 %v428, %v665
        %v672 = vadd.f32 %v429, %v667
        %673 = vst [vmem:[#allocation2] sm:$0xff] %v671
        %674 = vst [vmem:[#allocation2 + $0x8] sm:$0xff] %v672
        %p675 = scmp.eq.s32.totalorder %s21, 8
        // Predicated region
        $region75: #{_lambda_.13} parent=65 // pred_check
          %p676 = pneg %p675
        $region76: #{_lambda_.13} parent=65 // pred_check_branch
          %678 = sbr.rel (%p676) target = $region78
        $region77: #{_lambda_.13} parent=65 // pred_region
          %v679 = vld [vmem:[#allocation2] sm:$0xff]
          %v680 = vld [vmem:[#allocation2 + $0x8] sm:$0xff]
          %v681 = vld [vmem:[%s410] sm:$0x3]
          %v683 = vlaneseq
          %v684 = vshrl.u32 %v683, 7
          %v685 = vsub.s32 0, %v684
          %v686 = vrot.slane %v681, %v685
          %v687 = vlaneseq
          %v688 = vshrl.u32 %v687, 7
          %v689 = vsub.s32 1, %v688
          %v690 = vrot.slane %v681, %v689
          %v693 = vadd.f32 %v679, %v686
          %v694 = vadd.f32 %v680, %v690
          %v695 = vmax.f32 %v693, 0.0
          %v696 = vmax.f32 %v694, 0.0
          %v697 = vpack.c.bf16 %v695, %v695
          %v698 = vpack.c.bf16 %v696, %v696
          %v701 = vunpack.c.l.b16 %v697
          %v702 = vunpack.c.l.b16 %v698
          %v703 = vpack.c.b16 %v702, %v701
          %705 = vst [vmem:[%s420] sm:$0xff] %v703
        $region78: #{_lambda_.13} parent=65 // pred_fallthru
          _
        %s706 = smul.u32 2, %s20
        %p707 = scmp.lt.s32.totalorder %s19, 0
        %s708 = scalar_select %p707, %s19, 0
        %p709 = scmp.lt.s32.totalorder %s706, 3
        %s710 = scalar_select %p709, %s706, 3
        %s711 = smul.addr %s708, 4
        %s712 = sadd.s32 %s710, %s711
        %s713 = smul.addr %s712, 4
        %s714 = scalar_lea.vmem %s3, %s713
        // Predicated region
        $region79: #{_lambda_.13} parent=65 // pred_check
          %p715 = pneg %p135
        $region80: #{_lambda_.13} parent=65 // pred_check_branch
          %717 = sbr.rel (%p715) target = $region82
        $region81: #{_lambda_.13} parent=65 // pred_region
          %s718 = smul.u32 2, %s20
        $region82: #{_lambda_.13} parent=65 // pred_fallthru
          _
      $region66: #{_lambda_.13} parent=5 // pred_fallthru
        _
      %p719 = scmp.le.s32.totalorder 2, %s9
      // Predicated region
      $region83: #{_lambda_.13} parent=5 // pred_check
        %p720 = pneg %p719
      $region84: #{_lambda_.13} parent=5 // pred_check_branch
        %722 = sbr.rel (%p720) target = $region86
      $region85: #{_lambda_.13} parent=5 // pred_region
        %s723 = ssub.s32 %s9, 2
        // Predicated region
        $region87: #{_lambda_.13} parent=85 // pred_check
          %p724 = pneg %p141
        $region88: #{_lambda_.13} parent=85 // pred_check_branch
          %726 = sbr.rel (%p724) target = $region90
        $region89: #{_lambda_.13} parent=85 // pred_region
          %s727 = smul.u32 2, %s23
          %p728 = scmp.lt.s32.totalorder %s22, 0
          %s729 = scalar_select %p728, %s22, 0
          %p730 = scmp.lt.s32.totalorder %s727, 3
          %s731 = scalar_select %p730, %s727, 3
          %s732 = smul.addr %s729, 4
          %s733 = sadd.s32 %s731, %s732
          %s734 = smul.addr %s733, 4
          %s735 = scalar_lea.vmem %s3, %s734
        $region90: #{_lambda_.13} parent=85 // pred_fallthru
          _
      $region86: #{_lambda_.13} parent=5 // pred_fallthru
        _
    $region6: #{_lambda_.13} parent=1 // loop_footer
      %s13 = sadd.s32 1, %s9
    $region7: #{_lambda_.13} parent=1 // loop_footer_branch
      %8 = sbr.rel target = $region3
    $region8: #{_lambda_.13} parent=1 // loop_exit
      _

// kernel: _lambda_.14
$region0: #{_lambda_.14}
  #allocation0 [shape = 'u32[]', space=smem, size = 0x4, offset = 0x4, fixed_abs, tag = 'smem constant byte address 0x4 - core index']
  #allocation1 [shape = 'u32[144,128]{1,0:T(1,128)}', space=vmem, size = 0x12000, scoped, tag = 'internal scratch']
  #allocation2 [shape = 'f32[8,256]{1,0:T(8,128)}', space=vmem, size = 0x2000, scoped, tag = 'scratch operand']
  %s0 = inlined_call_operand.vmem [shape: bf16[8,4608], index: 0, kind: input, shape index: {}]
  %s1 = inlined_call_operand.vmem [shape: bf16[4608,512], index: 1, kind: input, shape index: {}]
  %s2 = inlined_call_operand.vmem [shape: f32[1,512], index: 2, kind: input, shape index: {}]
  %s3 = inlined_call_operand.vmem [shape: bf16[8,512], index: 3, kind: output, shape index: {}]
  %s4 = sld [smem:[#allocation0]]
  $region91: #{_lambda_.14} parent=0
    _
  %s6 = ssub.s32 1, %s4
  %s7 = scalar_select 0, %s6, %s4
  $region1: #{_lambda_.14} parent=0
    #allocation3 [shape = 'u8[262144]{0}', space=vmem, size = 0x40000, scoped, tag = 'input window, operand 1']
    loop: start=0, step=1, limit=38
    $region2: #{_lambda_.14} parent=1 // loop_pre_header
      _
    $region3: #{_lambda_.14} parent=1 // loop_header
      %s9 = sphi 0, %s13
      %p10 = scmp.ge.s32.totalorder %s9, 38
      %s16 = sphi 0, %s35
      %s17 = sphi 0, %s31
      %s18 = sphi 0, %s27
      %s19 = sphi 0, %s16
      %s20 = sphi 0, %s17
      %s21 = sphi 0, %s18
      %s22 = sphi 0, %s19
      %s23 = sphi 0, %s20
      %s24 = sphi 0, %s21
      %s40 = sphi 0, %s42
      %s43 = sphi 0, %s40
      %s44 = sphi 0, %s43
      %s60 = sphi 0, %s44
      %s68 = sphi 0, %s70
      %s71 = sphi 0, %s68
      %s72 = sphi 0, %s71
      %s88 = sphi 0, %s72
      %s94 = sphi 0, %s96
      %s97 = sphi 0, %s94
      %s98 = sphi 0, %s97
      %s114 = sphi 0, %s98
      %s122 = sphi 0, %s124
      %s125 = sphi 0, %s122
      %s126 = sphi 0, %s125
      %s142 = sphi 0, %s126
    $region4: #{_lambda_.14} parent=1 // loop_header_branch
      %12 = sbr.rel (%p10) target = $region8
    $region5: #{_lambda_.14} parent=1 // loop_body
      %s14 = ssub.s32 %s9, 1
      %s15 = ssub.s32 %s9, 2
      %s25 = sadd.s32 1, %s18
      %p26 = scmp.ge.s32.totalorder %s25, 18
      %s27 = scalar_select %p26, 0, %s25
      %s28 = sadd.s32 1, %s17
      %s29 = scalar_select %p26, %s28, %s17
      %p30 = scmp.ge.s32.totalorder %s29, 2
      %s31 = scalar_select %p30, 0, %s29
      %s32 = sadd.s32 1, %s16
      %s33 = scalar_select %p30, %s32, %s16
      %p34 = scmp.ge.s32.totalorder %s33, 1
      %s35 = scalar_select %p34, 0, %s33
      %s36 = ssub.s32 %s16, %s35
      %s37 = ssub.s32 %s18, %s27
      %s38 = sor.u32 %s36, %s37
      %p39 = scmp.eq.s32.totalorder %s38, 0
      %s41 = sadd.s32 %s40, 1
      %s42 = scalar_select %p39, %s40, %s41
      %p45 = pneg %p39
      %p46 = scmp.eq.s32.totalorder %s9, 35
      %p47 = por %p45, %p46
      %p48 = scmp.ne.s32.totalorder %s40, %s43
      %p49 = scmp.eq.s32.totalorder %s9, 0
      %p50 = por %p48, %p49
      %p51 = scmp.ne.s32.totalorder %s40, %s43
      %p52 = scmp.eq.s32.totalorder %s14, 35
      %p53 = por %p51, %p52
      %p54 = scmp.ne.s32.totalorder %s43, %s44
      %p55 = scmp.eq.s32.totalorder %s14, 0
      %p56 = por %p54, %p55
      %p57 = scmp.ne.s32.totalorder %s43, %s44
      %p58 = scmp.eq.s32.totalorder %s15, 35
      %p59 = por %p57, %p58
      %p61 = scmp.ne.s32.totalorder %s44, %s60
      %p62 = scmp.eq.s32.totalorder %s15, 0
      %p63 = por %p61, %p62
      %s64 = ssub.s32 %s18, %s27
      %s65 = ssub.s32 %s17, %s31
      %s66 = sor.u32 %s64, %s65
      %p67 = scmp.eq.s32.totalorder %s66, 0
      %s69 = sadd.s32 %s68, 1
      %s70 = scalar_select %p67, %s68, %s69
      %p73 = pneg %p67
      %p74 = scmp.eq.s32.totalorder %s9, 35
      %p75 = por %p73, %p74
      %p76 = scmp.ne.s32.totalorder %s68, %s71
      %p77 = scmp.eq.s32.totalorder %s9, 0
      %p78 = por %p76, %p77
      %p79 = scmp.ne.s32.totalorder %s68, %s71
      %p80 = scmp.eq.s32.totalorder %s14, 35
      %p81 = por %p79, %p80
      %p82 = scmp.ne.s32.totalorder %s71, %s72
      %p83 = scmp.eq.s32.totalorder %s14, 0
      %p84 = por %p82, %p83
      %p85 = scmp.ne.s32.totalorder %s71, %s72
      %p86 = scmp.eq.s32.totalorder %s15, 35
      %p87 = por %p85, %p86
      %p89 = scmp.ne.s32.totalorder %s72, %s88
      %p90 = scmp.eq.s32.totalorder %s15, 0
      %p91 = por %p89, %p90
      %s92 = ssub.s32 %s17, %s31
      %p93 = scmp.eq.s32.totalorder %s92, 0
      %s95 = sadd.s32 %s94, 1
      %s96 = scalar_select %p93, %s94, %s95
      %p99 = pneg %p93
      %p100 = scmp.eq.s32.totalorder %s9, 35
      %p101 = por %p99, %p100
      %p102 = scmp.ne.s32.totalorder %s94, %s97
      %p103 = scmp.eq.s32.totalorder %s9, 0
      %p104 = por %p102, %p103
      %p105 = scmp.ne.s32.totalorder %s94, %s97
      %p106 = scmp.eq.s32.totalorder %s14, 35
      %p107 = por %p105, %p106
      %p108 = scmp.ne.s32.totalorder %s97, %s98
      %p109 = scmp.eq.s32.totalorder %s14, 0
      %p110 = por %p108, %p109
      %p111 = scmp.ne.s32.totalorder %s97, %s98
      %p112 = scmp.eq.s32.totalorder %s15, 35
      %p113 = por %p111, %p112
      %p115 = scmp.ne.s32.totalorder %s98, %s114
      %p116 = scmp.eq.s32.totalorder %s15, 0
      %p117 = por %p115, %p116
      %s118 = ssub.s32 %s16, %s35
      %s119 = ssub.s32 %s17, %s31
      %s120 = sor.u32 %s118, %s119
      %p121 = scmp.eq.s32.totalorder %s120, 0
      %s123 = sadd.s32 %s122, 1
      %s124 = scalar_select %p121, %s122, %s123
      %p127 = pneg %p121
      %p128 = scmp.eq.s32.totalorder %s9, 35
      %p129 = por %p127, %p128
      %p130 = scmp.ne.s32.totalorder %s122, %s125
      %p131 = scmp.eq.s32.totalorder %s9, 0
      %p132 = por %p130, %p131
      %p133 = scmp.ne.s32.totalorder %s122, %s125
      %p134 = scmp.eq.s32.totalorder %s14, 35
      %p135 = por %p133, %p134
      %p136 = scmp.ne.s32.totalorder %s125, %s126
      %p137 = scmp.eq.s32.totalorder %s14, 0
      %p138 = por %p136, %p137
      %p139 = scmp.ne.s32.totalorder %s125, %s126
      %p140 = scmp.eq.s32.totalorder %s15, 35
      %p141 = por %p139, %p140
      %p143 = scmp.ne.s32.totalorder %s126, %s142
      %p144 = scmp.eq.s32.totalorder %s15, 0
      %p145 = por %p143, %p144
      %p146 = scmp.le.s32.totalorder 1, %s9
      %p147 = scmp.lt.s32.totalorder %s9, 37
      %p148 = pnand %p146, %p147
      %p149 = pneg %p148
      // Predicated region
      $region9: #{_lambda_.14} parent=5 // pred_check
        _
      $region10: #{_lambda_.14} parent=5 // pred_check_branch
        %151 = sbr.rel (%p148) target = $region12
      $region11: #{_lambda_.14} parent=5 // pred_region
        %s152 = ssub.s32 %s9, 1
      $region12: #{_lambda_.14} parent=5 // pred_fallthru
        _
      %p153 = scmp.lt.s32.totalorder %s9, 36
      // Predicated region
      $region13: #{_lambda_.14} parent=5 // pred_check
        %p154 = pneg %p153
      $region14: #{_lambda_.14} parent=5 // pred_check_branch
        %156 = sbr.rel (%p154) target = $region16
      $region15: #{_lambda_.14} parent=5 // pred_region
        // Predicated region
        $region17: #{_lambda_.14} parent=15 // pred_check
          %p157 = pneg %p50
        $region18: #{_lambda_.14} parent=15 // pred_check_branch
          %159 = sbr.rel (%p157) target = $region20
        $region19: #{_lambda_.14} parent=15 // pred_region
          %s160 = smul.u32 2, %s18
          %p161 = scmp.lt.s32.totalorder %s16, 0
          %s162 = scalar_select %p161, %s16, 0
          %p163 = scmp.lt.s32.totalorder %s160, 35
          %s164 = scalar_select %p163, %s160, 35
          %s165 = smul.addr %s162, 36
          %s166 = sadd.s32 %s164, %s165
          %s167 = smul.addr %s166, 4
          %s168 = scalar_lea.vmem %s0, %s167
          %s169 = smul.u32 2, %s18
        $region20: #{_lambda_.14} parent=15 // pred_fallthru
          _
        // Predicated region
        $region21: #{_lambda_.14} parent=15 // pred_check
          %p170 = pneg %p78
        $region22: #{_lambda_.14} parent=15 // pred_check_branch
          %172 = sbr.rel (%p170) target = $region24
        $region23: #{_lambda_.14} parent=15 // pred_region
          %s173 = sand.u32 %s68, 1
          %s174 = sand.u32 %s68, 1
          %s175 = smul.addr %s174, 256
          %s176 = scalar_lea.vmem [#allocation3], %s175
          %s177 = smul.u32 32, %s18
          %s178 = smul.u32 2, %s17
          %s179 = smul.addr %s177, 4
          %s180 = sadd.s32 %s178, %s179
          %s181 = smul.addr %s180, 4
          %s182 = scalar_lea.vmem %s1, %s181
          // Predicated region
          $region25: #{_lambda_.14} parent=23 // pred_check
            _
          $region26: #{_lambda_.14} parent=23 // pred_check_branch
            %184 = sbr.rel (0) target = $region28
          $region27: #{_lambda_.14} parent=23 // pred_region
            // Predicated region
            $region29: #{_lambda_.14} parent=27 // pred_check
              _
            $region30: #{_lambda_.14} parent=27 // pred_check_branch
              %186 = sbr.rel (0) target = $region32
            $region31: #{_lambda_.14} parent=27 // pred_region
              // Predicated region
              $region44: #{_lambda_.14} parent=31 // pred_check
                _
              $region45: #{_lambda_.14} parent=31 // pred_check_branch
                %263 = sbr.rel (0) target = $region47
              $region46: #{_lambda_.14} parent=31 // pred_region
                loop: start=0, step=1, limit=1
                $region48: #{_lambda_.14} parent=46 // loop_pre_header
                  _
                $region49: #{_lambda_.14} parent=46 // loop_header
                  %s265 = sphi 0, %s269
                  %p266 = scmp.ge.s32.totalorder %s265, 1
                  %s270 = sphi %s182, %s182
                  %s271 = sphi %s176, %s176
                $region50: #{_lambda_.14} parent=46 // loop_header_branch
                  %268 = sbr.rel (%p266) target = $region54
                $region51: #{_lambda_.14} parent=46 // loop_body
                  %v272 = vld [vmem:[%s270] sm:$0xff]
                  %273 = vst [vmem:[%s271] sm:$0xff] %v272
                  %v274 = vld [vmem:[%s270 + $0x10] sm:$0xff]
                  %275 = vst [vmem:[%s271 + $0x8] sm:$0xff] %v274
                  %v276 = vld [vmem:[%s270 + $0x20] sm:$0xff]
                  %277 = vst [vmem:[%s271 + $0x10] sm:$0xff] %v276
                  %v278 = vld [vmem:[%s270 + $0x30] sm:$0xff]
                  %279 = vst [vmem:[%s271 + $0x18] sm:$0xff] %v278
                  %v280 = vld [vmem:[%s270 + $0x40] sm:$0xff]
                  %281 = vst [vmem:[%s271 + $0x20] sm:$0xff] %v280
                  %v282 = vld [vmem:[%s270 + $0x50] sm:$0xff]
                  %283 = vst [vmem:[%s271 + $0x28] sm:$0xff] %v282
                  %v284 = vld [vmem:[%s270 + $0x60] sm:$0xff]
                  %285 = vst [vmem:[%s271 + $0x30] sm:$0xff] %v284
                  %v286 = vld [vmem:[%s270 + $0x70] sm:$0xff]
                  %287 = vst [vmem:[%s271 + $0x38] sm:$0xff] %v286
                  %v288 = vld [vmem:[%s270 + $0x80] sm:$0xff]
                  %289 = vst [vmem:[%s271 + $0x40] sm:$0xff] %v288
                  %v290 = vld [vmem:[%s270 + $0x90] sm:$0xff]
                  %291 = vst [vmem:[%s271 + $0x48] sm:$0xff] %v290
                  %v292 = vld [vmem:[%s270 + $0xa0] sm:$0xff]
                  %293 = vst [vmem:[%s271 + $0x50] sm:$0xff] %v292
                  %v294 = vld [vmem:[%s270 + $0xb0] sm:$0xff]
                  %295 = vst [vmem:[%s271 + $0x58] sm:$0xff] %v294
                  %v296 = vld [vmem:[%s270 + $0xc0] sm:$0xff]
                  %297 = vst [vmem:[%s271 + $0x60] sm:$0xff] %v296
                  %v298 = vld [vmem:[%s270 + $0xd0] sm:$0xff]
                  %299 = vst [vmem:[%s271 + $0x68] sm:$0xff] %v298
                  %v300 = vld [vmem:[%s270 + $0xe0] sm:$0xff]
                  %301 = vst [vmem:[%s271 + $0x70] sm:$0xff] %v300
                  %v302 = vld [vmem:[%s270 + $0xf0] sm:$0xff]
                  %303 = vst [vmem:[%s271 + $0x78] sm:$0xff] %v302
                  %v304 = vld [vmem:[%s270 + $0x100] sm:$0xff]
                  %305 = vst [vmem:[%s271 + $0x80] sm:$0xff] %v304
                  %v306 = vld [vmem:[%s270 + $0x110] sm:$0xff]
                  %307 = vst [vmem:[%s271 + $0x88] sm:$0xff] %v306
                  %v308 = vld [vmem:[%s270 + $0x120] sm:$0xff]
                  %309 = vst [vmem:[%s271 + $0x90] sm:$0xff] %v308
                  %v310 = vld [vmem:[%s270 + $0x130] sm:$0xff]
                  %311 = vst [vmem:[%s271 + $0x98] sm:$0xff] %v310
                  %v312 = vld [vmem:[%s270 + $0x140] sm:$0xff]
                  %313 = vst [vmem:[%s271 + $0xa0] sm:$0xff] %v312
                  %v314 = vld [vmem:[%s270 + $0x150] sm:$0xff]
                  %315 = vst [vmem:[%s271 + $0xa8] sm:$0xff] %v314
                  %v316 = vld [vmem:[%s270 + $0x160] sm:$0xff]
                  %317 = vst [vmem:[%s271 + $0xb0] sm:$0xff] %v316
                  %v318 = vld [vmem:[%s270 + $0x170] sm:$0xff]
                  %319 = vst [vmem:[%s271 + $0xb8] sm:$0xff] %v318
                  %v320 = vld [vmem:[%s270 + $0x180] sm:$0xff]
                  %321 = vst [vmem:[%s271 + $0xc0] sm:$0xff] %v320
                  %v322 = vld [vmem:[%s270 + $0x190] sm:$0xff]
                  %323 = vst [vmem:[%s271 + $0xc8] sm:$0xff] %v322
                  %v324 = vld [vmem:[%s270 + $0x1a0] sm:$0xff]
                  %325 = vst [vmem:[%s271 + $0xd0] sm:$0xff] %v324
                  %v326 = vld [vmem:[%s270 + $0x1b0] sm:$0xff]
                  %327 = vst [vmem:[%s271 + $0xd8] sm:$0xff] %v326
                  %v328 = vld [vmem:[%s270 + $0x1c0] sm:$0xff]
                  %329 = vst [vmem:[%s271 + $0xe0] sm:$0xff] %v328
                  %v330 = vld [vmem:[%s270 + $0x1d0] sm:$0xff]
                  %331 = vst [vmem:[%s271 + $0xe8] sm:$0xff] %v330
                  %v332 = vld [vmem:[%s270 + $0x1e0] sm:$0xff]
                  %333 = vst [vmem:[%s271 + $0xf0] sm:$0xff] %v332
                  %v334 = vld [vmem:[%s270 + $0x1f0] sm:$0xff]
                  %335 = vst [vmem:[%s271 + $0xf8] sm:$0xff] %v334
                $region52: #{_lambda_.14} parent=46 // loop_footer
                  %s269 = sadd.s32 1, %s265
                $region53: #{_lambda_.14} parent=46 // loop_footer_branch
                  %264 = sbr.rel target = $region49
                $region54: #{_lambda_.14} parent=46 // loop_exit
                  _
              $region47: #{_lambda_.14} parent=31 // pred_fallthru
                _
              // Predicated region
              $region55: #{_lambda_.14} parent=31 // pred_check
                _
              $region56: #{_lambda_.14} parent=31 // pred_check_branch
                %337 = sbr.rel target = $region58
              $region57: #{_lambda_.14} parent=31 // pred_region
                _
              $region58: #{_lambda_.14} parent=31 // pred_fallthru
                _
            $region32: #{_lambda_.14} parent=27 // pred_fallthru
              _
            // Predicated region
            $region33: #{_lambda_.14} parent=27 // pred_check
              _
            $region34: #{_lambda_.14} parent=27 // pred_check_branch
              %188 = sbr.rel target = $region36
            $region35: #{_lambda_.14} parent=27 // pred_region
              loop: start=0, step=1, limit=1
              $region37: #{_lambda_.14} parent=35 // loop_pre_header
                _
              $region38: #{_lambda_.14} parent=35 // loop_header
                %s191 = sphi 0, %s195
                %p192 = scmp.ge.s32.totalorder %s191, 1
                %s196 = sphi %s182, %s182
                %s197 = sphi %s176, %s176
              $region39: #{_lambda_.14} parent=35 // loop_header_branch
                %194 = sbr.rel (%p192) target = $region43
              $region40: #{_lambda_.14} parent=35 // loop_body
                %v198 = vld [vmem:[%s196] sm:$0xff]
                %199 = vst [vmem:[%s197] sm:$0xff] %v198
                %v200 = vld [vmem:[%s196 + $0x10] sm:$0xff]
                %201 = vst [vmem:[%s197 + $0x8] sm:$0xff] %v200
                %v202 = vld [vmem:[%s196 + $0x20] sm:$0xff]
                %203 = vst [vmem:[%s197 + $0x10] sm:$0xff] %v202
                %v204 = vld [vmem:[%s196 + $0x30] sm:$0xff]
                %205 = vst [vmem:[%s197 + $0x18] sm:$0xff] %v204
                %v206 = vld [vmem:[%s196 + $0x40] sm:$0xff]
                %207 = vst [vmem:[%s197 + $0x20] sm:$0xff] %v206
                %v208 = vld [vmem:[%s196 + $0x50] sm:$0xff]
                %209 = vst [vmem:[%s197 + $0x28] sm:$0xff] %v208
                %v210 = vld [vmem:[%s196 + $0x60] sm:$0xff]
                %211 = vst [vmem:[%s197 + $0x30] sm:$0xff] %v210
                %v212 = vld [vmem:[%s196 + $0x70] sm:$0xff]
                %213 = vst [vmem:[%s197 + $0x38] sm:$0xff] %v212
                %v214 = vld [vmem:[%s196 + $0x80] sm:$0xff]
                %215 = vst [vmem:[%s197 + $0x40] sm:$0xff] %v214
                %v216 = vld [vmem:[%s196 + $0x90] sm:$0xff]
                %217 = vst [vmem:[%s197 + $0x48] sm:$0xff] %v216
                %v218 = vld [vmem:[%s196 + $0xa0] sm:$0xff]
                %219 = vst [vmem:[%s197 + $0x50] sm:$0xff] %v218
                %v220 = vld [vmem:[%s196 + $0xb0] sm:$0xff]
                %221 = vst [vmem:[%s197 + $0x58] sm:$0xff] %v220
                %v222 = vld [vmem:[%s196 + $0xc0] sm:$0xff]
                %223 = vst [vmem:[%s197 + $0x60] sm:$0xff] %v222
                %v224 = vld [vmem:[%s196 + $0xd0] sm:$0xff]
                %225 = vst [vmem:[%s197 + $0x68] sm:$0xff] %v224
                %v226 = vld [vmem:[%s196 + $0xe0] sm:$0xff]
                %227 = vst [vmem:[%s197 + $0x70] sm:$0xff] %v226
                %v228 = vld [vmem:[%s196 + $0xf0] sm:$0xff]
                %229 = vst [vmem:[%s197 + $0x78] sm:$0xff] %v228
                %v230 = vld [vmem:[%s196 + $0x100] sm:$0xff]
                %231 = vst [vmem:[%s197 + $0x80] sm:$0xff] %v230
                %v232 = vld [vmem:[%s196 + $0x110] sm:$0xff]
                %233 = vst [vmem:[%s197 + $0x88] sm:$0xff] %v232
                %v234 = vld [vmem:[%s196 + $0x120] sm:$0xff]
                %235 = vst [vmem:[%s197 + $0x90] sm:$0xff] %v234
                %v236 = vld [vmem:[%s196 + $0x130] sm:$0xff]
                %237 = vst [vmem:[%s197 + $0x98] sm:$0xff] %v236
                %v238 = vld [vmem:[%s196 + $0x140] sm:$0xff]
                %239 = vst [vmem:[%s197 + $0xa0] sm:$0xff] %v238
                %v240 = vld [vmem:[%s196 + $0x150] sm:$0xff]
                %241 = vst [vmem:[%s197 + $0xa8] sm:$0xff] %v240
                %v242 = vld [vmem:[%s196 + $0x160] sm:$0xff]
                %243 = vst [vmem:[%s197 + $0xb0] sm:$0xff] %v242
                %v244 = vld [vmem:[%s196 + $0x170] sm:$0xff]
                %245 = vst [vmem:[%s197 + $0xb8] sm:$0xff] %v244
                %v246 = vld [vmem:[%s196 + $0x180] sm:$0xff]
                %247 = vst [vmem:[%s197 + $0xc0] sm:$0xff] %v246
                %v248 = vld [vmem:[%s196 + $0x190] sm:$0xff]
                %249 = vst [vmem:[%s197 + $0xc8] sm:$0xff] %v248
                %v250 = vld [vmem:[%s196 + $0x1a0] sm:$0xff]
                %251 = vst [vmem:[%s197 + $0xd0] sm:$0xff] %v250
                %v252 = vld [vmem:[%s196 + $0x1b0] sm:$0xff]
                %253 = vst [vmem:[%s197 + $0xd8] sm:$0xff] %v252
                %v254 = vld [vmem:[%s196 + $0x1c0] sm:$0xff]
                %255 = vst [vmem:[%s197 + $0xe0] sm:$0xff] %v254
                %v256 = vld [vmem:[%s196 + $0x1d0] sm:$0xff]
                %257 = vst [vmem:[%s197 + $0xe8] sm:$0xff] %v256
                %v258 = vld [vmem:[%s196 + $0x1e0] sm:$0xff]
                %259 = vst [vmem:[%s197 + $0xf0] sm:$0xff] %v258
                %v260 = vld [vmem:[%s196 + $0x1f0] sm:$0xff]
                %261 = vst [vmem:[%s197 + $0xf8] sm:$0xff] %v260
              $region41: #{_lambda_.14} parent=35 // loop_footer
                %s195 = sadd.s32 1, %s191
              $region42: #{_lambda_.14} parent=35 // loop_footer_branch
                %190 = sbr.rel target = $region38
              $region43: #{_lambda_.14} parent=35 // loop_exit
                _
            $region36: #{_lambda_.14} parent=27 // pred_fallthru
              _
          $region28: #{_lambda_.14} parent=23 // pred_fallthru
            _
          %338 = vnop
        $region24: #{_lambda_.14} parent=15 // pred_fallthru
          _
        // Predicated region
        $region59: #{_lambda_.14} parent=15 // pred_check
          %p339 = pneg %p104
        $region60: #{_lambda_.14} parent=15 // pred_check_branch
          %341 = sbr.rel (%p339) target = $region62
        $region61: #{_lambda_.14} parent=15 // pred_region
          %s342 = smul.u32 2, %s17
          %p343 = scmp.lt.s32.totalorder %s342, 3
          %s344 = scalar_select %p343, %s342, 3
          %s345 = scalar_lea.vmem %s2, %s344
          %s346 = smul.u32 2, %s17
        $region62: #{_lambda_.14} parent=15 // pred_fallthru
          _
      $region16: #{_lambda_.14} parent=5 // pred_fallthru
        _
      %p347 = scmp.le.s32.totalorder 1, %s9
      %p348 = scmp.lt.s32.totalorder %s9, 37
      %p349 = pnand %p347, %p348
      %p350 = pneg %p349
      // Predicated region
      $region63: #{_lambda_.14} parent=5 // pred_check
        _
      $region64: #{_lambda_.14} parent=5 // pred_check_branch
        %352 = sbr.rel (%p349) target = $region66
      $region65: #{_lambda_.14} parent=5 // pred_region
        %s353 = ssub.s32 %s9, 1
        %s354 = sand.u32 %s71, 1
        %s355 = sand.u32 %s71, 1
        %s356 = smul.addr %s355, 256
        %s357 = scalar_lea.vmem [#allocation3], %s356
        // Predicated region
        $region67: #{_lambda_.14} parent=65 // pred_check
          %p358 = pneg %p84
        $region68: #{_lambda_.14} parent=65 // pred_check_branch
          %360 = sbr.rel (%p358) target = $region70
        $region69: #{_lambda_.14} parent=65 // pred_region
          _
        $region70: #{_lambda_.14} parent=65 // pred_fallthru
          _
        %s361 = smul.u32 2, %s21
        %p362 = scmp.lt.s32.totalorder %s19, 0
        %s363 = scalar_select %p362, %s19, 0
        %p364 = scmp.lt.s32.totalorder %s361, 35
        %s365 = scalar_select %p364, %s361, 35
        %s366 = smul.addr %s363, 36
        %s367 = sadd.s32 %s365, %s366
        %s368 = smul.addr %s367, 4
        %s369 = scalar_lea.vmem %s0, %s368
        %p370 = pneg %p56
        %p371 = pneg %p53
        %s372 = sand.u32 %s71, 1
        %s373 = sand.u32 %s71, 1
        %s374 = smul.addr %s373, 256
        %s375 = scalar_lea.vmem [#allocation3], %s374
        %p376 = pneg %p84
        %p377 = pneg %p81
        %s378 = smul.u32 2, %s20
        %p379 = scmp.lt.s32.totalorder %s378, 3
        %s380 = scalar_select %p379, %s378, 3
        %s381 = scalar_lea.vmem %s2, %s380
        %p382 = pneg %p110
        %p383 = pneg %p107
        %p384 = pneg %p138
        %p385 = pneg %p135
        %s386 = smul.u32 2, %s20
        %p387 = scmp.lt.s32.totalorder %s19, 0
        %s388 = scalar_select %p387, %s19, 0
        %p389 = scmp.lt.s32.totalorder %s386, 3
        %s390 = scalar_select %p389, %s386, 3
        %s391 = smul.addr %s388, 4
        %s392 = sadd.s32 %s390, %s391
        %s393 = smul.addr %s392, 4
        %s394 = scalar_lea.vmem %s3, %s393
        %s395 = smul.u32 2, %s21
        %p396 = scmp.lt.s32.totalorder %s19, 0
        %s397 = scalar_select %p396, %s19, 0
        %p398 = scmp.lt.s32.totalorder %s395, 35
        %s399 = scalar_select %p398, %s395, 35
        %s400 = smul.addr %s397, 36
        %s401 = sadd.s32 %s399, %s400
        %s402 = smul.addr %s401, 4
        %s403 = scalar_lea.vmem %s0, %s402
        %s404 = smul.u32 2, %s21
        %s405 = smul.u32 32, %s21
        %s406 = smul.u32 2, %s20
        %s407 = smul.u32 2, %s20
        %p408 = scmp.lt.s32.totalorder %s407, 3
        %s409 = scalar_select %p408, %s407, 3
        %s410 = scalar_lea.vmem %s2, %s409
        %s411 = smul.u32 2, %s20
        %s412 = smul.u32 2, %s20
        %p413 = scmp.lt.s32.totalorder %s19, 0
        %s414 = scalar_select %p413, %s19, 0
        %p415 = scmp.lt.s32.totalorder %s412, 3
        %s416 = scalar_select %p415, %s412, 3
        %s417 = smul.addr %s414, 4
        %s418 = sadd.s32 %s416, %s417
        %s419 = smul.addr %s418, 4
        %s420 = scalar_lea.vmem %s3, %s419
        %s421 = smul.u32 2, %s20
        %p422 = scmp.eq.s32.totalorder %s21, 0
        // Predicated region
        $region71: #{_lambda_.14} parent=65 // pred_check
          %p423 = pneg %p422
        $region72: #{_lambda_.14} parent=65 // pred_check_branch
          %425 = sbr.rel (%p423) target = $region74
        $region73: #{_lambda_.14} parent=65 // pred_region
          %426 = vst [vmem:[#allocation2] sm:$0xff] 0.0
          %427 = vst [vmem:[#allocation2 + $0x8] sm:$0xff] 0.0
        $region74: #{_lambda_.14} parent=65 // pred_fallthru
          _
        %v428 = vld [vmem:[#allocation2] sm:$0xff]
        %v429 = vld [vmem:[#allocation2 + $0x8] sm:$0xff]
        %v430 = vld [vmem:[%s403] sm:$0xff]
        %v431 = vld [vmem:[%s357] sm:$0xff]
        %v432 = vld [vmem:[%s357 + $0x8] sm:$0xff]
        %v433 = vld [vmem:[%s357 + $0x10] sm:$0xff]
        %v434 = vld [vmem:[%s357 + $0x18] sm:$0xff]
        %v435 = vld [vmem:[%s357 + $0x20] sm:$0xff]
        %v436 = vld [vmem:[%s357 + $0x28] sm:$0xff]
        %v437 = vld [vmem:[%s357 + $0x30] sm:$0xff]
        %v438 = vld [vmem:[%s357 + $0x38] sm:$0xff]
        %v439 = vld [vmem:[%s357 + $0x40] sm:$0xff]
        %v440 = vld [vmem:[%s357 + $0x48] sm:$0xff]
        %v441 = vld [vmem:[%s357 + $0x50] sm:$0xff]
        %v442 = vld [vmem:[%s357 + $0x58] sm:$0xff]
        %v443 = vld [vmem:[%s357 + $0x60] sm:$0xff]
        %v444 = vld [vmem:[%s357 + $0x68] sm:$0xff]
        %v445 = vld [vmem:[%s357 + $0x70] sm:$0xff]
        %v446 = vld [vmem:[%s357 + $0x78] sm:$0xff]
        %v447 = vld [vmem:[%s357 + $0x80] sm:$0xff]
        %v448 = vld [vmem:[%s357 + $0x88] sm:$0xff]
        %v449 = vld [vmem:[%s357 + $0x90] sm:$0xff]
        %v450 = vld [vmem:[%s357 + $0x98] sm:$0xff]
        %v451 = vld [vmem:[%s357 + $0xa0] sm:$0xff]
        %v452 = vld [vmem:[%s357 + $0xa8] sm:$0xff]
        %v453 = vld [vmem:[%s357 + $0xb0] sm:$0xff]
        %v454 = vld [vmem:[%s357 + $0xb8] sm:$0xff]
        %v455 = vld [vmem:[%s357 + $0xc0] sm:$0xff]
        %v456 = vld [vmem:[%s357 + $0xc8] sm:$0xff]
        %v457 = vld [vmem:[%s357 + $0xd0] sm:$0xff]
        %v458 = vld [vmem:[%s357 + $0xd8] sm:$0xff]
        %v459 = vld [vmem:[%s357 + $0xe0] sm:$0xff]
        %v460 = vld [vmem:[%s357 + $0xe8] sm:$0xff]
        %v461 = vld [vmem:[%s357 + $0xf0] sm:$0xff]
        %v462 = vld [vmem:[%s357 + $0xf8] sm:$0xff]
        %v464 = vunpack.c.l.b16 %v430
        %v465 = vunpack.c.h.b16 %v430
        %v466 = vpack.c.b16 %v464, %v464
        %v467 = vpack.c.b16 %v465, %v465
        %v502 = vunpack.c.l.b16 %v431
        %v503 = vunpack.c.h.b16 %v431
        %v504 = vunpack.c.l.b16 %v432
        %v505 = vunpack.c.h.b16 %v432
        %v506 = vunpack.c.l.b16 %v433
        %v507 = vunpack.c.h.b16 %v433
        %v508 = vunpack.c.l.b16 %v434
        %v509 = vunpack.c.h.b16 %v434
        %v510 = vunpack.c.l.b16 %v435
        %v511 = vunpack.c.h.b16 %v435
        %v512 = vunpack.c.l.b16 %v436
        %v513 = vunpack.c.h.b16 %v436
        %v514 = vunpack.c.l.b16 %v437
        %v515 = vunpack.c.h.b16 %v437
        %v516 = vunpack.c.l.b16 %v438
        %v517 = vunpack.c.h.b16 %v438
        %v518 = vunpack.c.l.b16 %v439
        %v519 = vunpack.c.h.b16 %v439
        %v520 = vunpack.c.l.b16 %v440
        %v521 = vunpack.c.h.b16 %v440
        %v522 = vunpack.c.l.b16 %v441
        %v523 = vunpack.c.h.b16 %v441
        %v524 = vunpack.c.l.b16 %v442
        %v525 = vunpack.c.h.b16 %v442
        %v526 = vunpack.c.l.b16 %v443
        %v527 = vunpack.c.h.b16 %v443
        %v528 = vunpack.c.l.b16 %v444
        %v529 = vunpack.c.h.b16 %v444
        %v530 = vunpack.c.l.b16 %v445
        %v531 = vunpack.c.h.b16 %v445
        %v532 = vunpack.c.l.b16 %v446
        %v533 = vunpack.c.h.b16 %v446
        %v534 = vunpack.c.l.b16 %v447
        %v535 = vunpack.c.h.b16 %v447
        %v536 = vunpack.c.l.b16 %v448
        %v537 = vunpack.c.h.b16 %v448
        %v538 = vunpack.c.l.b16 %v449
        %v539 = vunpack.c.h.b16 %v449
        %v540 = vunpack.c.l.b16 %v450
        %v541 = vunpack.c.h.b16 %v450
        %v542 = vunpack.c.l.b16 %v451
        %v543 = vunpack.c.h.b16 %v451
        %v544 = vunpack.c.l.b16 %v452
        %v545 = vunpack.c.h.b16 %v452
        %v546 = vunpack.c.l.b16 %v453
        %v547 = vunpack.c.h.b16 %v453
        %v548 = vunpack.c.l.b16 %v454
        %v549 = vunpack.c.h.b16 %v454
        %v550 = vunpack.c.l.b16 %v455
        %v551 = vunpack.c.h.b16 %v455
        %v552 = vunpack.c.l.b16 %v456
        %v553 = vunpack.c.h.b16 %v456
        %v554 = vunpack.c.l.b16 %v457
        %v555 = vunpack.c.h.b16 %v457
        %v556 = vunpack.c.l.b16 %v458
        %v557 = vunpack.c.h.b16 %v458
        %v558 = vunpack.c.l.b16 %v459
        %v559 = vunpack.c.h.b16 %v459
        %v560 = vunpack.c.l.b16 %v460
        %v561 = vunpack.c.h.b16 %v460
        %v562 = vunpack.c.l.b16 %v461
        %v563 = vunpack.c.h.b16 %v461
        %v564 = vunpack.c.l.b16 %v462
        %v565 = vunpack.c.h.b16 %v462
        %v566 = vpack.c.b16 %v504, %v502
        %v567 = vpack.c.b16 %v505, %v503
        %v568 = vpack.c.b16 %v508, %v506
        %v569 = vpack.c.b16 %v509, %v507
        %v570 = vpack.c.b16 %v512, %v510
        %v571 = vpack.c.b16 %v513, %v511
        %v572 = vpack.c.b16 %v516, %v514
        %v573 = vpack.c.b16 %v517, %v515
        %v574 = vpack.c.b16 %v520, %v518
        %v575 = vpack.c.b16 %v521, %v519
        %v576 = vpack.c.b16 %v524, %v522
        %v577 = vpack.c.b16 %v525, %v523
        %v578 = vpack.c.b16 %v528, %v526
        %v579 = vpack.c.b16 %v529, %v527
        %v580 = vpack.c.b16 %v532, %v530
        %v581 = vpack.c.b16 %v533, %v531
        %v582 = vpack.c.b16 %v536, %v534
        %v583 = vpack.c.b16 %v537, %v535
        %v584 = vpack.c.b16 %v540, %v538
        %v585 = vpack.c.b16 %v541, %v539
        %v586 = vpack.c.b16 %v544, %v542
        %v587 = vpack.c.b16 %v545, %v543
        %v588 = vpack.c.b16 %v548, %v546
        %v589 = vpack.c.b16 %v549, %v547
        %v590 = vpack.c.b16 %v552, %v550
        %v591 = vpack.c.b16 %v553, %v551
        %v592 = vpack.c.b16 %v556, %v554
        %v593 = vpack.c.b16 %v557, %v555
        %v594 = vpack.c.b16 %v560, %v558
        %v595 = vpack.c.b16 %v561, %v559
        %v596 = vpack.c.b16 %v564, %v562
        %v597 = vpack.c.b16 %v565, %v563
        %630 = vmatprep.subr.bf16.mxu0 %v567
        %631 = vmatpush1.bf16.msra.mxu0 %v566
        %632 = vmatprep.subr.bf16.mxu0 %v569
        %633 = vmatpush1.bf16.msra.mxu0 %v568
        %634 = vmatprep.subr.bf16.mxu0 %v571
        %635 = vmatpush1.bf16.msra.mxu0 %v570
        %636 = vmatprep.subr.bf16.mxu0 %v573
        %637 = vmatpush1.bf16.msra.mxu0 %v572
        %638 = vmatprep.subr.bf16.mxu0 %v575
        %639 = vmatpush1.bf16.msra.mxu0 %v574
        %640 = vmatprep.subr.bf16.mxu0 %v577
        %641 = vmatpush1.bf16.msra.mxu0 %v576
        %642 = vmatprep.subr.bf16.mxu0 %v579
        %643 = vmatpush1.bf16.msra.mxu0 %v578
        %644 = vmatprep.subr.bf16.mxu0 %v581
        %645 = vmatpush1.bf16.msra.mxu0 %v580
        %646 = vmatprep.subr.bf16.mxu0 %v583
        %647 = vmatpush1.bf16.msra.mxu0 %v582
        %648 = vmatprep.subr.bf16.mxu0 %v585
        %649 = vmatpush1.bf16.msra.mxu0 %v584
        %650 = vmatprep.subr.bf16.mxu0 %v587
        %651 = vmatpush1.bf16.msra.mxu0 %v586
        %652 = vmatprep.subr.bf16.mxu0 %v589
        %653 = vmatpush1.bf16.msra.mxu0 %v588
        %654 = vmatprep.subr.bf16.mxu0 %v591
        %655 = vmatpush1.bf16.msra.mxu0 %v590
        %656 = vmatprep.subr.bf16.mxu0 %v593
        %657 = vmatpush1.bf16.msra.mxu0 %v592
        %658 = vmatprep.subr.bf16.mxu0 %v595
        %659 = vmatpush1.bf16.msra.mxu0 %v594
        %660 = vmatprep.subr.bf16.mxu0 %v597
        %661 = vmatpush1.bf16.msra.mxu0 %v596
        %662 = vmatprep.mubr.bf16.mxu0 %v467
        %663 = vmatmul.mubr.bf16.gmra.mrb[0].mxu0 %v466
        %v664 = vpop.f32.mrb[0].mxu0
        %v665 = vadd.f32 0.0, %v664
        %v666 = vpop.f32.mrb[0].mxu0
        %v667 = vadd.f32 0.0, %v666
        %v668 = vpop.f32.mrb[0].mxu0
        %v669 = vpop.f32.mrb[0].mxu0
        %670 = vdwg.mxu0
        %v671 = vadd.f32 %v428, %v665
        %v672 = vadd.f32 %v429, %v667
        %673 = vst [vmem:[#allocation2] sm:$0xff] %v671
        %674 = vst [vmem:[#allocation2 + $0x8] sm:$0xff] %v672
        %p675 = scmp.eq.s32.totalorder %s21, 17
        // Predicated region
        $region75: #{_lambda_.14} parent=65 // pred_check
          %p676 = pneg %p675
        $region76: #{_lambda_.14} parent=65 // pred_check_branch
          %678 = sbr.rel (%p676) target = $region78
        $region77: #{_lambda_.14} parent=65 // pred_region
          %v679 = vld [vmem:[#allocation2] sm:$0xff]
          %v680 = vld [vmem:[#allocation2 + $0x8] sm:$0xff]
          %v681 = vld [vmem:[%s410] sm:$0x3]
          %v683 = vlaneseq
          %v684 = vshrl.u32 %v683, 7
          %v685 = vsub.s32 0, %v684
          %v686 = vrot.slane %v681, %v685
          %v687 = vlaneseq
          %v688 = vshrl.u32 %v687, 7
          %v689 = vsub.s32 1, %v688
          %v690 = vrot.slane %v681, %v689
          %v693 = vadd.f32 %v679, %v686
          %v694 = vadd.f32 %v680, %v690
          %v695 = vmax.f32 %v693, 0.0
          %v696 = vmax.f32 %v694, 0.0
          %v697 = vpack.c.bf16 %v695, %v695
          %v698 = vpack.c.bf16 %v696, %v696
          %v701 = vunpack.c.l.b16 %v697
          %v702 = vunpack.c.l.b16 %v698
          %v703 = vpack.c.b16 %v702, %v701
          %705 = vst [vmem:[%s420] sm:$0xff] %v703
        $region78: #{_lambda_.14} parent=65 // pred_fallthru
          _
        %s706 = smul.u32 2, %s20
        %p707 = scmp.lt.s32.totalorder %s19, 0
        %s708 = scalar_select %p707, %s19, 0
        %p709 = scmp.lt.s32.totalorder %s706, 3
        %s710 = scalar_select %p709, %s706, 3
        %s711 = smul.addr %s708, 4
        %s712 = sadd.s32 %s710, %s711
        %s713 = smul.addr %s712, 4
        %s714 = scalar_lea.vmem %s3, %s713
        // Predicated region
        $region79: #{_lambda_.14} parent=65 // pred_check
          %p715 = pneg %p135
        $region80: #{_lambda_.14} parent=65 // pred_check_branch
          %717 = sbr.rel (%p715) target = $region82
        $region81: #{_lambda_.14} parent=65 // pred_region
          %s718 = smul.u32 2, %s20
        $region82: #{_lambda_.14} parent=65 // pred_fallthru
          _
      $region66: #{_lambda_.14} parent=5 // pred_fallthru
        _
      %p719 = scmp.le.s32.totalorder 2, %s9
      // Predicated region
      $region83: #{_lambda_.14} parent=5 // pred_check
        %p720 = pneg %p719
      $region84: #{_lambda_.14} parent=5 // pred_check_branch
        %722 = sbr.rel (%p720) target = $region86
      $region85: #{_lambda_.14} parent=5 // pred_region
        %s723 = ssub.s32 %s9, 2
        // Predicated region
        $region87: #{_lambda_.14} parent=85 // pred_check
          %p724 = pneg %p141
        $region88: #{_lambda_.14} parent=85 // pred_check_branch
          %726 = sbr.rel (%p724) target = $region90
        $region89: #{_lambda_.14} parent=85 // pred_region
          %s727 = smul.u32 2, %s23
          %p728 = scmp.lt.s32.totalorder %s22, 0
          %s729 = scalar_select %p728, %s22, 0
          %p730 = scmp.lt.s32.totalorder %s727, 3
          %s731 = scalar_select %p730, %s727, 3
          %s732 = smul.addr %s729, 4
          %s733 = sadd.s32 %s731, %s732
          %s734 = smul.addr %s733, 4
          %s735 = scalar_lea.vmem %s3, %s734
        $region90: #{_lambda_.14} parent=85 // pred_fallthru
          _
      $region86: #{_lambda_.14} parent=5 // pred_fallthru
        _
    $region6: #{_lambda_.14} parent=1 // loop_footer
      %s13 = sadd.s32 1, %s9
    $region7: #{_lambda_.14} parent=1 // loop_footer_branch
      %8 = sbr.rel target = $region3
    $region8: #{_lambda_.14} parent=1 // loop_exit
      _

// kernel: _lambda_.15
$region0: #{_lambda_.15}
  #allocation0 [shape = 'u32[]', space=smem, size = 0x4, offset = 0x4, fixed_abs, tag = 'smem constant byte address 0x4 - core index']
  #allocation1 [shape = 'u32[144,128]{1,0:T(1,128)}', space=vmem, size = 0x12000, scoped, tag = 'internal scratch']
  #allocation2 [shape = 'f32[8,256]{1,0:T(8,128)}', space=vmem, size = 0x2000, scoped, tag = 'scratch operand']
  %s0 = inlined_call_operand.vmem [shape: bf16[8,4608], index: 0, kind: input, shape index: {}]
  %s1 = inlined_call_operand.vmem [shape: bf16[4608,256], index: 1, kind: input, shape index: {}]
  %s2 = inlined_call_operand.vmem [shape: f32[1,256], index: 2, kind: input, shape index: {}]
  %s3 = inlined_call_operand.vmem [shape: f32[8,256], index: 3, kind: output, shape index: {}]
  %s4 = sld [smem:[#allocation0]]
  $region53: #{_lambda_.15} parent=0
    _
  %s6 = ssub.s32 1, %s4
  %s7 = scalar_select 0, %s6, %s4
  loop: start=0, step=1, limit=20
  $region2: #{_lambda_.15} parent=0 // loop_pre_header
    _
  $region3: #{_lambda_.15} parent=0 // loop_header
    %s9 = sphi 0, %s13
    %p10 = scmp.ge.s32.totalorder %s9, 20
    %s16 = sphi 0, %s35
    %s17 = sphi 0, %s31
    %s18 = sphi 0, %s27
    %s19 = sphi 0, %s16
    %s20 = sphi 0, %s17
    %s21 = sphi 0, %s18
    %s22 = sphi 0, %s19
    %s23 = sphi 0, %s20
    %s24 = sphi 0, %s21
    %s40 = sphi 0, %s42
    %s43 = sphi 0, %s40
    %s44 = sphi 0, %s43
    %s60 = sphi 0, %s44
    %s68 = sphi 0, %s70
    %s71 = sphi 0, %s68
    %s72 = sphi 0, %s71
    %s88 = sphi 0, %s72
    %s94 = sphi 0, %s96
    %s97 = sphi 0, %s94
    %s98 = sphi 0, %s97
    %s114 = sphi 0, %s98
    %s122 = sphi 0, %s124
    %s125 = sphi 0, %s122
    %s126 = sphi 0, %s125
    %s142 = sphi 0, %s126
  $region4: #{_lambda_.15} parent=0 // loop_header_branch
    %12 = sbr.rel (%p10) target = $region8
  $region5: #{_lambda_.15} parent=0 // loop_body
    %s14 = ssub.s32 %s9, 1
    %s15 = ssub.s32 %s9, 2
    %s25 = sadd.s32 1, %s18
    %p26 = scmp.ge.s32.totalorder %s25, 18
    %s27 = scalar_select %p26, 0, %s25
    %s28 = sadd.s32 1, %s17
    %s29 = scalar_select %p26, %s28, %s17
    %p30 = scmp.ge.s32.totalorder %s29, 1
    %s31 = scalar_select %p30, 0, %s29
    %s32 = sadd.s32 1, %s16
    %s33 = scalar_select %p30, %s32, %s16
    %p34 = scmp.ge.s32.totalorder %s33, 1
    %s35 = scalar_select %p34, 0, %s33
    %s36 = ssub.s32 %s16, %s35
    %s37 = ssub.s32 %s18, %s27
    %s38 = sor.u32 %s36, %s37
    %p39 = scmp.eq.s32.totalorder %s38, 0
    %s41 = sadd.s32 %s40, 1
    %s42 = scalar_select %p39, %s40, %s41
    %p45 = pneg %p39
    %p46 = scmp.eq.s32.totalorder %s9, 17
    %p47 = por %p45, %p46
    %p48 = scmp.ne.s32.totalorder %s40, %s43
    %p49 = scmp.eq.s32.totalorder %s9, 0
    %p50 = por %p48, %p49
    %p51 = scmp.ne.s32.totalorder %s40, %s43
    %p52 = scmp.eq.s32.totalorder %s14, 17
    %p53 = por %p51, %p52
    %p54 = scmp.ne.s32.totalorder %s43, %s44
    %p55 = scmp.eq.s32.totalorder %s14, 0
    %p56 = por %p54, %p55
    %p57 = scmp.ne.s32.totalorder %s43, %s44
    %p58 = scmp.eq.s32.totalorder %s15, 17
    %p59 = por %p57, %p58
    %p61 = scmp.ne.s32.totalorder %s44, %s60
    %p62 = scmp.eq.s32.totalorder %s15, 0
    %p63 = por %p61, %p62
    %s64 = ssub.s32 %s18, %s27
    %s65 = ssub.s32 %s17, %s31
    %s66 = sor.u32 %s64, %s65
    %p67 = scmp.eq.s32.totalorder %s66, 0
    %s69 = sadd.s32 %s68, 1
    %s70 = scalar_select %p67, %s68, %s69
    %p73 = pneg %p67
    %p74 = scmp.eq.s32.totalorder %s9, 17
    %p75 = por %p73, %p74
    %p76 = scmp.ne.s32.totalorder %s68, %s71
    %p77 = scmp.eq.s32.totalorder %s9, 0
    %p78 = por %p76, %p77
    %p79 = scmp.ne.s32.totalorder %s68, %s71
    %p80 = scmp.eq.s32.totalorder %s14, 17
    %p81 = por %p79, %p80
    %p82 = scmp.ne.s32.totalorder %s71, %s72
    %p83 = scmp.eq.s32.totalorder %s14, 0
    %p84 = por %p82, %p83
    %p85 = scmp.ne.s32.totalorder %s71, %s72
    %p86 = scmp.eq.s32.totalorder %s15, 17
    %p87 = por %p85, %p86
    %p89 = scmp.ne.s32.totalorder %s72, %s88
    %p90 = scmp.eq.s32.totalorder %s15, 0
    %p91 = por %p89, %p90
    %s92 = ssub.s32 %s17, %s31
    %p93 = scmp.eq.s32.totalorder %s92, 0
    %s95 = sadd.s32 %s94, 1
    %s96 = scalar_select %p93, %s94, %s95
    %p99 = pneg %p93
    %p100 = scmp.eq.s32.totalorder %s9, 17
    %p101 = por %p99, %p100
    %p102 = scmp.ne.s32.totalorder %s94, %s97
    %p103 = scmp.eq.s32.totalorder %s9, 0
    %p104 = por %p102, %p103
    %p105 = scmp.ne.s32.totalorder %s94, %s97
    %p106 = scmp.eq.s32.totalorder %s14, 17
    %p107 = por %p105, %p106
    %p108 = scmp.ne.s32.totalorder %s97, %s98
    %p109 = scmp.eq.s32.totalorder %s14, 0
    %p110 = por %p108, %p109
    %p111 = scmp.ne.s32.totalorder %s97, %s98
    %p112 = scmp.eq.s32.totalorder %s15, 17
    %p113 = por %p111, %p112
    %p115 = scmp.ne.s32.totalorder %s98, %s114
    %p116 = scmp.eq.s32.totalorder %s15, 0
    %p117 = por %p115, %p116
    %s118 = ssub.s32 %s16, %s35
    %s119 = ssub.s32 %s17, %s31
    %s120 = sor.u32 %s118, %s119
    %p121 = scmp.eq.s32.totalorder %s120, 0
    %s123 = sadd.s32 %s122, 1
    %s124 = scalar_select %p121, %s122, %s123
    %p127 = pneg %p121
    %p128 = scmp.eq.s32.totalorder %s9, 17
    %p129 = por %p127, %p128
    %p130 = scmp.ne.s32.totalorder %s122, %s125
    %p131 = scmp.eq.s32.totalorder %s9, 0
    %p132 = por %p130, %p131
    %p133 = scmp.ne.s32.totalorder %s122, %s125
    %p134 = scmp.eq.s32.totalorder %s14, 17
    %p135 = por %p133, %p134
    %p136 = scmp.ne.s32.totalorder %s125, %s126
    %p137 = scmp.eq.s32.totalorder %s14, 0
    %p138 = por %p136, %p137
    %p139 = scmp.ne.s32.totalorder %s125, %s126
    %p140 = scmp.eq.s32.totalorder %s15, 17
    %p141 = por %p139, %p140
    %p143 = scmp.ne.s32.totalorder %s126, %s142
    %p144 = scmp.eq.s32.totalorder %s15, 0
    %p145 = por %p143, %p144
    %p146 = scmp.le.s32.totalorder 1, %s9
    %p147 = scmp.lt.s32.totalorder %s9, 19
    %p148 = pnand %p146, %p147
    %p149 = pneg %p148
    // Predicated region
    $region9: #{_lambda_.15} parent=5 // pred_check
      _
    $region10: #{_lambda_.15} parent=5 // pred_check_branch
      %151 = sbr.rel (%p148) target = $region12
    $region11: #{_lambda_.15} parent=5 // pred_region
      %s152 = ssub.s32 %s9, 1
      // Predicated region
      $region13: #{_lambda_.15} parent=11 // pred_check
        %p153 = pneg %p110
      $region14: #{_lambda_.15} parent=11 // pred_check_branch
        %155 = sbr.rel (%p153) target = $region16
      $region15: #{_lambda_.15} parent=11 // pred_region
        %s156 = smul.u32 2, %s20
        %p157 = scmp.lt.s32.totalorder %s156, 1
        %s158 = scalar_select %p157, %s156, 1
        %s159 = scalar_lea.vmem %s2, %s158
        %s160 = smul.u32 2, %s20
      $region16: #{_lambda_.15} parent=11 // pred_fallthru
        _
    $region12: #{_lambda_.15} parent=5 // pred_fallthru
      _
    %p161 = scmp.lt.s32.totalorder %s9, 18
    // Predicated region
    $region17: #{_lambda_.15} parent=5 // pred_check
      %p162 = pneg %p161
    $region18: #{_lambda_.15} parent=5 // pred_check_branch
      %164 = sbr.rel (%p162) target = $region20
    $region19: #{_lambda_.15} parent=5 // pred_region
      // Predicated region
      $region21: #{_lambda_.15} parent=19 // pred_check
        %p165 = pneg %p50
      $region22: #{_lambda_.15} parent=19 // pred_check_branch
        %167 = sbr.rel (%p165) target = $region24
      $region23: #{_lambda_.15} parent=19 // pred_region
        %s168 = smul.u32 2, %s18
        %p169 = scmp.lt.s32.totalorder %s16, 0
        %s170 = scalar_select %p169, %s16, 0
        %p171 = scmp.lt.s32.totalorder %s168, 35
        %s172 = scalar_select %p171, %s168, 35
        %s173 = smul.addr %s170, 36
        %s174 = sadd.s32 %s172, %s173
        %s175 = smul.addr %s174, 4
        %s176 = scalar_lea.vmem %s0, %s175
        %s177 = smul.u32 2, %s18
      $region24: #{_lambda_.15} parent=19 // pred_fallthru
        _
      // Predicated region
      $region25: #{_lambda_.15} parent=19 // pred_check
        %p178 = pneg %p78
      $region26: #{_lambda_.15} parent=19 // pred_check_branch
        %180 = sbr.rel (%p178) target = $region28
      $region27: #{_lambda_.15} parent=19 // pred_region
        %s181 = smul.u32 32, %s18
        %s182 = smul.u32 2, %s17
        %p183 = scmp.lt.s32.totalorder %s181, 575
        %s184 = scalar_select %p183, %s181, 575
        %p185 = scmp.lt.s32.totalorder %s182, 1
        %s186 = scalar_select %p185, %s182, 1
        %s187 = smul.addr %s184, 2
        %s188 = sadd.s32 %s186, %s187
        %s189 = smul.addr %s188, 4
        %s190 = scalar_lea.vmem %s1, %s189
        %s191 = smul.u32 32, %s18
        %s192 = smul.u32 2, %s17
      $region28: #{_lambda_.15} parent=19 // pred_fallthru
        _
    $region20: #{_lambda_.15} parent=5 // pred_fallthru
      _
    %p193 = scmp.le.s32.totalorder 1, %s9
    %p194 = scmp.lt.s32.totalorder %s9, 19
    %p195 = pnand %p193, %p194
    %p196 = pneg %p195
    // Predicated region
    $region29: #{_lambda_.15} parent=5 // pred_check
      _
    $region30: #{_lambda_.15} parent=5 // pred_check_branch
      %198 = sbr.rel (%p195) target = $region32
    $region31: #{_lambda_.15} parent=5 // pred_region
      %s199 = ssub.s32 %s9, 1
      %s200 = smul.u32 2, %s21
      %p201 = scmp.lt.s32.totalorder %s19, 0
      %s202 = scalar_select %p201, %s19, 0
      %p203 = scmp.lt.s32.totalorder %s200, 35
      %s204 = scalar_select %p203, %s200, 35
      %s205 = smul.addr %s202, 36
      %s206 = sadd.s32 %s204, %s205
      %s207 = smul.addr %s206, 4
      %s208 = scalar_lea.vmem %s0, %s207
      %p209 = pneg %p56
      %p210 = pneg %p53
      %s211 = smul.u32 32, %s21
      %s212 = smul.u32 2, %s20
      %p213 = scmp.lt.s32.totalorder %s211, 575
      %s214 = scalar_select %p213, %s211, 575
      %p215 = scmp.lt.s32.totalorder %s212, 1
      %s216 = scalar_select %p215, %s212, 1
      %s217 = smul.addr %s214, 2
      %s218 = sadd.s32 %s216, %s217
      %s219 = smul.addr %s218, 4
      %s220 = scalar_lea.vmem %s1, %s219
      %p221 = pneg %p84
      %p222 = pneg %p81
      %s223 = smul.u32 2, %s20
      %p224 = scmp.lt.s32.totalorder %s223, 1
      %s225 = scalar_select %p224, %s223, 1
      %s226 = scalar_lea.vmem %s2, %s225
      %p227 = pneg %p110
      %p228 = pneg %p107
      %p229 = pneg %p138
      %p230 = pneg %p135
      %s231 = smul.u32 2, %s20
      %p232 = scmp.lt.s32.totalorder %s19, 0
      %s233 = scalar_select %p232, %s19, 0
      %p234 = scmp.lt.s32.totalorder %s231, 1
      %s235 = scalar_select %p234, %s231, 1
      %s236 = smul.addr %s233, 2
      %s237 = sadd.s32 %s235, %s236
      %s238 = smul.addr %s237, 8
      %s239 = scalar_lea.vmem %s3, %s238
      %s240 = smul.u32 2, %s21
      %p241 = scmp.lt.s32.totalorder %s19, 0
      %s242 = scalar_select %p241, %s19, 0
      %p243 = scmp.lt.s32.totalorder %s240, 35
      %s244 = scalar_select %p243, %s240, 35
      %s245 = smul.addr %s242, 36
      %s246 = sadd.s32 %s244, %s245
      %s247 = smul.addr %s246, 4
      %s248 = scalar_lea.vmem %s0, %s247
      %s249 = smul.u32 2, %s21
      %s250 = smul.u32 32, %s21
      %s251 = smul.u32 2, %s20
      %p252 = scmp.lt.s32.totalorder %s250, 575
      %s253 = scalar_select %p252, %s250, 575
      %p254 = scmp.lt.s32.totalorder %s251, 1
      %s255 = scalar_select %p254, %s251, 1
      %s256 = smul.addr %s253, 2
      %s257 = sadd.s32 %s255, %s256
      %s258 = smul.addr %s257, 4
      %s259 = scalar_lea.vmem %s1, %s258
      %s260 = smul.u32 32, %s21
      %s261 = smul.u32 2, %s20
      %s262 = smul.u32 2, %s20
      %p263 = scmp.lt.s32.totalorder %s262, 1
      %s264 = scalar_select %p263, %s262, 1
      %s265 = scalar_lea.vmem %s2, %s264
      %s266 = smul.u32 2, %s20
      %s267 = smul.u32 2, %s20
      %p268 = scmp.lt.s32.totalorder %s19, 0
      %s269 = scalar_select %p268, %s19, 0
      %p270 = scmp.lt.s32.totalorder %s267, 1
      %s271 = scalar_select %p270, %s267, 1
      %s272 = smul.addr %s269, 2
      %s273 = sadd.s32 %s271, %s272
      %s274 = smul.addr %s273, 8
      %s275 = scalar_lea.vmem %s3, %s274
      %s276 = smul.u32 2, %s20
      %p277 = scmp.eq.s32.totalorder %s21, 0
      // Predicated region
      $region33: #{_lambda_.15} parent=31 // pred_check
        %p278 = pneg %p277
      $region34: #{_lambda_.15} parent=31 // pred_check_branch
        %280 = sbr.rel (%p278) target = $region36
      $region35: #{_lambda_.15} parent=31 // pred_region
        %281 = vst [vmem:[#allocation2] sm:$0xff] 0.0
        %282 = vst [vmem:[#allocation2 + $0x8] sm:$0xff] 0.0
      $region36: #{_lambda_.15} parent=31 // pred_fallthru
        _
      %v283 = vld [vmem:[#allocation2] sm:$0xff]
      %v284 = vld [vmem:[#allocation2 + $0x8] sm:$0xff]
      %v285 = vld [vmem:[%s248] sm:$0xff]
      %v286 = vld [vmem:[%s259] sm:$0xff]
      %v287 = vld [vmem:[%s259 + $0x8] sm:$0xff]
      %v288 = vld [vmem:[%s259 + $0x10] sm:$0xff]
      %v289 = vld [vmem:[%s259 + $0x18] sm:$0xff]
      %v290 = vld [vmem:[%s259 + $0x20] sm:$0xff]
      %v291 = vld [vmem:[%s259 + $0x28] sm:$0xff]
      %v292 = vld [vmem:[%s259 + $0x30] sm:$0xff]
      %v293 = vld [vmem:[%s259 + $0x38] sm:$0xff]
      %v294 = vld [vmem:[%s259 + $0x40] sm:$0xff]
      %v295 = vld [vmem:[%s259 + $0x48] sm:$0xff]
      %v296 = vld [vmem:[%s259 + $0x50] sm:$0xff]
      %v297 = vld [vmem:[%s259 + $0x58] sm:$0xff]
      %v298 = vld [vmem:[%s259 + $0x60] sm:$0xff]
      %v299 = vld [vmem:[%s259 + $0x68] sm:$0xff]
      %v300 = vld [vmem:[%s259 + $0x70] sm:$0xff]
      %v301 = vld [vmem:[%s259 + $0x78] sm:$0xff]
      %v302 = vld [vmem:[%s259 + $0x80] sm:$0xff]
      %v303 = vld [vmem:[%s259 + $0x88] sm:$0xff]
      %v304 = vld [vmem:[%s259 + $0x90] sm:$0xff]
      %v305 = vld [vmem:[%s259 + $0x98] sm:$0xff]
      %v306 = vld [vmem:[%s259 + $0xa0] sm:$0xff]
      %v307 = vld [vmem:[%s259 + $0xa8] sm:$0xff]
      %v308 = vld [vmem:[%s259 + $0xb0] sm:$0xff]
      %v309 = vld [vmem:[%s259 + $0xb8] sm:$0xff]
      %v310 = vld [vmem:[%s259 + $0xc0] sm:$0xff]
      %v311 = vld [vmem:[%s259 + $0xc8] sm:$0xff]
      %v312 = vld [vmem:[%s259 + $0xd0] sm:$0xff]
      %v313 = vld [vmem:[%s259 + $0xd8] sm:$0xff]
      %v314 = vld [vmem:[%s259 + $0xe0] sm:$0xff]
      %v315 = vld [vmem:[%s259 + $0xe8] sm:$0xff]
      %v316 = vld [vmem:[%s259 + $0xf0] sm:$0xff]
      %v317 = vld [vmem:[%s259 + $0xf8] sm:$0xff]
      %v319 = vunpack.c.l.b16 %v285
      %v320 = vunpack.c.h.b16 %v285
      %v321 = vpack.c.b16 %v319, %v319
      %v322 = vpack.c.b16 %v320, %v320
      %v357 = vunpack.c.l.b16 %v286
      %v358 = vunpack.c.h.b16 %v286
      %v359 = vunpack.c.l.b16 %v287
      %v360 = vunpack.c.h.b16 %v287
      %v361 = vunpack.c.l.b16 %v288
      %v362 = vunpack.c.h.b16 %v288
      %v363 = vunpack.c.l.b16 %v289
      %v364 = vunpack.c.h.b16 %v289
      %v365 = vunpack.c.l.b16 %v290
      %v366 = vunpack.c.h.b16 %v290
      %v367 = vunpack.c.l.b16 %v291
      %v368 = vunpack.c.h.b16 %v291
      %v369 = vunpack.c.l.b16 %v292
      %v370 = vunpack.c.h.b16 %v292
      %v371 = vunpack.c.l.b16 %v293
      %v372 = vunpack.c.h.b16 %v293
      %v373 = vunpack.c.l.b16 %v294
      %v374 = vunpack.c.h.b16 %v294
      %v375 = vunpack.c.l.b16 %v295
      %v376 = vunpack.c.h.b16 %v295
      %v377 = vunpack.c.l.b16 %v296
      %v378 = vunpack.c.h.b16 %v296
      %v379 = vunpack.c.l.b16 %v297
      %v380 = vunpack.c.h.b16 %v297
      %v381 = vunpack.c.l.b16 %v298
      %v382 = vunpack.c.h.b16 %v298
      %v383 = vunpack.c.l.b16 %v299
      %v384 = vunpack.c.h.b16 %v299
      %v385 = vunpack.c.l.b16 %v300
      %v386 = vunpack.c.h.b16 %v300
      %v387 = vunpack.c.l.b16 %v301
      %v388 = vunpack.c.h.b16 %v301
      %v389 = vunpack.c.l.b16 %v302
      %v390 = vunpack.c.h.b16 %v302
      %v391 = vunpack.c.l.b16 %v303
      %v392 = vunpack.c.h.b16 %v303
      %v393 = vunpack.c.l.b16 %v304
      %v394 = vunpack.c.h.b16 %v304
      %v395 = vunpack.c.l.b16 %v305
      %v396 = vunpack.c.h.b16 %v305
      %v397 = vunpack.c.l.b16 %v306
      %v398 = vunpack.c.h.b16 %v306
      %v399 = vunpack.c.l.b16 %v307
      %v400 = vunpack.c.h.b16 %v307
      %v401 = vunpack.c.l.b16 %v308
      %v402 = vunpack.c.h.b16 %v308
      %v403 = vunpack.c.l.b16 %v309
      %v404 = vunpack.c.h.b16 %v309
      %v405 = vunpack.c.l.b16 %v310
      %v406 = vunpack.c.h.b16 %v310
      %v407 = vunpack.c.l.b16 %v311
      %v408 = vunpack.c.h.b16 %v311
      %v409 = vunpack.c.l.b16 %v312
      %v410 = vunpack.c.h.b16 %v312
      %v411 = vunpack.c.l.b16 %v313
      %v412 = vunpack.c.h.b16 %v313
      %v413 = vunpack.c.l.b16 %v314
      %v414 = vunpack.c.h.b16 %v314
      %v415 = vunpack.c.l.b16 %v315
      %v416 = vunpack.c.h.b16 %v315
      %v417 = vunpack.c.l.b16 %v316
      %v418 = vunpack.c.h.b16 %v316
      %v419 = vunpack.c.l.b16 %v317
      %v420 = vunpack.c.h.b16 %v317
      %v421 = vpack.c.b16 %v359, %v357
      %v422 = vpack.c.b16 %v360, %v358
      %v423 = vpack.c.b16 %v363, %v361
      %v424 = vpack.c.b16 %v364, %v362
      %v425 = vpack.c.b16 %v367, %v365
      %v426 = vpack.c.b16 %v368, %v366
      %v427 = vpack.c.b16 %v371, %v369
      %v428 = vpack.c.b16 %v372, %v370
      %v429 = vpack.c.b16 %v375, %v373
      %v430 = vpack.c.b16 %v376, %v374
      %v431 = vpack.c.b16 %v379, %v377
      %v432 = vpack.c.b16 %v380, %v378
      %v433 = vpack.c.b16 %v383, %v381
      %v434 = vpack.c.b16 %v384, %v382
      %v435 = vpack.c.b16 %v387, %v385
      %v436 = vpack.c.b16 %v388, %v386
      %v437 = vpack.c.b16 %v391, %v389
      %v438 = vpack.c.b16 %v392, %v390
      %v439 = vpack.c.b16 %v395, %v393
      %v440 = vpack.c.b16 %v396, %v394
      %v441 = vpack.c.b16 %v399, %v397
      %v442 = vpack.c.b16 %v400, %v398
      %v443 = vpack.c.b16 %v403, %v401
      %v444 = vpack.c.b16 %v404, %v402
      %v445 = vpack.c.b16 %v407, %v405
      %v446 = vpack.c.b16 %v408, %v406
      %v447 = vpack.c.b16 %v411, %v409
      %v448 = vpack.c.b16 %v412, %v410
      %v449 = vpack.c.b16 %v415, %v413
      %v450 = vpack.c.b16 %v416, %v414
      %v451 = vpack.c.b16 %v419, %v417
      %v452 = vpack.c.b16 %v420, %v418
      %485 = vmatprep.subr.bf16.mxu0 %v422
      %486 = vmatpush1.bf16.msra.mxu0 %v421
      %487 = vmatprep.subr.bf16.mxu0 %v424
      %488 = vmatpush1.bf16.msra.mxu0 %v423
      %489 = vmatprep.subr.bf16.mxu0 %v426
      %490 = vmatpush1.bf16.msra.mxu0 %v425
      %491 = vmatprep.subr.bf16.mxu0 %v428
      %492 = vmatpush1.bf16.msra.mxu0 %v427
      %493 = vmatprep.subr.bf16.mxu0 %v430
      %494 = vmatpush1.bf16.msra.mxu0 %v429
      %495 = vmatprep.subr.bf16.mxu0 %v432
      %496 = vmatpush1.bf16.msra.mxu0 %v431
      %497 = vmatprep.subr.bf16.mxu0 %v434
      %498 = vmatpush1.bf16.msra.mxu0 %v433
      %499 = vmatprep.subr.bf16.mxu0 %v436
      %500 = vmatpush1.bf16.msra.mxu0 %v435
      %501 = vmatprep.subr.bf16.mxu0 %v438
      %502 = vmatpush1.bf16.msra.mxu0 %v437
      %503 = vmatprep.subr.bf16.mxu0 %v440
      %504 = vmatpush1.bf16.msra.mxu0 %v439
      %505 = vmatprep.subr.bf16.mxu0 %v442
      %506 = vmatpush1.bf16.msra.mxu0 %v441
      %507 = vmatprep.subr.bf16.mxu0 %v444
      %508 = vmatpush1.bf16.msra.mxu0 %v443
      %509 = vmatprep.subr.bf16.mxu0 %v446
      %510 = vmatpush1.bf16.msra.mxu0 %v445
      %511 = vmatprep.subr.bf16.mxu0 %v448
      %512 = vmatpush1.bf16.msra.mxu0 %v447
      %513 = vmatprep.subr.bf16.mxu0 %v450
      %514 = vmatpush1.bf16.msra.mxu0 %v449
      %515 = vmatprep.subr.bf16.mxu0 %v452
      %516 = vmatpush1.bf16.msra.mxu0 %v451
      %517 = vmatprep.mubr.bf16.mxu0 %v322
      %518 = vmatmul.mubr.bf16.gmra.mrb[0].mxu0 %v321
      %v519 = vpop.f32.mrb[0].mxu0
      %v520 = vadd.f32 0.0, %v519
      %v521 = vpop.f32.mrb[0].mxu0
      %v522 = vadd.f32 0.0, %v521
      %v523 = vpop.f32.mrb[0].mxu0
      %v524 = vpop.f32.mrb[0].mxu0
      %525 = vdwg.mxu0
      %v526 = vadd.f32 %v283, %v520
      %v527 = vadd.f32 %v284, %v522
      %528 = vst [vmem:[#allocation2] sm:$0xff] %v526
      %529 = vst [vmem:[#allocation2 + $0x8] sm:$0xff] %v527
      %p530 = scmp.eq.s32.totalorder %s21, 17
      // Predicated region
      $region37: #{_lambda_.15} parent=31 // pred_check
        %p531 = pneg %p530
      $region38: #{_lambda_.15} parent=31 // pred_check_branch
        %533 = sbr.rel (%p531) target = $region40
      $region39: #{_lambda_.15} parent=31 // pred_region
        %v534 = vld [vmem:[#allocation2] sm:$0xff]
        %v535 = vld [vmem:[#allocation2 + $0x8] sm:$0xff]
        %v536 = vld [vmem:[%s265] sm:$0x3]
        %v538 = vlaneseq
        %v539 = vshrl.u32 %v538, 7
        %v540 = vsub.s32 0, %v539
        %v541 = vrot.slane %v536, %v540
        %v542 = vlaneseq
        %v543 = vshrl.u32 %v542, 7
        %v544 = vsub.s32 1, %v543
        %v545 = vrot.slane %v536, %v544
        %v548 = vadd.f32 %v534, %v541
        %v549 = vadd.f32 %v535, %v545
        %v550 = vmax.f32 %v548, 0.0
        %v551 = vmax.f32 %v549, 0.0
        %552 = vst [vmem:[%s275] sm:$0xff] %v550
        %553 = vst [vmem:[%s275 + $0x8] sm:$0xff] %v551
      $region40: #{_lambda_.15} parent=31 // pred_fallthru
        _
      %s554 = smul.u32 2, %s20
      %p555 = scmp.lt.s32.totalorder %s19, 0
      %s556 = scalar_select %p555, %s19, 0
      %p557 = scmp.lt.s32.totalorder %s554, 1
      %s558 = scalar_select %p557, %s554, 1
      %s559 = smul.addr %s556, 2
      %s560 = sadd.s32 %s558, %s559
      %s561 = smul.addr %s560, 8
      %s562 = scalar_lea.vmem %s3, %s561
      // Predicated region
      $region41: #{_lambda_.15} parent=31 // pred_check
        %p563 = pneg %p135
      $region42: #{_lambda_.15} parent=31 // pred_check_branch
        %565 = sbr.rel (%p563) target = $region44
      $region43: #{_lambda_.15} parent=31 // pred_region
        %s566 = smul.u32 2, %s20
      $region44: #{_lambda_.15} parent=31 // pred_fallthru
        _
      // Predicated region
      $region45: #{_lambda_.15} parent=31 // pred_check
        %p567 = pneg %p135
      $region46: #{_lambda_.15} parent=31 // pred_check_branch
        %569 = sbr.rel (%p567) target = $region48
      $region47: #{_lambda_.15} parent=31 // pred_region
        %s570 = smul.u32 2, %s20
        %p571 = scmp.lt.s32.totalorder %s19, 0
        %s572 = scalar_select %p571, %s19, 0
        %p573 = scmp.lt.s32.totalorder %s570, 1
        %s574 = scalar_select %p573, %s570, 1
        %s575 = smul.addr %s572, 2
        %s576 = sadd.s32 %s574, %s575
        %s577 = smul.addr %s576, 8
        %s578 = scalar_lea.vmem %s3, %s577
      $region48: #{_lambda_.15} parent=31 // pred_fallthru
        _
    $region32: #{_lambda_.15} parent=5 // pred_fallthru
      _
    %p579 = scmp.le.s32.totalorder 2, %s9
    // Predicated region
    $region49: #{_lambda_.15} parent=5 // pred_check
      %p580 = pneg %p579
    $region50: #{_lambda_.15} parent=5 // pred_check_branch
      %582 = sbr.rel (%p580) target = $region52
    $region51: #{_lambda_.15} parent=5 // pred_region
      %s583 = ssub.s32 %s9, 2
    $region52: #{_lambda_.15} parent=5 // pred_fallthru
      _
  $region6: #{_lambda_.15} parent=0 // loop_footer
    %s13 = sadd.s32 1, %s9
  $region7: #{_lambda_.15} parent=0 // loop_footer_branch
    %8 = sbr.rel target = $region3
  $region8: #{_lambda_.15} parent=0 // loop_exit
    _

</llo_original>
